<compile_context>
chip_gen: v7x
topology: tpu7x:2x2x1
jax: 0.10.0
libtpu: 0.0.40
codegen_flags: <defaults>
</compile_context>

<pallas_src>
import functools

import jax
import jax.numpy as jnp
from jax.experimental import pallas as pl
from jax.experimental.pallas import tpu as pltpu


def _fused_conv_block_kernel(x_ref, w1_ref, g1_ref, beta1_ref,
                             w2_ref, g2_ref, beta2_ref, o_ref,
                             *, n, h, w, eps):
    p = h * w
    npix = n * p
    cdtype = x_ref.dtype                      # MXU operand dtype (bf16 or f32)

    # ---- per-pixel row/col, integer ops, computed ONCE for both layers ---------
    q = jax.lax.broadcasted_iota(jnp.int32, (1, npix), 1)
    pix = jnp.bitwise_and(q, p - 1) if (p & (p - 1)) == 0 else q % p
    if (w & (w - 1)) == 0:
        row = jnp.right_shift(pix, w.bit_length() - 1)
        col = jnp.bitwise_and(pix, w - 1)
    else:
        row = pix // w
        col = pix % w

    # ---- the nine (roll-shift, boundary-mask) pairs, built ONCE, shared --------
    taps = []
    for kh in range(3):
        for kw in range(3):
            dh, dw = kh - 1, kw - 1
            shift = (-(dh * w + dw)) % npix
            conds = []
            if dh < 0:
                conds.append(row >= -dh)
            if dh > 0:
                conds.append(row < h - dh)
            if dw < 0:
                conds.append(col >= -dw)
            if dw > 0:
                conds.append(col < w - dw)
            mask = None
            if conds:
                mask = conds[0]
                for c in conds[1:]:
                    mask = mask & c           # (1, npix) bool
            taps.append((shift, mask))

    inv_cnt = 1.0 / float(n * p)
    zero = jnp.zeros((), cdtype)

    def conv_bn_relu(x, w_ref, g_ref, beta_ref):
        # x: (cin, n*p) in `cdtype`; w_ref: (9, cout, cin) in `cdtype`.
        # --- 3x3 conv: nine K=cin MXU dots accumulated in f32 (no im2col buffer) -
        acc = None
        for t, (shift, mask) in enumerate(taps):
            tap = x if shift == 0 else pltpu.roll(x, shift=shift, axis=1)
            if mask is not None:
                tap = jnp.where(mask, tap, zero)
            d = jnp.dot(w_ref[t], tap, preferred_element_type=jnp.float32)
            acc = d if acc is None else acc + d          # (cout, n*p) f32
        # (conv bias omitted: exactly cancelled by training-mode BN mean subtraction)

        # --- BatchNorm2d (training-mode batch stats) folded to scale/shift -------
        # NOTE: single-pass var = E[x^2] - E[x]^2 in f32; fine at these magnitudes,
        # switch to two-phase/Welford when tiling for large activations.
        ssum = jnp.sum(acc, axis=1, keepdims=True)       # (cout, 1)
        ssq = jnp.sum(acc * acc, axis=1, keepdims=True)  # (cout, 1)
        mean = ssum * inv_cnt
        var = ssq * inv_cnt - mean * mean                # biased variance
        scale = g_ref[...] * jax.lax.rsqrt(var + eps)    # (cout, 1)
        offset = beta_ref[...] - mean * scale            # (cout, 1)

        # --- affine + ReLU (2 VPU ops / element) ----------------------------------
        return jnp.maximum(acc * scale + offset, 0.0)    # (cout, n*p) f32

    y1 = conv_bn_relu(x_ref[...], w1_ref, g1_ref, beta1_ref)
    y2 = conv_bn_relu(y1.astype(cdtype), w2_ref, g2_ref, beta2_ref)
    o_ref[...] = y2.astype(o_ref.dtype)


def conv_block_forward(x_nchw, params, *, matmul_dtype=jnp.bfloat16):
    """Forward of nn.Sequential(Conv2d, BN, ReLU, Conv2d, BN, ReLU); NCHW in/out."""
    n, c_in, h, w = x_nchw.shape
    c_mid = params["w1"].shape[-1]
    p = h * w
    npix = n * p

    # Channel-major 2D activation layout for the kernel: (C, N*H*W).  One XLA
    # transpose each way; inside the kernel every matmul is then a single 2D MXU
    # op and the pixel axis (lanes) is a large multiple of 128 (lane-dense I/O).
    x_cm = jnp.transpose(x_nchw, (1, 0, 2, 3)).reshape(c_in, npix).astype(matmul_dtype)

    # HWIO -> (9, Cout, Cin) with tap index t = kh*3 + kw; cast to the MXU dtype.
    w1 = jnp.transpose(params["w1"], (0, 1, 3, 2)).reshape(9, c_mid, c_in).astype(matmul_dtype)
    w2 = jnp.transpose(params["w2"], (0, 1, 3, 2)).reshape(9, c_mid, c_mid).astype(matmul_dtype)
    g1 = params["g1"].reshape(c_mid, 1).astype(jnp.float32)
    be1 = params["beta1"].reshape(c_mid, 1).astype(jnp.float32)
    g2 = params["g2"].reshape(c_mid, 1).astype(jnp.float32)
    be2 = params["beta2"].reshape(c_mid, 1).astype(jnp.float32)

    kernel = functools.partial(_fused_conv_block_kernel, n=n, h=h, w=w, eps=1e-5)

    out = pl.pallas_call(
        kernel,
        out_shape=jax.ShapeDtypeStruct((c_mid, npix), x_nchw.dtype),
        grid=(1,),
        in_specs=[
            pl.BlockSpec((c_in, npix), lambda i: (0, 0)),
            pl.BlockSpec((9, c_mid, c_in), lambda i: (0, 0, 0)),
            pl.BlockSpec((c_mid, 1), lambda i: (0, 0)),
            pl.BlockSpec((c_mid, 1), lambda i: (0, 0)),
            pl.BlockSpec((9, c_mid, c_mid), lambda i: (0, 0, 0)),
            pl.BlockSpec((c_mid, 1), lambda i: (0, 0)),
            pl.BlockSpec((c_mid, 1), lambda i: (0, 0)),
        ],
        out_specs=pl.BlockSpec((c_mid, npix), lambda i: (0, 0)),
        compiler_params=pltpu.CompilerParams(
            dimension_semantics=("arbitrary",),
            vmem_limit_bytes=32 * 1024 * 1024),
    )(x_cm, w1, g1, be1, w2, g2, be2)

    # (C, N*H*W) -> NCHW.
    return jnp.transpose(out.reshape(c_mid, n, h, w), (1, 0, 2, 3))


def _ref_layer(x, w, b, gamma, beta):
    # Pure-JAX reference (NHWC): conv(+bias) -> training-mode BN -> ReLU.
    y = jax.lax.conv_general_dilated(
        x, w, window_strides=(1, 1), padding="SAME",
        dimension_numbers=("NHWC", "HWIO", "NHWC")) + b
    mean = jnp.mean(y, axis=(0, 1, 2), keepdims=True)
    var = jnp.var(y, axis=(0, 1, 2), keepdims=True)
    y = (y - mean) * jax.lax.rsqrt(var + 1e-5) * gamma + beta
    return jnp.maximum(y, 0.0)


if __name__ == "__main__":
    key = jax.random.PRNGKey(0)
    ch_in, ch_out = 4, 8
    N, H, W = 2, 16, 16

    ks = jax.random.split(key, 7)
    x = jax.random.normal(ks[0], (N, ch_in, H, W), jnp.float32)
    params = {
        "w1": 0.1 * jax.random.normal(ks[1], (3, 3, ch_in, ch_out), jnp.float32),
        "b1": 0.1 * jax.random.normal(ks[2], (ch_out,), jnp.float32),   # ref only
        "g1": 1.0 + 0.1 * jax.random.normal(ks[3], (ch_out,), jnp.float32),
        "beta1": 0.1 * jax.random.normal(ks[4], (ch_out,), jnp.float32),
        "w2": 0.1 * jax.random.normal(ks[5], (3, 3, ch_out, ch_out), jnp.float32),
        "b2": 0.1 * jax.random.normal(ks[6], (ch_out,), jnp.float32),   # ref only
        "g2": jnp.ones((ch_out,), jnp.float32),
        "beta2": jnp.zeros((ch_out,), jnp.float32),
    }

    # Pure-JAX reference (with the conv bias — it cancels inside training-mode BN).
    xr = jnp.transpose(x, (0, 2, 3, 1))
    r = _ref_layer(xr, params["w1"], params["b1"], params["g1"], params["beta1"])
    r = _ref_layer(r, params["w2"], params["b2"], params["g2"], params["beta2"])
    r = jnp.transpose(r, (0, 3, 1, 2))

    # 1) f32-matmul path: tight elementwise check of the fused kernel math.
    out_f32 = jax.block_until_ready(
        conv_block_forward(x, params, matmul_dtype=jnp.float32))
    assert out_f32.shape == (N, ch_out, H, W), out_f32.shape
    assert jnp.allclose(out_f32, r, atol=1e-3, rtol=1e-3), \
        float(jnp.max(jnp.abs(out_f32 - r)))

    # 2) bf16 MXU-operand path (default; native MXU dtype on v5e/v6e/v7x).
    #    BN renormalization absorbs most of the quantization; check relative L2.
    out_bf16 = jax.block_until_ready(conv_block_forward(x, params))
    assert out_bf16.shape == (N, ch_out, H, W), out_bf16.shape
    rel_l2 = float(jnp.linalg.norm(out_bf16 - r) / jnp.linalg.norm(r))
    assert rel_l2 < 5e-2, rel_l2

    print("KERNEL_OK")
</pallas_src>

<mosaic_0001>
module attributes {stable_mosaic.version = 11 : i64} {
  func.func @_fused_conv_block_kernel(%arg0: i32, %arg1: memref<4x512xf32, #tpu.memory_space<vmem>>, %arg2: memref<9x8x4xf32, #tpu.memory_space<vmem>>, %arg3: memref<8x1xf32, #tpu.memory_space<vmem>>, %arg4: memref<8x1xf32, #tpu.memory_space<vmem>>, %arg5: memref<9x8x8xf32, #tpu.memory_space<vmem>>, %arg6: memref<8x1xf32, #tpu.memory_space<vmem>>, %arg7: memref<8x1xf32, #tpu.memory_space<vmem>>, %arg8: memref<8x512xf32, #tpu.memory_space<vmem>>) attributes {dimension_semantics = [#tpu.dimension_semantics<arbitrary>], iteration_bounds = array<i64: 1>, scalar_prefetch = 0 : i64, scratch_operands = 0 : i64, tpu.core_type = #tpu.core_type<tc>, window_params = [{pipeline_mode = #tpu.pipeline_mode<synchronous>, transform_indices = @transform_0, window_bounds = array<i64: 4, 512>}, {pipeline_mode = #tpu.pipeline_mode<synchronous>, transform_indices = @transform_1, window_bounds = array<i64: 9, 8, 4>}, {pipeline_mode = #tpu.pipeline_mode<synchronous>, transform_indices = @transform_2, window_bounds = array<i64: 8, 1>}, {pipeline_mode = #tpu.pipeline_mode<synchronous>, transform_indices = @transform_3, window_bounds = array<i64: 8, 1>}, {pipeline_mode = #tpu.pipeline_mode<synchronous>, transform_indices = @transform_4, window_bounds = array<i64: 9, 8, 8>}, {pipeline_mode = #tpu.pipeline_mode<synchronous>, transform_indices = @transform_5, window_bounds = array<i64: 8, 1>}, {pipeline_mode = #tpu.pipeline_mode<synchronous>, transform_indices = @transform_6, window_bounds = array<i64: 8, 1>}, {pipeline_mode = #tpu.pipeline_mode<synchronous>, transform_indices = @transform_7, window_bounds = array<i64: 8, 512>}]} {
    %0 = tpu.iota {dimensions = array<i32: 1>} : vector<1x512xi32>
    %c255_i32 = arith.constant 255 : i32
    %1 = vector.broadcast %c255_i32 : i32 to vector<1x512xi32>
    %2 = arith.andi %0, %1 : vector<1x512xi32>
    %c4_i32 = arith.constant 4 : i32
    %3 = vector.broadcast %c4_i32 : i32 to vector<1x512xi32>
    %4 = arith.shrsi %2, %3 : vector<1x512xi32>
    %c15_i32 = arith.constant 15 : i32
    %5 = vector.broadcast %c15_i32 : i32 to vector<1x512xi32>
    %6 = arith.andi %2, %5 : vector<1x512xi32>
    %c1_i32 = arith.constant 1 : i32
    %7 = vector.broadcast %c1_i32 : i32 to vector<1x512xi32>
    %8 = arith.cmpi sge, %4, %7 : vector<1x512xi32>
    %c1_i32_0 = arith.constant 1 : i32
    %9 = vector.broadcast %c1_i32_0 : i32 to vector<1x512xi32>
    %10 = arith.cmpi sge, %6, %9 : vector<1x512xi32>
    %11 = arith.andi %8, %10 : vector<1x512xi1>
    %c1_i32_1 = arith.constant 1 : i32
    %12 = vector.broadcast %c1_i32_1 : i32 to vector<1x512xi32>
    %13 = arith.cmpi sge, %4, %12 : vector<1x512xi32>
    %c1_i32_2 = arith.constant 1 : i32
    %14 = vector.broadcast %c1_i32_2 : i32 to vector<1x512xi32>
    %15 = arith.cmpi sge, %4, %14 : vector<1x512xi32>
    %c15_i32_3 = arith.constant 15 : i32
    %16 = vector.broadcast %c15_i32_3 : i32 to vector<1x512xi32>
    %17 = arith.cmpi slt, %6, %16 : vector<1x512xi32>
    %18 = arith.andi %15, %17 : vector<1x512xi1>
    %c1_i32_4 = arith.constant 1 : i32
    %19 = vector.broadcast %c1_i32_4 : i32 to vector<1x512xi32>
    %20 = arith.cmpi sge, %6, %19 : vector<1x512xi32>
    %c15_i32_5 = arith.constant 15 : i32
    %21 = vector.broadcast %c15_i32_5 : i32 to vector<1x512xi32>
    %22 = arith.cmpi slt, %6, %21 : vector<1x512xi32>
    %c15_i32_6 = arith.constant 15 : i32
    %23 = vector.broadcast %c15_i32_6 : i32 to vector<1x512xi32>
    %24 = arith.cmpi slt, %4, %23 : vector<1x512xi32>
    %c1_i32_7 = arith.constant 1 : i32
    %25 = vector.broadcast %c1_i32_7 : i32 to vector<1x512xi32>
    %26 = arith.cmpi sge, %6, %25 : vector<1x512xi32>
    %27 = arith.andi %24, %26 : vector<1x512xi1>
    %c15_i32_8 = arith.constant 15 : i32
    %28 = vector.broadcast %c15_i32_8 : i32 to vector<1x512xi32>
    %29 = arith.cmpi slt, %4, %28 : vector<1x512xi32>
    %c15_i32_9 = arith.constant 15 : i32
    %30 = vector.broadcast %c15_i32_9 : i32 to vector<1x512xi32>
    %31 = arith.cmpi slt, %4, %30 : vector<1x512xi32>
    %c15_i32_10 = arith.constant 15 : i32
    %32 = vector.broadcast %c15_i32_10 : i32 to vector<1x512xi32>
    %33 = arith.cmpi slt, %6, %32 : vector<1x512xi32>
    %34 = arith.andi %31, %33 : vector<1x512xi1>
    %c0 = arith.constant 0 : index
    %c0_11 = arith.constant 0 : index
    %35 = vector.load %arg1[%c0, %c0_11] : memref<4x512xf32, #tpu.memory_space<vmem>>, vector<4x512xf32>
    %c17_i32 = arith.constant 17 : i32
    %36 = tpu.dynamic_rotate %35 by %c17_i32 dim 1 : vector<4x512xf32>, i32 -> vector<4x512xf32>
    %cst = arith.constant 0.000000e+00 : f32
    %37 = vector.shape_cast %11 : vector<1x512xi1> to vector<1x512xi1>
    %38 = vector.broadcast %37 : vector<1x512xi1> to vector<4x512xi1>
    %39 = vector.broadcast %cst : f32 to vector<4x512xf32>
    %40 = arith.select %38, %36, %39 : vector<4x512xi1>, vector<4x512xf32>
    %c0_12 = arith.constant 0 : index
    %c0_13 = arith.constant 0 : index
    %c0_14 = arith.constant 0 : index
    %41 = vector.load %arg2[%c0_12, %c0_13, %c0_14] : memref<9x8x4xf32, #tpu.memory_space<vmem>>, vector<1x8x4xf32>
    %42 = vector.shape_cast %41 : vector<1x8x4xf32> to vector<8x4xf32>
    %cst_15 = arith.constant dense<0.000000e+00> : vector<8x512xf32>
    %43 = tpu.matmul %42, %40, %cst_15 {dimension_numbers = #tpu.dot_dimension_numbers<[1], [0], [0], [1], [0, 0, 1, 1], [], []>} : vector<8x4xf32>, vector<4x512xf32>, vector<8x512xf32> -> vector<8x512xf32>
    %c16_i32 = arith.constant 16 : i32
    %44 = tpu.dynamic_rotate %35 by %c16_i32 dim 1 : vector<4x512xf32>, i32 -> vector<4x512xf32>
    %cst_16 = arith.constant 0.000000e+00 : f32
    %45 = vector.shape_cast %13 : vector<1x512xi1> to vector<1x512xi1>
    %46 = vector.broadcast %45 : vector<1x512xi1> to vector<4x512xi1>
    %47 = vector.broadcast %cst_16 : f32 to vector<4x512xf32>
    %48 = arith.select %46, %44, %47 : vector<4x512xi1>, vector<4x512xf32>
    %c1 = arith.constant 1 : index
    %c0_17 = arith.constant 0 : index
    %c0_18 = arith.constant 0 : index
    %49 = vector.load %arg2[%c1, %c0_17, %c0_18] : memref<9x8x4xf32, #tpu.memory_space<vmem>>, vector<1x8x4xf32>
    %50 = vector.shape_cast %49 : vector<1x8x4xf32> to vector<8x4xf32>
    %cst_19 = arith.constant dense<0.000000e+00> : vector<8x512xf32>
    %51 = tpu.matmul %50, %48, %cst_19 {dimension_numbers = #tpu.dot_dimension_numbers<[1], [0], [0], [1], [0, 0, 1, 1], [], []>} : vector<8x4xf32>, vector<4x512xf32>, vector<8x512xf32> -> vector<8x512xf32>
    %52 = arith.addf %43, %51 : vector<8x512xf32>
    %c15_i32_20 = arith.constant 15 : i32
    %53 = tpu.dynamic_rotate %35 by %c15_i32_20 dim 1 : vector<4x512xf32>, i32 -> vector<4x512xf32>
    %cst_21 = arith.constant 0.000000e+00 : f32
    %54 = vector.shape_cast %18 : vector<1x512xi1> to vector<1x512xi1>
    %55 = vector.broadcast %54 : vector<1x512xi1> to vector<4x512xi1>
    %56 = vector.broadcast %cst_21 : f32 to vector<4x512xf32>
    %57 = arith.select %55, %53, %56 : vector<4x512xi1>, vector<4x512xf32>
    %c2 = arith.constant 2 : index
    %c0_22 = arith.constant 0 : index
    %c0_23 = arith.constant 0 : index
    %58 = vector.load %arg2[%c2, %c0_22, %c0_23] : memref<9x8x4xf32, #tpu.memory_space<vmem>>, vector<1x8x4xf32>
    %59 = vector.shape_cast %58 : vector<1x8x4xf32> to vector<8x4xf32>
    %cst_24 = arith.constant dense<0.000000e+00> : vector<8x512xf32>
    %60 = tpu.matmul %59, %57, %cst_24 {dimension_numbers = #tpu.dot_dimension_numbers<[1], [0], [0], [1], [0, 0, 1, 1], [], []>} : vector<8x4xf32>, vector<4x512xf32>, vector<8x512xf32> -> vector<8x512xf32>
    %61 = arith.addf %52, %60 : vector<8x512xf32>
    %c1_i32_25 = arith.constant 1 : i32
    %62 = tpu.dynamic_rotate %35 by %c1_i32_25 dim 1 : vector<4x512xf32>, i32 -> vector<4x512xf32>
    %cst_26 = arith.constant 0.000000e+00 : f32
    %63 = vector.shape_cast %20 : vector<1x512xi1> to vector<1x512xi1>
    %64 = vector.broadcast %63 : vector<1x512xi1> to vector<4x512xi1>
    %65 = vector.broadcast %cst_26 : f32 to vector<4x512xf32>
    %66 = arith.select %64, %62, %65 : vector<4x512xi1>, vector<4x512xf32>
    %c3 = arith.constant 3 : index
    %c0_27 = arith.constant 0 : index
    %c0_28 = arith.constant 0 : index
    %67 = vector.load %arg2[%c3, %c0_27, %c0_28] : memref<9x8x4xf32, #tpu.memory_space<vmem>>, vector<1x8x4xf32>
    %68 = vector.shape_cast %67 : vector<1x8x4xf32> to vector<8x4xf32>
    %cst_29 = arith.constant dense<0.000000e+00> : vector<8x512xf32>
    %69 = tpu.matmul %68, %66, %cst_29 {dimension_numbers = #tpu.dot_dimension_numbers<[1], [0], [0], [1], [0, 0, 1, 1], [], []>} : vector<8x4xf32>, vector<4x512xf32>, vector<8x512xf32> -> vector<8x512xf32>
    %70 = arith.addf %61, %69 : vector<8x512xf32>
    %c4 = arith.constant 4 : index
    %c0_30 = arith.constant 0 : index
    %c0_31 = arith.constant 0 : index
    %71 = vector.load %arg2[%c4, %c0_30, %c0_31] : memref<9x8x4xf32, #tpu.memory_space<vmem>>, vector<1x8x4xf32>
    %72 = vector.shape_cast %71 : vector<1x8x4xf32> to vector<8x4xf32>
    %cst_32 = arith.constant dense<0.000000e+00> : vector<8x512xf32>
    %73 = tpu.matmul %72, %35, %cst_32 {dimension_numbers = #tpu.dot_dimension_numbers<[1], [0], [0], [1], [0, 0, 1, 1], [], []>} : vector<8x4xf32>, vector<4x512xf32>, vector<8x512xf32> -> vector<8x512xf32>
    %74 = arith.addf %70, %73 : vector<8x512xf32>
    %c511_i32 = arith.constant 511 : i32
    %75 = tpu.dynamic_rotate %35 by %c511_i32 dim 1 : vector<4x512xf32>, i32 -> vector<4x512xf32>
    %cst_33 = arith.constant 0.000000e+00 : f32
    %76 = vector.shape_cast %22 : vector<1x512xi1> to vector<1x512xi1>
    %77 = vector.broadcast %76 : vector<1x512xi1> to vector<4x512xi1>
    %78 = vector.broadcast %cst_33 : f32 to vector<4x512xf32>
    %79 = arith.select %77, %75, %78 : vector<4x512xi1>, vector<4x512xf32>
    %c5 = arith.constant 5 : index
    %c0_34 = arith.constant 0 : index
    %c0_35 = arith.constant 0 : index
    %80 = vector.load %arg2[%c5, %c0_34, %c0_35] : memref<9x8x4xf32, #tpu.memory_space<vmem>>, vector<1x8x4xf32>
    %81 = vector.shape_cast %80 : vector<1x8x4xf32> to vector<8x4xf32>
    %cst_36 = arith.constant dense<0.000000e+00> : vector<8x512xf32>
    %82 = tpu.matmul %81, %79, %cst_36 {dimension_numbers = #tpu.dot_dimension_numbers<[1], [0], [0], [1], [0, 0, 1, 1], [], []>} : vector<8x4xf32>, vector<4x512xf32>, vector<8x512xf32> -> vector<8x512xf32>
    %83 = arith.addf %74, %82 : vector<8x512xf32>
    %c497_i32 = arith.constant 497 : i32
    %84 = tpu.dynamic_rotate %35 by %c497_i32 dim 1 : vector<4x512xf32>, i32 -> vector<4x512xf32>
    %cst_37 = arith.constant 0.000000e+00 : f32
    %85 = vector.shape_cast %27 : vector<1x512xi1> to vector<1x512xi1>
    %86 = vector.broadcast %85 : vector<1x512xi1> to vector<4x512xi1>
    %87 = vector.broadcast %cst_37 : f32 to vector<4x512xf32>
    %88 = arith.select %86, %84, %87 : vector<4x512xi1>, vector<4x512xf32>
    %c6 = arith.constant 6 : index
    %c0_38 = arith.constant 0 : index
    %c0_39 = arith.constant 0 : index
    %89 = vector.load %arg2[%c6, %c0_38, %c0_39] : memref<9x8x4xf32, #tpu.memory_space<vmem>>, vector<1x8x4xf32>
    %90 = vector.shape_cast %89 : vector<1x8x4xf32> to vector<8x4xf32>
    %cst_40 = arith.constant dense<0.000000e+00> : vector<8x512xf32>
    %91 = tpu.matmul %90, %88, %cst_40 {dimension_numbers = #tpu.dot_dimension_numbers<[1], [0], [0], [1], [0, 0, 1, 1], [], []>} : vector<8x4xf32>, vector<4x512xf32>, vector<8x512xf32> -> vector<8x512xf32>
    %92 = arith.addf %83, %91 : vector<8x512xf32>
    %c496_i32 = arith.constant 496 : i32
    %93 = tpu.dynamic_rotate %35 by %c496_i32 dim 1 : vector<4x512xf32>, i32 -> vector<4x512xf32>
    %cst_41 = arith.constant 0.000000e+00 : f32
    %94 = vector.shape_cast %29 : vector<1x512xi1> to vector<1x512xi1>
    %95 = vector.broadcast %94 : vector<1x512xi1> to vector<4x512xi1>
    %96 = vector.broadcast %cst_41 : f32 to vector<4x512xf32>
    %97 = arith.select %95, %93, %96 : vector<4x512xi1>, vector<4x512xf32>
    %c7 = arith.constant 7 : index
    %c0_42 = arith.constant 0 : index
    %c0_43 = arith.constant 0 : index
    %98 = vector.load %arg2[%c7, %c0_42, %c0_43] : memref<9x8x4xf32, #tpu.memory_space<vmem>>, vector<1x8x4xf32>
    %99 = vector.shape_cast %98 : vector<1x8x4xf32> to vector<8x4xf32>
    %cst_44 = arith.constant dense<0.000000e+00> : vector<8x512xf32>
    %100 = tpu.matmul %99, %97, %cst_44 {dimension_numbers = #tpu.dot_dimension_numbers<[1], [0], [0], [1], [0, 0, 1, 1], [], []>} : vector<8x4xf32>, vector<4x512xf32>, vector<8x512xf32> -> vector<8x512xf32>
    %101 = arith.addf %92, %100 : vector<8x512xf32>
    %c495_i32 = arith.constant 495 : i32
    %102 = tpu.dynamic_rotate %35 by %c495_i32 dim 1 : vector<4x512xf32>, i32 -> vector<4x512xf32>
    %cst_45 = arith.constant 0.000000e+00 : f32
    %103 = vector.shape_cast %34 : vector<1x512xi1> to vector<1x512xi1>
    %104 = vector.broadcast %103 : vector<1x512xi1> to vector<4x512xi1>
    %105 = vector.broadcast %cst_45 : f32 to vector<4x512xf32>
    %106 = arith.select %104, %102, %105 : vector<4x512xi1>, vector<4x512xf32>
    %c8 = arith.constant 8 : index
    %c0_46 = arith.constant 0 : index
    %c0_47 = arith.constant 0 : index
    %107 = vector.load %arg2[%c8, %c0_46, %c0_47] : memref<9x8x4xf32, #tpu.memory_space<vmem>>, vector<1x8x4xf32>
    %108 = vector.shape_cast %107 : vector<1x8x4xf32> to vector<8x4xf32>
    %cst_48 = arith.constant dense<0.000000e+00> : vector<8x512xf32>
    %109 = tpu.matmul %108, %106, %cst_48 {dimension_numbers = #tpu.dot_dimension_numbers<[1], [0], [0], [1], [0, 0, 1, 1], [], []>} : vector<8x4xf32>, vector<4x512xf32>, vector<8x512xf32> -> vector<8x512xf32>
    %110 = arith.addf %101, %109 : vector<8x512xf32>
    %cst_49 = arith.constant dense<0.000000e+00> : vector<8xf32>
    %111 = vector.multi_reduction <add>, %110, %cst_49 [1] : vector<8x512xf32> to vector<8xf32>
    %112 = vector.shape_cast %111 : vector<8xf32> to vector<8x1xf32>
    %113 = arith.mulf %110, %110 : vector<8x512xf32>
    %cst_50 = arith.constant dense<0.000000e+00> : vector<8xf32>
    %114 = vector.multi_reduction <add>, %113, %cst_50 [1] : vector<8x512xf32> to vector<8xf32>
    %115 = vector.shape_cast %114 : vector<8xf32> to vector<8x1xf32>
    %cst_51 = arith.constant 0.001953125 : f32
    %116 = vector.broadcast %cst_51 : f32 to vector<8x1xf32>
    %117 = arith.mulf %112, %116 : vector<8x1xf32>
    %cst_52 = arith.constant 0.001953125 : f32
    %118 = vector.broadcast %cst_52 : f32 to vector<8x1xf32>
    %119 = arith.mulf %115, %118 : vector<8x1xf32>
    %120 = arith.mulf %117, %117 : vector<8x1xf32>
    %121 = arith.subf %119, %120 : vector<8x1xf32>
    %c0_53 = arith.constant 0 : index
    %c0_54 = arith.constant 0 : index
    %122 = vector.load %arg3[%c0_53, %c0_54] : memref<8x1xf32, #tpu.memory_space<vmem>>, vector<8x1xf32>
    %cst_55 = arith.constant 9.99999974E-6 : f32
    %123 = vector.broadcast %cst_55 : f32 to vector<8x1xf32>
    %124 = arith.addf %121, %123 : vector<8x1xf32>
    %125 = math.rsqrt %124 : vector<8x1xf32>
    %126 = arith.mulf %122, %125 : vector<8x1xf32>
    %c0_56 = arith.constant 0 : index
    %c0_57 = arith.constant 0 : index
    %127 = vector.load %arg4[%c0_56, %c0_57] : memref<8x1xf32, #tpu.memory_space<vmem>>, vector<8x1xf32>
    %128 = arith.mulf %117, %126 : vector<8x1xf32>
    %129 = arith.subf %127, %128 : vector<8x1xf32>
    %130 = vector.broadcast %126 : vector<8x1xf32> to vector<8x512xf32>
    %131 = arith.mulf %110, %130 : vector<8x512xf32>
    %132 = vector.broadcast %129 : vector<8x1xf32> to vector<8x512xf32>
    %133 = arith.addf %131, %132 : vector<8x512xf32>
    %cst_58 = arith.constant 0.000000e+00 : f32
    %134 = vector.broadcast %cst_58 : f32 to vector<8x512xf32>
    %135 = arith.maximumf %133, %134 : vector<8x512xf32>
    %c17_i32_59 = arith.constant 17 : i32
    %136 = tpu.dynamic_rotate %135 by %c17_i32_59 dim 1 : vector<8x512xf32>, i32 -> vector<8x512xf32>
    %cst_60 = arith.constant 0.000000e+00 : f32
    %137 = vector.shape_cast %11 : vector<1x512xi1> to vector<1x512xi1>
    %138 = vector.broadcast %137 : vector<1x512xi1> to vector<8x512xi1>
    %139 = vector.broadcast %cst_60 : f32 to vector<8x512xf32>
    %140 = arith.select %138, %136, %139 : vector<8x512xi1>, vector<8x512xf32>
    %c0_61 = arith.constant 0 : index
    %c0_62 = arith.constant 0 : index
    %c0_63 = arith.constant 0 : index
    %141 = vector.load %arg5[%c0_61, %c0_62, %c0_63] : memref<9x8x8xf32, #tpu.memory_space<vmem>>, vector<1x8x8xf32>
    %142 = vector.shape_cast %141 : vector<1x8x8xf32> to vector<8x8xf32>
    %cst_64 = arith.constant dense<0.000000e+00> : vector<8x512xf32>
    %143 = tpu.matmul %142, %140, %cst_64 {dimension_numbers = #tpu.dot_dimension_numbers<[1], [0], [0], [1], [0, 0, 1, 1], [], []>} : vector<8x8xf32>, vector<8x512xf32>, vector<8x512xf32> -> vector<8x512xf32>
    %c16_i32_65 = arith.constant 16 : i32
    %144 = tpu.dynamic_rotate %135 by %c16_i32_65 dim 1 : vector<8x512xf32>, i32 -> vector<8x512xf32>
    %cst_66 = arith.constant 0.000000e+00 : f32
    %145 = vector.shape_cast %13 : vector<1x512xi1> to vector<1x512xi1>
    %146 = vector.broadcast %145 : vector<1x512xi1> to vector<8x512xi1>
    %147 = vector.broadcast %cst_66 : f32 to vector<8x512xf32>
    %148 = arith.select %146, %144, %147 : vector<8x512xi1>, vector<8x512xf32>
    %c1_67 = arith.constant 1 : index
    %c0_68 = arith.constant 0 : index
    %c0_69 = arith.constant 0 : index
    %149 = vector.load %arg5[%c1_67, %c0_68, %c0_69] : memref<9x8x8xf32, #tpu.memory_space<vmem>>, vector<1x8x8xf32>
    %150 = vector.shape_cast %149 : vector<1x8x8xf32> to vector<8x8xf32>
    %cst_70 = arith.constant dense<0.000000e+00> : vector<8x512xf32>
    %151 = tpu.matmul %150, %148, %cst_70 {dimension_numbers = #tpu.dot_dimension_numbers<[1], [0], [0], [1], [0, 0, 1, 1], [], []>} : vector<8x8xf32>, vector<8x512xf32>, vector<8x512xf32> -> vector<8x512xf32>
    %152 = arith.addf %143, %151 : vector<8x512xf32>
    %c15_i32_71 = arith.constant 15 : i32
    %153 = tpu.dynamic_rotate %135 by %c15_i32_71 dim 1 : vector<8x512xf32>, i32 -> vector<8x512xf32>
    %cst_72 = arith.constant 0.000000e+00 : f32
    %154 = vector.shape_cast %18 : vector<1x512xi1> to vector<1x512xi1>
    %155 = vector.broadcast %154 : vector<1x512xi1> to vector<8x512xi1>
    %156 = vector.broadcast %cst_72 : f32 to vector<8x512xf32>
    %157 = arith.select %155, %153, %156 : vector<8x512xi1>, vector<8x512xf32>
    %c2_73 = arith.constant 2 : index
    %c0_74 = arith.constant 0 : index
    %c0_75 = arith.constant 0 : index
    %158 = vector.load %arg5[%c2_73, %c0_74, %c0_75] : memref<9x8x8xf32, #tpu.memory_space<vmem>>, vector<1x8x8xf32>
    %159 = vector.shape_cast %158 : vector<1x8x8xf32> to vector<8x8xf32>
    %cst_76 = arith.constant dense<0.000000e+00> : vector<8x512xf32>
    %160 = tpu.matmul %159, %157, %cst_76 {dimension_numbers = #tpu.dot_dimension_numbers<[1], [0], [0], [1], [0, 0, 1, 1], [], []>} : vector<8x8xf32>, vector<8x512xf32>, vector<8x512xf32> -> vector<8x512xf32>
    %161 = arith.addf %152, %160 : vector<8x512xf32>
    %c1_i32_77 = arith.constant 1 : i32
    %162 = tpu.dynamic_rotate %135 by %c1_i32_77 dim 1 : vector<8x512xf32>, i32 -> vector<8x512xf32>
    %cst_78 = arith.constant 0.000000e+00 : f32
    %163 = vector.shape_cast %20 : vector<1x512xi1> to vector<1x512xi1>
    %164 = vector.broadcast %163 : vector<1x512xi1> to vector<8x512xi1>
    %165 = vector.broadcast %cst_78 : f32 to vector<8x512xf32>
    %166 = arith.select %164, %162, %165 : vector<8x512xi1>, vector<8x512xf32>
    %c3_79 = arith.constant 3 : index
    %c0_80 = arith.constant 0 : index
    %c0_81 = arith.constant 0 : index
    %167 = vector.load %arg5[%c3_79, %c0_80, %c0_81] : memref<9x8x8xf32, #tpu.memory_space<vmem>>, vector<1x8x8xf32>
    %168 = vector.shape_cast %167 : vector<1x8x8xf32> to vector<8x8xf32>
    %cst_82 = arith.constant dense<0.000000e+00> : vector<8x512xf32>
    %169 = tpu.matmul %168, %166, %cst_82 {dimension_numbers = #tpu.dot_dimension_numbers<[1], [0], [0], [1], [0, 0, 1, 1], [], []>} : vector<8x8xf32>, vector<8x512xf32>, vector<8x512xf32> -> vector<8x512xf32>
    %170 = arith.addf %161, %169 : vector<8x512xf32>
    %c4_83 = arith.constant 4 : index
    %c0_84 = arith.constant 0 : index
    %c0_85 = arith.constant 0 : index
    %171 = vector.load %arg5[%c4_83, %c0_84, %c0_85] : memref<9x8x8xf32, #tpu.memory_space<vmem>>, vector<1x8x8xf32>
    %172 = vector.shape_cast %171 : vector<1x8x8xf32> to vector<8x8xf32>
    %cst_86 = arith.constant dense<0.000000e+00> : vector<8x512xf32>
    %173 = tpu.matmul %172, %135, %cst_86 {dimension_numbers = #tpu.dot_dimension_numbers<[1], [0], [0], [1], [0, 0, 1, 1], [], []>} : vector<8x8xf32>, vector<8x512xf32>, vector<8x512xf32> -> vector<8x512xf32>
    %174 = arith.addf %170, %173 : vector<8x512xf32>
    %c511_i32_87 = arith.constant 511 : i32
    %175 = tpu.dynamic_rotate %135 by %c511_i32_87 dim 1 : vector<8x512xf32>, i32 -> vector<8x512xf32>
    %cst_88 = arith.constant 0.000000e+00 : f32
    %176 = vector.shape_cast %22 : vector<1x512xi1> to vector<1x512xi1>
    %177 = vector.broadcast %176 : vector<1x512xi1> to vector<8x512xi1>
    %178 = vector.broadcast %cst_88 : f32 to vector<8x512xf32>
    %179 = arith.select %177, %175, %178 : vector<8x512xi1>, vector<8x512xf32>
    %c5_89 = arith.constant 5 : index
    %c0_90 = arith.constant 0 : index
    %c0_91 = arith.constant 0 : index
    %180 = vector.load %arg5[%c5_89, %c0_90, %c0_91] : memref<9x8x8xf32, #tpu.memory_space<vmem>>, vector<1x8x8xf32>
    %181 = vector.shape_cast %180 : vector<1x8x8xf32> to vector<8x8xf32>
    %cst_92 = arith.constant dense<0.000000e+00> : vector<8x512xf32>
    %182 = tpu.matmul %181, %179, %cst_92 {dimension_numbers = #tpu.dot_dimension_numbers<[1], [0], [0], [1], [0, 0, 1, 1], [], []>} : vector<8x8xf32>, vector<8x512xf32>, vector<8x512xf32> -> vector<8x512xf32>
    %183 = arith.addf %174, %182 : vector<8x512xf32>
    %c497_i32_93 = arith.constant 497 : i32
    %184 = tpu.dynamic_rotate %135 by %c497_i32_93 dim 1 : vector<8x512xf32>, i32 -> vector<8x512xf32>
    %cst_94 = arith.constant 0.000000e+00 : f32
    %185 = vector.shape_cast %27 : vector<1x512xi1> to vector<1x512xi1>
    %186 = vector.broadcast %185 : vector<1x512xi1> to vector<8x512xi1>
    %187 = vector.broadcast %cst_94 : f32 to vector<8x512xf32>
    %188 = arith.select %186, %184, %187 : vector<8x512xi1>, vector<8x512xf32>
    %c6_95 = arith.constant 6 : index
    %c0_96 = arith.constant 0 : index
    %c0_97 = arith.constant 0 : index
    %189 = vector.load %arg5[%c6_95, %c0_96, %c0_97] : memref<9x8x8xf32, #tpu.memory_space<vmem>>, vector<1x8x8xf32>
    %190 = vector.shape_cast %189 : vector<1x8x8xf32> to vector<8x8xf32>
    %cst_98 = arith.constant dense<0.000000e+00> : vector<8x512xf32>
    %191 = tpu.matmul %190, %188, %cst_98 {dimension_numbers = #tpu.dot_dimension_numbers<[1], [0], [0], [1], [0, 0, 1, 1], [], []>} : vector<8x8xf32>, vector<8x512xf32>, vector<8x512xf32> -> vector<8x512xf32>
    %192 = arith.addf %183, %191 : vector<8x512xf32>
    %c496_i32_99 = arith.constant 496 : i32
    %193 = tpu.dynamic_rotate %135 by %c496_i32_99 dim 1 : vector<8x512xf32>, i32 -> vector<8x512xf32>
    %cst_100 = arith.constant 0.000000e+00 : f32
    %194 = vector.shape_cast %29 : vector<1x512xi1> to vector<1x512xi1>
    %195 = vector.broadcast %194 : vector<1x512xi1> to vector<8x512xi1>
    %196 = vector.broadcast %cst_100 : f32 to vector<8x512xf32>
    %197 = arith.select %195, %193, %196 : vector<8x512xi1>, vector<8x512xf32>
    %c7_101 = arith.constant 7 : index
    %c0_102 = arith.constant 0 : index
    %c0_103 = arith.constant 0 : index
    %198 = vector.load %arg5[%c7_101, %c0_102, %c0_103] : memref<9x8x8xf32, #tpu.memory_space<vmem>>, vector<1x8x8xf32>
    %199 = vector.shape_cast %198 : vector<1x8x8xf32> to vector<8x8xf32>
    %cst_104 = arith.constant dense<0.000000e+00> : vector<8x512xf32>
    %200 = tpu.matmul %199, %197, %cst_104 {dimension_numbers = #tpu.dot_dimension_numbers<[1], [0], [0], [1], [0, 0, 1, 1], [], []>} : vector<8x8xf32>, vector<8x512xf32>, vector<8x512xf32> -> vector<8x512xf32>
    %201 = arith.addf %192, %200 : vector<8x512xf32>
    %c495_i32_105 = arith.constant 495 : i32
    %202 = tpu.dynamic_rotate %135 by %c495_i32_105 dim 1 : vector<8x512xf32>, i32 -> vector<8x512xf32>
    %cst_106 = arith.constant 0.000000e+00 : f32
    %203 = vector.shape_cast %34 : vector<1x512xi1> to vector<1x512xi1>
    %204 = vector.broadcast %203 : vector<1x512xi1> to vector<8x512xi1>
    %205 = vector.broadcast %cst_106 : f32 to vector<8x512xf32>
    %206 = arith.select %204, %202, %205 : vector<8x512xi1>, vector<8x512xf32>
    %c8_107 = arith.constant 8 : index
    %c0_108 = arith.constant 0 : index
    %c0_109 = arith.constant 0 : index
    %207 = vector.load %arg5[%c8_107, %c0_108, %c0_109] : memref<9x8x8xf32, #tpu.memory_space<vmem>>, vector<1x8x8xf32>
    %208 = vector.shape_cast %207 : vector<1x8x8xf32> to vector<8x8xf32>
    %cst_110 = arith.constant dense<0.000000e+00> : vector<8x512xf32>
    %209 = tpu.matmul %208, %206, %cst_110 {dimension_numbers = #tpu.dot_dimension_numbers<[1], [0], [0], [1], [0, 0, 1, 1], [], []>} : vector<8x8xf32>, vector<8x512xf32>, vector<8x512xf32> -> vector<8x512xf32>
    %210 = arith.addf %201, %209 : vector<8x512xf32>
    %cst_111 = arith.constant dense<0.000000e+00> : vector<8xf32>
    %211 = vector.multi_reduction <add>, %210, %cst_111 [1] : vector<8x512xf32> to vector<8xf32>
    %212 = vector.shape_cast %211 : vector<8xf32> to vector<8x1xf32>
    %213 = arith.mulf %210, %210 : vector<8x512xf32>
    %cst_112 = arith.constant dense<0.000000e+00> : vector<8xf32>
    %214 = vector.multi_reduction <add>, %213, %cst_112 [1] : vector<8x512xf32> to vector<8xf32>
    %215 = vector.shape_cast %214 : vector<8xf32> to vector<8x1xf32>
    %cst_113 = arith.constant 0.001953125 : f32
    %216 = vector.broadcast %cst_113 : f32 to vector<8x1xf32>
    %217 = arith.mulf %212, %216 : vector<8x1xf32>
    %cst_114 = arith.constant 0.001953125 : f32
    %218 = vector.broadcast %cst_114 : f32 to vector<8x1xf32>
    %219 = arith.mulf %215, %218 : vector<8x1xf32>
    %220 = arith.mulf %217, %217 : vector<8x1xf32>
    %221 = arith.subf %219, %220 : vector<8x1xf32>
    %c0_115 = arith.constant 0 : index
    %c0_116 = arith.constant 0 : index
    %222 = vector.load %arg6[%c0_115, %c0_116] : memref<8x1xf32, #tpu.memory_space<vmem>>, vector<8x1xf32>
    %cst_117 = arith.constant 9.99999974E-6 : f32
    %223 = vector.broadcast %cst_117 : f32 to vector<8x1xf32>
    %224 = arith.addf %221, %223 : vector<8x1xf32>
    %225 = math.rsqrt %224 : vector<8x1xf32>
    %226 = arith.mulf %222, %225 : vector<8x1xf32>
    %c0_118 = arith.constant 0 : index
    %c0_119 = arith.constant 0 : index
    %227 = vector.load %arg7[%c0_118, %c0_119] : memref<8x1xf32, #tpu.memory_space<vmem>>, vector<8x1xf32>
    %228 = arith.mulf %217, %226 : vector<8x1xf32>
    %229 = arith.subf %227, %228 : vector<8x1xf32>
    %230 = vector.broadcast %226 : vector<8x1xf32> to vector<8x512xf32>
    %231 = arith.mulf %210, %230 : vector<8x512xf32>
    %232 = vector.broadcast %229 : vector<8x1xf32> to vector<8x512xf32>
    %233 = arith.addf %231, %232 : vector<8x512xf32>
    %cst_120 = arith.constant 0.000000e+00 : f32
    %234 = vector.broadcast %cst_120 : f32 to vector<8x512xf32>
    %235 = arith.maximumf %233, %234 : vector<8x512xf32>
    %c0_121 = arith.constant 0 : index
    %c0_122 = arith.constant 0 : index
    %236 = vector.load %arg8[%c0_121, %c0_122] : memref<8x512xf32, #tpu.memory_space<vmem>>, vector<8x512xf32>
    tpu.vector_store %arg8[%c0_121, %c0_122], %235 {strides = array<i32>} : memref<8x512xf32, #tpu.memory_space<vmem>>, vector<8x512xf32>,
    return
  }
  func.func @transform_0(%arg0: i32) -> (i32, i32) {
    %c0_i32 = arith.constant 0 : i32
    %c0_i32_0 = arith.constant 0 : i32
    %c0_i32_1 = arith.constant 0 : i32
    return %c0_i32, %c0_i32_0 : i32, i32
  }
  func.func @transform_1(%arg0: i32) -> (i32, i32, i32) {
    %c0_i32 = arith.constant 0 : i32
    %c0_i32_0 = arith.constant 0 : i32
    %c0_i32_1 = arith.constant 0 : i32
    %c0_i32_2 = arith.constant 0 : i32
    return %c0_i32, %c0_i32_0, %c0_i32_1 : i32, i32, i32
  }
  func.func @transform_2(%arg0: i32) -> (i32, i32) {
    %c0_i32 = arith.constant 0 : i32
    %c0_i32_0 = arith.constant 0 : i32
    %c0_i32_1 = arith.constant 0 : i32
    return %c0_i32, %c0_i32_0 : i32, i32
  }
  func.func @transform_3(%arg0: i32) -> (i32, i32) {
    %c0_i32 = arith.constant 0 : i32
    %c0_i32_0 = arith.constant 0 : i32
    %c0_i32_1 = arith.constant 0 : i32
    return %c0_i32, %c0_i32_0 : i32, i32
  }
  func.func @transform_4(%arg0: i32) -> (i32, i32, i32) {
    %c0_i32 = arith.constant 0 : i32
    %c0_i32_0 = arith.constant 0 : i32
    %c0_i32_1 = arith.constant 0 : i32
    %c0_i32_2 = arith.constant 0 : i32
    return %c0_i32, %c0_i32_0, %c0_i32_1 : i32, i32, i32
  }
  func.func @transform_5(%arg0: i32) -> (i32, i32) {
    %c0_i32 = arith.constant 0 : i32
    %c0_i32_0 = arith.constant 0 : i32
    %c0_i32_1 = arith.constant 0 : i32
    return %c0_i32, %c0_i32_0 : i32, i32
  }
  func.func @transform_6(%arg0: i32) -> (i32, i32) {
    %c0_i32 = arith.constant 0 : i32
    %c0_i32_0 = arith.constant 0 : i32
    %c0_i32_1 = arith.constant 0 : i32
    return %c0_i32, %c0_i32_0 : i32, i32
  }
  func.func @transform_7(%arg0: i32) -> (i32, i32) {
    %c0_i32 = arith.constant 0 : i32
    %c0_i32_0 = arith.constant 0 : i32
    %c0_i32_1 = arith.constant 0 : i32
    return %c0_i32, %c0_i32_0 : i32, i32
  }
}

</mosaic_0001>

<llo_original>
// kernel: tpu_custom_call.1
$region0: #{tpu_custom_call.1}
  #allocation0 [shape = 'u32[]', space=smem, size = 0x4, offset = 0x4, fixed_abs, tag = 'smem constant byte address 0x4 - core index']
  #allocation1 [shape = 'u32[144,128]{1,0:T(1,128)}', space=vmem, size = 0x12000, scoped, tag = 'internal scratch']
  %s0 = inlined_call_operand.vmem [shape: f32[4,512], index: 0, kind: input, shape index: {}]
  %s1 = inlined_call_operand.vmem [shape: f32[9,8,4], index: 1, kind: input, shape index: {}]
  %s2 = inlined_call_operand.vmem [shape: f32[8,1], index: 2, kind: input, shape index: {}]
  %s3 = inlined_call_operand.vmem [shape: f32[8,1], index: 3, kind: input, shape index: {}]
  %s4 = inlined_call_operand.vmem [shape: f32[9,8,8], index: 4, kind: input, shape index: {}]
  %s5 = inlined_call_operand.vmem [shape: f32[8,1], index: 5, kind: input, shape index: {}]
  %s6 = inlined_call_operand.vmem [shape: f32[8,1], index: 6, kind: input, shape index: {}]
  %s7 = inlined_call_operand.hbm [shape: f32[8,512], index: 7, kind: output, shape index: {}]
  %s8 = sld [smem:[#allocation0]]
  $region38: #{tpu_custom_call.1} parent=0
    _
  %s10 = ssub.s32 1, %s8
  %s11 = scalar_select 0, %s10, %s8
  $region1: #{tpu_custom_call.1} parent=0
    #allocation2 [shape = 'u8[16384]{0}', space=vmem, size = 0x4000, scoped, tag = 'output window, operand 0, single buffered']
    #allocation3 [shape = 's32[1]{0}', space=sflag, size = 0x4, scoped, tag = 'scoped memory for tpu_custom_call.1']
    %12 = vsyncpa [#allocation3], 0
    // Predicated region
    $region2: #{tpu_custom_call.1} parent=1 // pred_check
      _
    $region3: #{tpu_custom_call.1} parent=1 // pred_check_branch
      %14 = sbr.rel (0) target = $region5
    $region4: #{tpu_custom_call.1} parent=1 // pred_region
      _
    $region5: #{tpu_custom_call.1} parent=1 // pred_fallthru
      _
    // Predicated region
    $region6: #{tpu_custom_call.1} parent=1 // pred_check
      _
    $region7: #{tpu_custom_call.1} parent=1 // pred_check_branch
      %16 = sbr.rel (0) target = $region9
    $region8: #{tpu_custom_call.1} parent=1 // pred_region
      _
    $region9: #{tpu_custom_call.1} parent=1 // pred_fallthru
      _
    // Predicated region
    $region10: #{tpu_custom_call.1} parent=1 // pred_check
      _
    $region11: #{tpu_custom_call.1} parent=1 // pred_check_branch
      %18 = sbr.rel (0) target = $region13
    $region12: #{tpu_custom_call.1} parent=1 // pred_region
      _
    $region13: #{tpu_custom_call.1} parent=1 // pred_fallthru
      _
    // Predicated region
    $region14: #{tpu_custom_call.1} parent=1 // pred_check
      _
    $region15: #{tpu_custom_call.1} parent=1 // pred_check_branch
      %20 = sbr.rel (0) target = $region17
    $region16: #{tpu_custom_call.1} parent=1 // pred_region
      _
    $region17: #{tpu_custom_call.1} parent=1 // pred_fallthru
      _
    // Predicated region
    $region18: #{tpu_custom_call.1} parent=1 // pred_check
      _
    $region19: #{tpu_custom_call.1} parent=1 // pred_check_branch
      %22 = sbr.rel (0) target = $region21
    $region20: #{tpu_custom_call.1} parent=1 // pred_region
      _
    $region21: #{tpu_custom_call.1} parent=1 // pred_fallthru
      _
    // Predicated region
    $region22: #{tpu_custom_call.1} parent=1 // pred_check
      _
    $region23: #{tpu_custom_call.1} parent=1 // pred_check_branch
      %24 = sbr.rel (0) target = $region25
    $region24: #{tpu_custom_call.1} parent=1 // pred_region
      _
    $region25: #{tpu_custom_call.1} parent=1 // pred_fallthru
      _
    // Predicated region
    $region26: #{tpu_custom_call.1} parent=1 // pred_check
      _
    $region27: #{tpu_custom_call.1} parent=1 // pred_check_branch
      %26 = sbr.rel (0) target = $region29
    $region28: #{tpu_custom_call.1} parent=1 // pred_region
      _
    $region29: #{tpu_custom_call.1} parent=1 // pred_fallthru
      _
    %v27 = vlaneseq
    %v28 = vand.u32 %v27, 127
    %v29 = vadd.s32 %v28, 128
    %v30 = vadd.s32 %v28, 256
    %v31 = vadd.s32 %v28, 384
    %v32 = vand.u32 %v28, 255
    %v33 = vand.u32 %v29, 255
    %v34 = vand.u32 %v30, 255
    %v35 = vand.u32 %v31, 255
    %v36 = vshra.s32 %v32, 4
    %v37 = vshra.s32 %v33, 4
    %v38 = vshra.s32 %v34, 4
    %v39 = vshra.s32 %v35, 4
    %v40 = vand.u32 %v32, 15
    %v41 = vand.u32 %v33, 15
    %v42 = vand.u32 %v34, 15
    %v43 = vand.u32 %v35, 15
    %vm44 = vcmp.ge.s32.totalorder %v36, 1
    %vm45 = vcmp.ge.s32.totalorder %v37, 1
    %vm46 = vcmp.ge.s32.totalorder %v38, 1
    %vm47 = vcmp.ge.s32.totalorder %v39, 1
    %vm48 = vcmp.ge.s32.totalorder %v40, 1
    %vm49 = vcmp.ge.s32.totalorder %v41, 1
    %vm50 = vcmp.ge.s32.totalorder %v42, 1
    %vm51 = vcmp.ge.s32.totalorder %v43, 1
    %vm52 = vmand %vm44, %vm48
    %vm53 = vmand %vm45, %vm49
    %vm54 = vmand %vm46, %vm50
    %vm55 = vmand %vm47, %vm51
    %vm56 = vcmp.lt.s32.totalorder %v40, 15
    %vm57 = vcmp.lt.s32.totalorder %v41, 15
    %vm58 = vcmp.lt.s32.totalorder %v42, 15
    %vm59 = vcmp.lt.s32.totalorder %v43, 15
    %vm60 = vmand %vm44, %vm56
    %vm61 = vmand %vm45, %vm57
    %vm62 = vmand %vm46, %vm58
    %vm63 = vmand %vm47, %vm59
    %vm64 = vcmp.lt.s32.totalorder %v36, 15
    %vm65 = vcmp.lt.s32.totalorder %v37, 15
    %vm66 = vcmp.lt.s32.totalorder %v38, 15
    %vm67 = vcmp.lt.s32.totalorder %v39, 15
    %vm68 = vmand %vm64, %vm48
    %vm69 = vmand %vm65, %vm49
    %vm70 = vmand %vm66, %vm50
    %vm71 = vmand %vm67, %vm51
    %vm72 = vmand %vm64, %vm56
    %vm73 = vmand %vm65, %vm57
    %vm74 = vmand %vm66, %vm58
    %vm75 = vmand %vm67, %vm59
    %v76 = vld [vmem:[%s0] sm:$0xff]
    %v77 = vld [vmem:[%s0 + $0x8] sm:$0xff]
    %v80 = vcombine.high %v76, %v76
    %v81 = vcombine.high %v77, %v77
    %84 = vrot.lane.b32.xlu0 %v76, 17
    %v85 = vpop.permute.xlu0 %84
    %86 = vrot.lane.b32.xlu0 %v80, 17
    %v87 = vpop.permute.xlu0 %86
    %88 = vrot.lane.b32.xlu0 %v77, 17
    %v89 = vpop.permute.xlu0 %88
    %90 = vrot.lane.b32.xlu0 %v81, 17
    %v91 = vpop.permute.xlu0 %90
    %vm92 = vcmp.lt.s32.totalorder %v28, 17
    %v93 = vsel %vm92, %v89, %v91
    %v94 = vsel %vm92, %v87, %v89
    %v95 = vsel %vm92, %v85, %v87
    %v96 = vsel %vm92, %v91, %v85
    %v97 = vsel %vm52, 1, 0
    %v98 = vsel %vm53, 1, 0
    %v99 = vsel %vm54, 1, 0
    %v100 = vsel %vm55, 1, 0
    %vm101 = vcmp.eq.s32.totalorder %v97, 1
    %vm102 = vcmp.eq.s32.totalorder %v98, 1
    %vm103 = vcmp.eq.s32.totalorder %v99, 1
    %vm104 = vcmp.eq.s32.totalorder %v100, 1
    %v105 = vsel %vm101, %v96, 0.0
    %v106 = vsel %vm102, %v95, 0.0
    %v107 = vsel %vm103, %v94, 0.0
    %v108 = vsel %vm104, %v93, 0.0
    %v109 = vld [vmem:[%s1] sm:$0xff]
    %110 = vrot.lane.b32.xlu0 %v76, 16
    %v111 = vpop.permute.xlu0 %110
    %112 = vrot.lane.b32.xlu0 %v80, 16
    %v113 = vpop.permute.xlu0 %112
    %114 = vrot.lane.b32.xlu0 %v77, 16
    %v115 = vpop.permute.xlu0 %114
    %116 = vrot.lane.b32.xlu0 %v81, 16
    %v117 = vpop.permute.xlu0 %116
    %vm118 = vcmp.lt.s32.totalorder %v28, 16
    %v119 = vsel %vm118, %v115, %v117
    %v120 = vsel %vm118, %v113, %v115
    %v121 = vsel %vm118, %v111, %v113
    %v122 = vsel %vm118, %v117, %v111
    %v123 = vsel %vm44, 1, 0
    %v124 = vsel %vm45, 1, 0
    %v125 = vsel %vm46, 1, 0
    %v126 = vsel %vm47, 1, 0
    %vm127 = vcmp.eq.s32.totalorder %v123, 1
    %vm128 = vcmp.eq.s32.totalorder %v124, 1
    %vm129 = vcmp.eq.s32.totalorder %v125, 1
    %vm130 = vcmp.eq.s32.totalorder %v126, 1
    %v131 = vsel %vm127, %v122, 0.0
    %v132 = vsel %vm128, %v121, 0.0
    %v133 = vsel %vm129, %v120, 0.0
    %v134 = vsel %vm130, %v119, 0.0
    %s135 = scalar_lea.vmem %s1, 8
    %v136 = vld [vmem:[%s135] sm:$0xff]
    %vm137 = vcmask 31744
    %v139 = vsel %vm137, %v136, 0
    %vm141 = vcmask 1043456
    %v143 = vsel %vm141, %v131, 0
    %v146 = vsel %vm141, %v132, 0
    %v149 = vsel %vm141, %v133, 0
    %v152 = vsel %vm141, %v134, 0
    %154 = vmatprep.subr.mxu0 %v146
    %155 = vmatpush1.msra.mxu0 %v143
    %156 = vmatprep.subr.mxu0 0.0
    %157 = vmatpush1.msra.mxu0 0.0
    %158 = vmatprep.subr.mxu0 0.0
    %159 = vmatpush1.msra.mxu0 0.0
    %160 = vmatprep.subr.mxu0 0.0
    %161 = vmatpush1.msra.mxu0 0.0
    %162 = vmatprep.subr.mxu0 0.0
    %163 = vmatpush1.msra.mxu0 0.0
    %164 = vmatprep.subr.mxu0 0.0
    %165 = vmatpush1.msra.mxu0 0.0
    %166 = vmatprep.subr.mxu0 0.0
    %167 = vmatpush1.msra.mxu0 0.0
    %168 = vmatprep.subr.mxu0 0.0
    %169 = vmatpush1.msra.mxu0 0.0
    %170 = vmatprep.subr.mxu0 0.0
    %171 = vmatpush1.msra.mxu0 0.0
    %172 = vmatprep.subr.mxu0 0.0
    %173 = vmatpush1.msra.mxu0 0.0
    %174 = vmatprep.subr.mxu0 0.0
    %175 = vmatpush1.msra.mxu0 0.0
    %176 = vmatprep.subr.mxu0 0.0
    %177 = vmatpush1.msra.mxu0 0.0
    %178 = vmatprep.subr.mxu0 0.0
    %179 = vmatpush1.msra.mxu0 0.0
    %180 = vmatprep.subr.mxu0 0.0
    %181 = vmatpush1.msra.mxu0 0.0
    %182 = vmatprep.subr.mxu0 0.0
    %183 = vmatpush1.msra.mxu0 0.0
    %184 = vmatprep.subr.mxu0 0.0
    %185 = vmatpush1.msra.mxu0 0.0
    %186 = vmatprep.subr.mxu0 0.0
    %187 = vmatpush1.msra.mxu0 0.0
    %188 = vmatprep.subr.mxu0 0.0
    %189 = vmatpush1.msra.mxu0 0.0
    %190 = vmatprep.subr.mxu0 0.0
    %191 = vmatpush1.msra.mxu0 0.0
    %192 = vmatprep.subr.mxu0 0.0
    %193 = vmatpush1.msra.mxu0 0.0
    %194 = vmatprep.subr.mxu0 0.0
    %195 = vmatpush1.msra.mxu0 0.0
    %196 = vmatprep.subr.mxu0 0.0
    %197 = vmatpush1.msra.mxu0 0.0
    %198 = vmatprep.subr.mxu0 0.0
    %199 = vmatpush1.msra.mxu0 0.0
    %200 = vmatprep.subr.mxu0 0.0
    %201 = vmatpush1.msra.mxu0 0.0
    %202 = vmatprep.subr.mxu0 0.0
    %203 = vmatpush1.msra.mxu0 0.0
    %204 = vmatprep.subr.mxu0 0.0
    %205 = vmatpush1.msra.mxu0 0.0
    %206 = vmatprep.subr.mxu0 0.0
    %207 = vmatpush1.msra.mxu0 0.0
    %208 = vmatprep.subr.mxu0 0.0
    %209 = vmatpush1.msra.mxu0 0.0
    %210 = vmatprep.subr.mxu0 0.0
    %211 = vmatpush1.msra.mxu0 0.0
    %212 = vmatprep.subr.mxu0 0.0
    %213 = vmatpush1.msra.mxu0 0.0
    %214 = vmatprep.subr.mxu0 0.0
    %215 = vmatpush1.msra.mxu0 0.0
    %216 = vmatprep.subr.mxu0 0.0
    %217 = vmatpush1.msra.mxu0 0.0
    %218 = vmatprep.mubr.f32.mxu0 0.0
    %219 = vmatmul.mubr.f32.gmra.mrb[0].mxu0 %v139
    %v220 = vpop.f32.mrb[0].mxu0
    %v221 = vadd.f32 0.0, %v220
    %v222 = vpop.f32.mrb[0].mxu0
    %v223 = vadd.f32 0.0, %v222
    %224 = vdwg.mxu0
    %225 = vmatprep.subr.mxu0 %v152
    %226 = vmatpush1.msra.mxu0 %v149
    %227 = vmatprep.subr.mxu0 0.0
    %228 = vmatpush1.msra.mxu0 0.0
    %229 = vmatprep.subr.mxu0 0.0
    %230 = vmatpush1.msra.mxu0 0.0
    %231 = vmatprep.subr.mxu0 0.0
    %232 = vmatpush1.msra.mxu0 0.0
    %233 = vmatprep.subr.mxu0 0.0
    %234 = vmatpush1.msra.mxu0 0.0
    %235 = vmatprep.subr.mxu0 0.0
    %236 = vmatpush1.msra.mxu0 0.0
    %237 = vmatprep.subr.mxu0 0.0
    %238 = vmatpush1.msra.mxu0 0.0
    %239 = vmatprep.subr.mxu0 0.0
    %240 = vmatpush1.msra.mxu0 0.0
    %241 = vmatprep.subr.mxu0 0.0
    %242 = vmatpush1.msra.mxu0 0.0
    %243 = vmatprep.subr.mxu0 0.0
    %244 = vmatpush1.msra.mxu0 0.0
    %245 = vmatprep.subr.mxu0 0.0
    %246 = vmatpush1.msra.mxu0 0.0
    %247 = vmatprep.subr.mxu0 0.0
    %248 = vmatpush1.msra.mxu0 0.0
    %249 = vmatprep.subr.mxu0 0.0
    %250 = vmatpush1.msra.mxu0 0.0
    %251 = vmatprep.subr.mxu0 0.0
    %252 = vmatpush1.msra.mxu0 0.0
    %253 = vmatprep.subr.mxu0 0.0
    %254 = vmatpush1.msra.mxu0 0.0
    %255 = vmatprep.subr.mxu0 0.0
    %256 = vmatpush1.msra.mxu0 0.0
    %257 = vmatprep.subr.mxu0 0.0
    %258 = vmatpush1.msra.mxu0 0.0
    %259 = vmatprep.subr.mxu0 0.0
    %260 = vmatpush1.msra.mxu0 0.0
    %261 = vmatprep.subr.mxu0 0.0
    %262 = vmatpush1.msra.mxu0 0.0
    %263 = vmatprep.subr.mxu0 0.0
    %264 = vmatpush1.msra.mxu0 0.0
    %265 = vmatprep.subr.mxu0 0.0
    %266 = vmatpush1.msra.mxu0 0.0
    %267 = vmatprep.subr.mxu0 0.0
    %268 = vmatpush1.msra.mxu0 0.0
    %269 = vmatprep.subr.mxu0 0.0
    %270 = vmatpush1.msra.mxu0 0.0
    %271 = vmatprep.subr.mxu0 0.0
    %272 = vmatpush1.msra.mxu0 0.0
    %273 = vmatprep.subr.mxu0 0.0
    %274 = vmatpush1.msra.mxu0 0.0
    %275 = vmatprep.subr.mxu0 0.0
    %276 = vmatpush1.msra.mxu0 0.0
    %277 = vmatprep.subr.mxu0 0.0
    %278 = vmatpush1.msra.mxu0 0.0
    %279 = vmatprep.subr.mxu0 0.0
    %280 = vmatpush1.msra.mxu0 0.0
    %281 = vmatprep.subr.mxu0 0.0
    %282 = vmatpush1.msra.mxu0 0.0
    %283 = vmatprep.subr.mxu0 0.0
    %284 = vmatpush1.msra.mxu0 0.0
    %285 = vmatprep.subr.mxu0 0.0
    %286 = vmatpush1.msra.mxu0 0.0
    %287 = vmatprep.subr.mxu0 0.0
    %288 = vmatpush1.msra.mxu0 0.0
    %289 = vmatprep.mubr.f32.mxu0 0.0
    %290 = vmatmul.mubr.f32.gmra.mrb[0].mxu0 %v139
    %v291 = vpop.f32.mrb[0].mxu0
    %v292 = vadd.f32 0.0, %v291
    %v293 = vpop.f32.mrb[0].mxu0
    %v294 = vadd.f32 0.0, %v293
    %295 = vdwg.mxu0
    %v297 = vsel %vm137, %v109, 0
    %v300 = vsel %vm141, %v105, 0
    %v303 = vsel %vm141, %v106, 0
    %v306 = vsel %vm141, %v107, 0
    %v309 = vsel %vm141, %v108, 0
    %311 = vmatprep.subr.mxu0 %v303
    %312 = vmatpush1.msra.mxu0 %v300
    %313 = vmatprep.subr.mxu0 0.0
    %314 = vmatpush1.msra.mxu0 0.0
    %315 = vmatprep.subr.mxu0 0.0
    %316 = vmatpush1.msra.mxu0 0.0
    %317 = vmatprep.subr.mxu0 0.0
    %318 = vmatpush1.msra.mxu0 0.0
    %319 = vmatprep.subr.mxu0 0.0
    %320 = vmatpush1.msra.mxu0 0.0
    %321 = vmatprep.subr.mxu0 0.0
    %322 = vmatpush1.msra.mxu0 0.0
    %323 = vmatprep.subr.mxu0 0.0
    %324 = vmatpush1.msra.mxu0 0.0
    %325 = vmatprep.subr.mxu0 0.0
    %326 = vmatpush1.msra.mxu0 0.0
    %327 = vmatprep.subr.mxu0 0.0
    %328 = vmatpush1.msra.mxu0 0.0
    %329 = vmatprep.subr.mxu0 0.0
    %330 = vmatpush1.msra.mxu0 0.0
    %331 = vmatprep.subr.mxu0 0.0
    %332 = vmatpush1.msra.mxu0 0.0
    %333 = vmatprep.subr.mxu0 0.0
    %334 = vmatpush1.msra.mxu0 0.0
    %335 = vmatprep.subr.mxu0 0.0
    %336 = vmatpush1.msra.mxu0 0.0
    %337 = vmatprep.subr.mxu0 0.0
    %338 = vmatpush1.msra.mxu0 0.0
    %339 = vmatprep.subr.mxu0 0.0
    %340 = vmatpush1.msra.mxu0 0.0
    %341 = vmatprep.subr.mxu0 0.0
    %342 = vmatpush1.msra.mxu0 0.0
    %343 = vmatprep.subr.mxu0 0.0
    %344 = vmatpush1.msra.mxu0 0.0
    %345 = vmatprep.subr.mxu0 0.0
    %346 = vmatpush1.msra.mxu0 0.0
    %347 = vmatprep.subr.mxu0 0.0
    %348 = vmatpush1.msra.mxu0 0.0
    %349 = vmatprep.subr.mxu0 0.0
    %350 = vmatpush1.msra.mxu0 0.0
    %351 = vmatprep.subr.mxu0 0.0
    %352 = vmatpush1.msra.mxu0 0.0
    %353 = vmatprep.subr.mxu0 0.0
    %354 = vmatpush1.msra.mxu0 0.0
    %355 = vmatprep.subr.mxu0 0.0
    %356 = vmatpush1.msra.mxu0 0.0
    %357 = vmatprep.subr.mxu0 0.0
    %358 = vmatpush1.msra.mxu0 0.0
    %359 = vmatprep.subr.mxu0 0.0
    %360 = vmatpush1.msra.mxu0 0.0
    %361 = vmatprep.subr.mxu0 0.0
    %362 = vmatpush1.msra.mxu0 0.0
    %363 = vmatprep.subr.mxu0 0.0
    %364 = vmatpush1.msra.mxu0 0.0
    %365 = vmatprep.subr.mxu0 0.0
    %366 = vmatpush1.msra.mxu0 0.0
    %367 = vmatprep.subr.mxu0 0.0
    %368 = vmatpush1.msra.mxu0 0.0
    %369 = vmatprep.subr.mxu0 0.0
    %370 = vmatpush1.msra.mxu0 0.0
    %371 = vmatprep.subr.mxu0 0.0
    %372 = vmatpush1.msra.mxu0 0.0
    %373 = vmatprep.subr.mxu0 0.0
    %374 = vmatpush1.msra.mxu0 0.0
    %375 = vmatprep.mubr.f32.mxu0 0.0
    %376 = vmatmul.mubr.f32.gmra.mrb[0].mxu0 %v297
    %v377 = vpop.f32.mrb[0].mxu0
    %v378 = vadd.f32 %v221, %v377
    %v379 = vpop.f32.mrb[0].mxu0
    %v380 = vadd.f32 %v223, %v379
    %381 = vdwg.mxu0
    %382 = vmatprep.subr.mxu0 %v309
    %383 = vmatpush1.msra.mxu0 %v306
    %384 = vmatprep.subr.mxu0 0.0
    %385 = vmatpush1.msra.mxu0 0.0
    %386 = vmatprep.subr.mxu0 0.0
    %387 = vmatpush1.msra.mxu0 0.0
    %388 = vmatprep.subr.mxu0 0.0
    %389 = vmatpush1.msra.mxu0 0.0
    %390 = vmatprep.subr.mxu0 0.0
    %391 = vmatpush1.msra.mxu0 0.0
    %392 = vmatprep.subr.mxu0 0.0
    %393 = vmatpush1.msra.mxu0 0.0
    %394 = vmatprep.subr.mxu0 0.0
    %395 = vmatpush1.msra.mxu0 0.0
    %396 = vmatprep.subr.mxu0 0.0
    %397 = vmatpush1.msra.mxu0 0.0
    %398 = vmatprep.subr.mxu0 0.0
    %399 = vmatpush1.msra.mxu0 0.0
    %400 = vmatprep.subr.mxu0 0.0
    %401 = vmatpush1.msra.mxu0 0.0
    %402 = vmatprep.subr.mxu0 0.0
    %403 = vmatpush1.msra.mxu0 0.0
    %404 = vmatprep.subr.mxu0 0.0
    %405 = vmatpush1.msra.mxu0 0.0
    %406 = vmatprep.subr.mxu0 0.0
    %407 = vmatpush1.msra.mxu0 0.0
    %408 = vmatprep.subr.mxu0 0.0
    %409 = vmatpush1.msra.mxu0 0.0
    %410 = vmatprep.subr.mxu0 0.0
    %411 = vmatpush1.msra.mxu0 0.0
    %412 = vmatprep.subr.mxu0 0.0
    %413 = vmatpush1.msra.mxu0 0.0
    %414 = vmatprep.subr.mxu0 0.0
    %415 = vmatpush1.msra.mxu0 0.0
    %416 = vmatprep.subr.mxu0 0.0
    %417 = vmatpush1.msra.mxu0 0.0
    %418 = vmatprep.subr.mxu0 0.0
    %419 = vmatpush1.msra.mxu0 0.0
    %420 = vmatprep.subr.mxu0 0.0
    %421 = vmatpush1.msra.mxu0 0.0
    %422 = vmatprep.subr.mxu0 0.0
    %423 = vmatpush1.msra.mxu0 0.0
    %424 = vmatprep.subr.mxu0 0.0
    %425 = vmatpush1.msra.mxu0 0.0
    %426 = vmatprep.subr.mxu0 0.0
    %427 = vmatpush1.msra.mxu0 0.0
    %428 = vmatprep.subr.mxu0 0.0
    %429 = vmatpush1.msra.mxu0 0.0
    %430 = vmatprep.subr.mxu0 0.0
    %431 = vmatpush1.msra.mxu0 0.0
    %432 = vmatprep.subr.mxu0 0.0
    %433 = vmatpush1.msra.mxu0 0.0
    %434 = vmatprep.subr.mxu0 0.0
    %435 = vmatpush1.msra.mxu0 0.0
    %436 = vmatprep.subr.mxu0 0.0
    %437 = vmatpush1.msra.mxu0 0.0
    %438 = vmatprep.subr.mxu0 0.0
    %439 = vmatpush1.msra.mxu0 0.0
    %440 = vmatprep.subr.mxu0 0.0
    %441 = vmatpush1.msra.mxu0 0.0
    %442 = vmatprep.subr.mxu0 0.0
    %443 = vmatpush1.msra.mxu0 0.0
    %444 = vmatprep.subr.mxu0 0.0
    %445 = vmatpush1.msra.mxu0 0.0
    %446 = vmatprep.mubr.f32.mxu0 0.0
    %447 = vmatmul.mubr.f32.gmra.mrb[0].mxu0 %v297
    %v448 = vpop.f32.mrb[0].mxu0
    %v449 = vadd.f32 %v292, %v448
    %v450 = vpop.f32.mrb[0].mxu0
    %v451 = vadd.f32 %v294, %v450
    %452 = vdwg.mxu0
    %453 = vrot.lane.b32.xlu0 %v76, 15
    %v454 = vpop.permute.xlu0 %453
    %455 = vrot.lane.b32.xlu0 %v80, 15
    %v456 = vpop.permute.xlu0 %455
    %457 = vrot.lane.b32.xlu0 %v77, 15
    %v458 = vpop.permute.xlu0 %457
    %459 = vrot.lane.b32.xlu0 %v81, 15
    %v460 = vpop.permute.xlu0 %459
    %vm461 = vcmp.lt.s32.totalorder %v28, 15
    %v462 = vsel %vm461, %v458, %v460
    %v463 = vsel %vm461, %v456, %v458
    %v464 = vsel %vm461, %v454, %v456
    %v465 = vsel %vm461, %v460, %v454
    %v466 = vsel %vm60, 1, 0
    %v467 = vsel %vm61, 1, 0
    %v468 = vsel %vm62, 1, 0
    %v469 = vsel %vm63, 1, 0
    %vm470 = vcmp.eq.s32.totalorder %v466, 1
    %vm471 = vcmp.eq.s32.totalorder %v467, 1
    %vm472 = vcmp.eq.s32.totalorder %v468, 1
    %vm473 = vcmp.eq.s32.totalorder %v469, 1
    %v474 = vsel %vm470, %v465, 0.0
    %v475 = vsel %vm471, %v464, 0.0
    %v476 = vsel %vm472, %v463, 0.0
    %v477 = vsel %vm473, %v462, 0.0
    %s478 = scalar_lea.vmem %s1, 16
    %v479 = vld [vmem:[%s478] sm:$0xff]
    %v481 = vsel %vm137, %v479, 0
    %v484 = vsel %vm141, %v474, 0
    %v487 = vsel %vm141, %v475, 0
    %v490 = vsel %vm141, %v476, 0
    %v493 = vsel %vm141, %v477, 0
    %495 = vmatprep.subr.mxu0 %v487
    %496 = vmatpush1.msra.mxu0 %v484
    %497 = vmatprep.subr.mxu0 0.0
    %498 = vmatpush1.msra.mxu0 0.0
    %499 = vmatprep.subr.mxu0 0.0
    %500 = vmatpush1.msra.mxu0 0.0
    %501 = vmatprep.subr.mxu0 0.0
    %502 = vmatpush1.msra.mxu0 0.0
    %503 = vmatprep.subr.mxu0 0.0
    %504 = vmatpush1.msra.mxu0 0.0
    %505 = vmatprep.subr.mxu0 0.0
    %506 = vmatpush1.msra.mxu0 0.0
    %507 = vmatprep.subr.mxu0 0.0
    %508 = vmatpush1.msra.mxu0 0.0
    %509 = vmatprep.subr.mxu0 0.0
    %510 = vmatpush1.msra.mxu0 0.0
    %511 = vmatprep.subr.mxu0 0.0
    %512 = vmatpush1.msra.mxu0 0.0
    %513 = vmatprep.subr.mxu0 0.0
    %514 = vmatpush1.msra.mxu0 0.0
    %515 = vmatprep.subr.mxu0 0.0
    %516 = vmatpush1.msra.mxu0 0.0
    %517 = vmatprep.subr.mxu0 0.0
    %518 = vmatpush1.msra.mxu0 0.0
    %519 = vmatprep.subr.mxu0 0.0
    %520 = vmatpush1.msra.mxu0 0.0
    %521 = vmatprep.subr.mxu0 0.0
    %522 = vmatpush1.msra.mxu0 0.0
    %523 = vmatprep.subr.mxu0 0.0
    %524 = vmatpush1.msra.mxu0 0.0
    %525 = vmatprep.subr.mxu0 0.0
    %526 = vmatpush1.msra.mxu0 0.0
    %527 = vmatprep.subr.mxu0 0.0
    %528 = vmatpush1.msra.mxu0 0.0
    %529 = vmatprep.subr.mxu0 0.0
    %530 = vmatpush1.msra.mxu0 0.0
    %531 = vmatprep.subr.mxu0 0.0
    %532 = vmatpush1.msra.mxu0 0.0
    %533 = vmatprep.subr.mxu0 0.0
    %534 = vmatpush1.msra.mxu0 0.0
    %535 = vmatprep.subr.mxu0 0.0
    %536 = vmatpush1.msra.mxu0 0.0
    %537 = vmatprep.subr.mxu0 0.0
    %538 = vmatpush1.msra.mxu0 0.0
    %539 = vmatprep.subr.mxu0 0.0
    %540 = vmatpush1.msra.mxu0 0.0
    %541 = vmatprep.subr.mxu0 0.0
    %542 = vmatpush1.msra.mxu0 0.0
    %543 = vmatprep.subr.mxu0 0.0
    %544 = vmatpush1.msra.mxu0 0.0
    %545 = vmatprep.subr.mxu0 0.0
    %546 = vmatpush1.msra.mxu0 0.0
    %547 = vmatprep.subr.mxu0 0.0
    %548 = vmatpush1.msra.mxu0 0.0
    %549 = vmatprep.subr.mxu0 0.0
    %550 = vmatpush1.msra.mxu0 0.0
    %551 = vmatprep.subr.mxu0 0.0
    %552 = vmatpush1.msra.mxu0 0.0
    %553 = vmatprep.subr.mxu0 0.0
    %554 = vmatpush1.msra.mxu0 0.0
    %555 = vmatprep.subr.mxu0 0.0
    %556 = vmatpush1.msra.mxu0 0.0
    %557 = vmatprep.subr.mxu0 0.0
    %558 = vmatpush1.msra.mxu0 0.0
    %559 = vmatprep.mubr.f32.mxu0 0.0
    %560 = vmatmul.mubr.f32.gmra.mrb[0].mxu0 %v481
    %v561 = vpop.f32.mrb[0].mxu0
    %v562 = vadd.f32 0.0, %v561
    %v563 = vpop.f32.mrb[0].mxu0
    %v564 = vadd.f32 0.0, %v563
    %565 = vdwg.mxu0
    %566 = vmatprep.subr.mxu0 %v493
    %567 = vmatpush1.msra.mxu0 %v490
    %568 = vmatprep.subr.mxu0 0.0
    %569 = vmatpush1.msra.mxu0 0.0
    %570 = vmatprep.subr.mxu0 0.0
    %571 = vmatpush1.msra.mxu0 0.0
    %572 = vmatprep.subr.mxu0 0.0
    %573 = vmatpush1.msra.mxu0 0.0
    %574 = vmatprep.subr.mxu0 0.0
    %575 = vmatpush1.msra.mxu0 0.0
    %576 = vmatprep.subr.mxu0 0.0
    %577 = vmatpush1.msra.mxu0 0.0
    %578 = vmatprep.subr.mxu0 0.0
    %579 = vmatpush1.msra.mxu0 0.0
    %580 = vmatprep.subr.mxu0 0.0
    %581 = vmatpush1.msra.mxu0 0.0
    %582 = vmatprep.subr.mxu0 0.0
    %583 = vmatpush1.msra.mxu0 0.0
    %584 = vmatprep.subr.mxu0 0.0
    %585 = vmatpush1.msra.mxu0 0.0
    %586 = vmatprep.subr.mxu0 0.0
    %587 = vmatpush1.msra.mxu0 0.0
    %588 = vmatprep.subr.mxu0 0.0
    %589 = vmatpush1.msra.mxu0 0.0
    %590 = vmatprep.subr.mxu0 0.0
    %591 = vmatpush1.msra.mxu0 0.0
    %592 = vmatprep.subr.mxu0 0.0
    %593 = vmatpush1.msra.mxu0 0.0
    %594 = vmatprep.subr.mxu0 0.0
    %595 = vmatpush1.msra.mxu0 0.0
    %596 = vmatprep.subr.mxu0 0.0
    %597 = vmatpush1.msra.mxu0 0.0
    %598 = vmatprep.subr.mxu0 0.0
    %599 = vmatpush1.msra.mxu0 0.0
    %600 = vmatprep.subr.mxu0 0.0
    %601 = vmatpush1.msra.mxu0 0.0
    %602 = vmatprep.subr.mxu0 0.0
    %603 = vmatpush1.msra.mxu0 0.0
    %604 = vmatprep.subr.mxu0 0.0
    %605 = vmatpush1.msra.mxu0 0.0
    %606 = vmatprep.subr.mxu0 0.0
    %607 = vmatpush1.msra.mxu0 0.0
    %608 = vmatprep.subr.mxu0 0.0
    %609 = vmatpush1.msra.mxu0 0.0
    %610 = vmatprep.subr.mxu0 0.0
    %611 = vmatpush1.msra.mxu0 0.0
    %612 = vmatprep.subr.mxu0 0.0
    %613 = vmatpush1.msra.mxu0 0.0
    %614 = vmatprep.subr.mxu0 0.0
    %615 = vmatpush1.msra.mxu0 0.0
    %616 = vmatprep.subr.mxu0 0.0
    %617 = vmatpush1.msra.mxu0 0.0
    %618 = vmatprep.subr.mxu0 0.0
    %619 = vmatpush1.msra.mxu0 0.0
    %620 = vmatprep.subr.mxu0 0.0
    %621 = vmatpush1.msra.mxu0 0.0
    %622 = vmatprep.subr.mxu0 0.0
    %623 = vmatpush1.msra.mxu0 0.0
    %624 = vmatprep.subr.mxu0 0.0
    %625 = vmatpush1.msra.mxu0 0.0
    %626 = vmatprep.subr.mxu0 0.0
    %627 = vmatpush1.msra.mxu0 0.0
    %628 = vmatprep.subr.mxu0 0.0
    %629 = vmatpush1.msra.mxu0 0.0
    %630 = vmatprep.mubr.f32.mxu0 0.0
    %631 = vmatmul.mubr.f32.gmra.mrb[0].mxu0 %v481
    %v632 = vpop.f32.mrb[0].mxu0
    %v633 = vadd.f32 0.0, %v632
    %v634 = vpop.f32.mrb[0].mxu0
    %v635 = vadd.f32 0.0, %v634
    %636 = vdwg.mxu0
    %v637 = vadd.f32 %v378, %v562
    %v638 = vadd.f32 %v380, %v564
    %v639 = vadd.f32 %v449, %v633
    %v640 = vadd.f32 %v451, %v635
    %641 = vrot.lane.b32.xlu0 %v76, 1
    %v642 = vpop.permute.xlu0 %641
    %643 = vrot.lane.b32.xlu0 %v80, 1
    %v644 = vpop.permute.xlu0 %643
    %645 = vrot.lane.b32.xlu0 %v77, 1
    %v646 = vpop.permute.xlu0 %645
    %647 = vrot.lane.b32.xlu0 %v81, 1
    %v648 = vpop.permute.xlu0 %647
    %vm649 = vcmp.lt.s32.totalorder %v28, 1
    %v650 = vsel %vm649, %v646, %v648
    %v651 = vsel %vm649, %v644, %v646
    %v652 = vsel %vm649, %v642, %v644
    %v653 = vsel %vm649, %v648, %v642
    %v654 = vsel %vm48, 1, 0
    %v655 = vsel %vm49, 1, 0
    %v656 = vsel %vm50, 1, 0
    %v657 = vsel %vm51, 1, 0
    %vm658 = vcmp.eq.s32.totalorder %v654, 1
    %vm659 = vcmp.eq.s32.totalorder %v655, 1
    %vm660 = vcmp.eq.s32.totalorder %v656, 1
    %vm661 = vcmp.eq.s32.totalorder %v657, 1
    %v662 = vsel %vm658, %v653, 0.0
    %v663 = vsel %vm659, %v652, 0.0
    %v664 = vsel %vm660, %v651, 0.0
    %v665 = vsel %vm661, %v650, 0.0
    %s666 = scalar_lea.vmem %s1, 24
    %v667 = vld [vmem:[%s666] sm:$0xff]
    %v669 = vsel %vm137, %v667, 0
    %v672 = vsel %vm141, %v662, 0
    %v675 = vsel %vm141, %v663, 0
    %v678 = vsel %vm141, %v664, 0
    %v681 = vsel %vm141, %v665, 0
    %683 = vmatprep.subr.mxu0 %v675
    %684 = vmatpush1.msra.mxu0 %v672
    %685 = vmatprep.subr.mxu0 0.0
    %686 = vmatpush1.msra.mxu0 0.0
    %687 = vmatprep.subr.mxu0 0.0
    %688 = vmatpush1.msra.mxu0 0.0
    %689 = vmatprep.subr.mxu0 0.0
    %690 = vmatpush1.msra.mxu0 0.0
    %691 = vmatprep.subr.mxu0 0.0
    %692 = vmatpush1.msra.mxu0 0.0
    %693 = vmatprep.subr.mxu0 0.0
    %694 = vmatpush1.msra.mxu0 0.0
    %695 = vmatprep.subr.mxu0 0.0
    %696 = vmatpush1.msra.mxu0 0.0
    %697 = vmatprep.subr.mxu0 0.0
    %698 = vmatpush1.msra.mxu0 0.0
    %699 = vmatprep.subr.mxu0 0.0
    %700 = vmatpush1.msra.mxu0 0.0
    %701 = vmatprep.subr.mxu0 0.0
    %702 = vmatpush1.msra.mxu0 0.0
    %703 = vmatprep.subr.mxu0 0.0
    %704 = vmatpush1.msra.mxu0 0.0
    %705 = vmatprep.subr.mxu0 0.0
    %706 = vmatpush1.msra.mxu0 0.0
    %707 = vmatprep.subr.mxu0 0.0
    %708 = vmatpush1.msra.mxu0 0.0
    %709 = vmatprep.subr.mxu0 0.0
    %710 = vmatpush1.msra.mxu0 0.0
    %711 = vmatprep.subr.mxu0 0.0
    %712 = vmatpush1.msra.mxu0 0.0
    %713 = vmatprep.subr.mxu0 0.0
    %714 = vmatpush1.msra.mxu0 0.0
    %715 = vmatprep.subr.mxu0 0.0
    %716 = vmatpush1.msra.mxu0 0.0
    %717 = vmatprep.subr.mxu0 0.0
    %718 = vmatpush1.msra.mxu0 0.0
    %719 = vmatprep.subr.mxu0 0.0
    %720 = vmatpush1.msra.mxu0 0.0
    %721 = vmatprep.subr.mxu0 0.0
    %722 = vmatpush1.msra.mxu0 0.0
    %723 = vmatprep.subr.mxu0 0.0
    %724 = vmatpush1.msra.mxu0 0.0
    %725 = vmatprep.subr.mxu0 0.0
    %726 = vmatpush1.msra.mxu0 0.0
    %727 = vmatprep.subr.mxu0 0.0
    %728 = vmatpush1.msra.mxu0 0.0
    %729 = vmatprep.subr.mxu0 0.0
    %730 = vmatpush1.msra.mxu0 0.0
    %731 = vmatprep.subr.mxu0 0.0
    %732 = vmatpush1.msra.mxu0 0.0
    %733 = vmatprep.subr.mxu0 0.0
    %734 = vmatpush1.msra.mxu0 0.0
    %735 = vmatprep.subr.mxu0 0.0
    %736 = vmatpush1.msra.mxu0 0.0
    %737 = vmatprep.subr.mxu0 0.0
    %738 = vmatpush1.msra.mxu0 0.0
    %739 = vmatprep.subr.mxu0 0.0
    %740 = vmatpush1.msra.mxu0 0.0
    %741 = vmatprep.subr.mxu0 0.0
    %742 = vmatpush1.msra.mxu0 0.0
    %743 = vmatprep.subr.mxu0 0.0
    %744 = vmatpush1.msra.mxu0 0.0
    %745 = vmatprep.subr.mxu0 0.0
    %746 = vmatpush1.msra.mxu0 0.0
    %747 = vmatprep.mubr.f32.mxu0 0.0
    %748 = vmatmul.mubr.f32.gmra.mrb[0].mxu0 %v669
    %v749 = vpop.f32.mrb[0].mxu0
    %v750 = vadd.f32 0.0, %v749
    %v751 = vpop.f32.mrb[0].mxu0
    %v752 = vadd.f32 0.0, %v751
    %753 = vdwg.mxu0
    %754 = vmatprep.subr.mxu0 %v681
    %755 = vmatpush1.msra.mxu0 %v678
    %756 = vmatprep.subr.mxu0 0.0
    %757 = vmatpush1.msra.mxu0 0.0
    %758 = vmatprep.subr.mxu0 0.0
    %759 = vmatpush1.msra.mxu0 0.0
    %760 = vmatprep.subr.mxu0 0.0
    %761 = vmatpush1.msra.mxu0 0.0
    %762 = vmatprep.subr.mxu0 0.0
    %763 = vmatpush1.msra.mxu0 0.0
    %764 = vmatprep.subr.mxu0 0.0
    %765 = vmatpush1.msra.mxu0 0.0
    %766 = vmatprep.subr.mxu0 0.0
    %767 = vmatpush1.msra.mxu0 0.0
    %768 = vmatprep.subr.mxu0 0.0
    %769 = vmatpush1.msra.mxu0 0.0
    %770 = vmatprep.subr.mxu0 0.0
    %771 = vmatpush1.msra.mxu0 0.0
    %772 = vmatprep.subr.mxu0 0.0
    %773 = vmatpush1.msra.mxu0 0.0
    %774 = vmatprep.subr.mxu0 0.0
    %775 = vmatpush1.msra.mxu0 0.0
    %776 = vmatprep.subr.mxu0 0.0
    %777 = vmatpush1.msra.mxu0 0.0
    %778 = vmatprep.subr.mxu0 0.0
    %779 = vmatpush1.msra.mxu0 0.0
    %780 = vmatprep.subr.mxu0 0.0
    %781 = vmatpush1.msra.mxu0 0.0
    %782 = vmatprep.subr.mxu0 0.0
    %783 = vmatpush1.msra.mxu0 0.0
    %784 = vmatprep.subr.mxu0 0.0
    %785 = vmatpush1.msra.mxu0 0.0
    %786 = vmatprep.subr.mxu0 0.0
    %787 = vmatpush1.msra.mxu0 0.0
    %788 = vmatprep.subr.mxu0 0.0
    %789 = vmatpush1.msra.mxu0 0.0
    %790 = vmatprep.subr.mxu0 0.0
    %791 = vmatpush1.msra.mxu0 0.0
    %792 = vmatprep.subr.mxu0 0.0
    %793 = vmatpush1.msra.mxu0 0.0
    %794 = vmatprep.subr.mxu0 0.0
    %795 = vmatpush1.msra.mxu0 0.0
    %796 = vmatprep.subr.mxu0 0.0
    %797 = vmatpush1.msra.mxu0 0.0
    %798 = vmatprep.subr.mxu0 0.0
    %799 = vmatpush1.msra.mxu0 0.0
    %800 = vmatprep.subr.mxu0 0.0
    %801 = vmatpush1.msra.mxu0 0.0
    %802 = vmatprep.subr.mxu0 0.0
    %803 = vmatpush1.msra.mxu0 0.0
    %804 = vmatprep.subr.mxu0 0.0
    %805 = vmatpush1.msra.mxu0 0.0
    %806 = vmatprep.subr.mxu0 0.0
    %807 = vmatpush1.msra.mxu0 0.0
    %808 = vmatprep.subr.mxu0 0.0
    %809 = vmatpush1.msra.mxu0 0.0
    %810 = vmatprep.subr.mxu0 0.0
    %811 = vmatpush1.msra.mxu0 0.0
    %812 = vmatprep.subr.mxu0 0.0
    %813 = vmatpush1.msra.mxu0 0.0
    %814 = vmatprep.subr.mxu0 0.0
    %815 = vmatpush1.msra.mxu0 0.0
    %816 = vmatprep.subr.mxu0 0.0
    %817 = vmatpush1.msra.mxu0 0.0
    %818 = vmatprep.mubr.f32.mxu0 0.0
    %819 = vmatmul.mubr.f32.gmra.mrb[0].mxu0 %v669
    %v820 = vpop.f32.mrb[0].mxu0
    %v821 = vadd.f32 0.0, %v820
    %v822 = vpop.f32.mrb[0].mxu0
    %v823 = vadd.f32 0.0, %v822
    %824 = vdwg.mxu0
    %v825 = vadd.f32 %v637, %v750
    %v826 = vadd.f32 %v638, %v752
    %v827 = vadd.f32 %v639, %v821
    %v828 = vadd.f32 %v640, %v823
    %s829 = scalar_lea.vmem %s1, 32
    %v830 = vld [vmem:[%s829] sm:$0xff]
    %v832 = vsel %vm137, %v830, 0
    %v834 = vsel %vm141, %v76, 0
    %v836 = vsel %vm141, %v80, 0
    %v838 = vsel %vm141, %v77, 0
    %v840 = vsel %vm141, %v81, 0
    %842 = vmatprep.subr.mxu0 %v836
    %843 = vmatpush1.msra.mxu0 %v834
    %844 = vmatprep.subr.mxu0 0.0
    %845 = vmatpush1.msra.mxu0 0.0
    %846 = vmatprep.subr.mxu0 0.0
    %847 = vmatpush1.msra.mxu0 0.0
    %848 = vmatprep.subr.mxu0 0.0
    %849 = vmatpush1.msra.mxu0 0.0
    %850 = vmatprep.subr.mxu0 0.0
    %851 = vmatpush1.msra.mxu0 0.0
    %852 = vmatprep.subr.mxu0 0.0
    %853 = vmatpush1.msra.mxu0 0.0
    %854 = vmatprep.subr.mxu0 0.0
    %855 = vmatpush1.msra.mxu0 0.0
    %856 = vmatprep.subr.mxu0 0.0
    %857 = vmatpush1.msra.mxu0 0.0
    %858 = vmatprep.subr.mxu0 0.0
    %859 = vmatpush1.msra.mxu0 0.0
    %860 = vmatprep.subr.mxu0 0.0
    %861 = vmatpush1.msra.mxu0 0.0
    %862 = vmatprep.subr.mxu0 0.0
    %863 = vmatpush1.msra.mxu0 0.0
    %864 = vmatprep.subr.mxu0 0.0
    %865 = vmatpush1.msra.mxu0 0.0
    %866 = vmatprep.subr.mxu0 0.0
    %867 = vmatpush1.msra.mxu0 0.0
    %868 = vmatprep.subr.mxu0 0.0
    %869 = vmatpush1.msra.mxu0 0.0
    %870 = vmatprep.subr.mxu0 0.0
    %871 = vmatpush1.msra.mxu0 0.0
    %872 = vmatprep.subr.mxu0 0.0
    %873 = vmatpush1.msra.mxu0 0.0
    %874 = vmatprep.subr.mxu0 0.0
    %875 = vmatpush1.msra.mxu0 0.0
    %876 = vmatprep.subr.mxu0 0.0
    %877 = vmatpush1.msra.mxu0 0.0
    %878 = vmatprep.subr.mxu0 0.0
    %879 = vmatpush1.msra.mxu0 0.0
    %880 = vmatprep.subr.mxu0 0.0
    %881 = vmatpush1.msra.mxu0 0.0
    %882 = vmatprep.subr.mxu0 0.0
    %883 = vmatpush1.msra.mxu0 0.0
    %884 = vmatprep.subr.mxu0 0.0
    %885 = vmatpush1.msra.mxu0 0.0
    %886 = vmatprep.subr.mxu0 0.0
    %887 = vmatpush1.msra.mxu0 0.0
    %888 = vmatprep.subr.mxu0 0.0
    %889 = vmatpush1.msra.mxu0 0.0
    %890 = vmatprep.subr.mxu0 0.0
    %891 = vmatpush1.msra.mxu0 0.0
    %892 = vmatprep.subr.mxu0 0.0
    %893 = vmatpush1.msra.mxu0 0.0
    %894 = vmatprep.subr.mxu0 0.0
    %895 = vmatpush1.msra.mxu0 0.0
    %896 = vmatprep.subr.mxu0 0.0
    %897 = vmatpush1.msra.mxu0 0.0
    %898 = vmatprep.subr.mxu0 0.0
    %899 = vmatpush1.msra.mxu0 0.0
    %900 = vmatprep.subr.mxu0 0.0
    %901 = vmatpush1.msra.mxu0 0.0
    %902 = vmatprep.subr.mxu0 0.0
    %903 = vmatpush1.msra.mxu0 0.0
    %904 = vmatprep.subr.mxu0 0.0
    %905 = vmatpush1.msra.mxu0 0.0
    %906 = vmatprep.mubr.f32.mxu0 0.0
    %907 = vmatmul.mubr.f32.gmra.mrb[0].mxu0 %v832
    %v908 = vpop.f32.mrb[0].mxu0
    %v909 = vadd.f32 0.0, %v908
    %v910 = vpop.f32.mrb[0].mxu0
    %v911 = vadd.f32 0.0, %v910
    %912 = vdwg.mxu0
    %913 = vmatprep.subr.mxu0 %v840
    %914 = vmatpush1.msra.mxu0 %v838
    %915 = vmatprep.subr.mxu0 0.0
    %916 = vmatpush1.msra.mxu0 0.0
    %917 = vmatprep.subr.mxu0 0.0
    %918 = vmatpush1.msra.mxu0 0.0
    %919 = vmatprep.subr.mxu0 0.0
    %920 = vmatpush1.msra.mxu0 0.0
    %921 = vmatprep.subr.mxu0 0.0
    %922 = vmatpush1.msra.mxu0 0.0
    %923 = vmatprep.subr.mxu0 0.0
    %924 = vmatpush1.msra.mxu0 0.0
    %925 = vmatprep.subr.mxu0 0.0
    %926 = vmatpush1.msra.mxu0 0.0
    %927 = vmatprep.subr.mxu0 0.0
    %928 = vmatpush1.msra.mxu0 0.0
    %929 = vmatprep.subr.mxu0 0.0
    %930 = vmatpush1.msra.mxu0 0.0
    %931 = vmatprep.subr.mxu0 0.0
    %932 = vmatpush1.msra.mxu0 0.0
    %933 = vmatprep.subr.mxu0 0.0
    %934 = vmatpush1.msra.mxu0 0.0
    %935 = vmatprep.subr.mxu0 0.0
    %936 = vmatpush1.msra.mxu0 0.0
    %937 = vmatprep.subr.mxu0 0.0
    %938 = vmatpush1.msra.mxu0 0.0
    %939 = vmatprep.subr.mxu0 0.0
    %940 = vmatpush1.msra.mxu0 0.0
    %941 = vmatprep.subr.mxu0 0.0
    %942 = vmatpush1.msra.mxu0 0.0
    %943 = vmatprep.subr.mxu0 0.0
    %944 = vmatpush1.msra.mxu0 0.0
    %945 = vmatprep.subr.mxu0 0.0
    %946 = vmatpush1.msra.mxu0 0.0
    %947 = vmatprep.subr.mxu0 0.0
    %948 = vmatpush1.msra.mxu0 0.0
    %949 = vmatprep.subr.mxu0 0.0
    %950 = vmatpush1.msra.mxu0 0.0
    %951 = vmatprep.subr.mxu0 0.0
    %952 = vmatpush1.msra.mxu0 0.0
    %953 = vmatprep.subr.mxu0 0.0
    %954 = vmatpush1.msra.mxu0 0.0
    %955 = vmatprep.subr.mxu0 0.0
    %956 = vmatpush1.msra.mxu0 0.0
    %957 = vmatprep.subr.mxu0 0.0
    %958 = vmatpush1.msra.mxu0 0.0
    %959 = vmatprep.subr.mxu0 0.0
    %960 = vmatpush1.msra.mxu0 0.0
    %961 = vmatprep.subr.mxu0 0.0
    %962 = vmatpush1.msra.mxu0 0.0
    %963 = vmatprep.subr.mxu0 0.0
    %964 = vmatpush1.msra.mxu0 0.0
    %965 = vmatprep.subr.mxu0 0.0
    %966 = vmatpush1.msra.mxu0 0.0
    %967 = vmatprep.subr.mxu0 0.0
    %968 = vmatpush1.msra.mxu0 0.0
    %969 = vmatprep.subr.mxu0 0.0
    %970 = vmatpush1.msra.mxu0 0.0
    %971 = vmatprep.subr.mxu0 0.0
    %972 = vmatpush1.msra.mxu0 0.0
    %973 = vmatprep.subr.mxu0 0.0
    %974 = vmatpush1.msra.mxu0 0.0
    %975 = vmatprep.subr.mxu0 0.0
    %976 = vmatpush1.msra.mxu0 0.0
    %977 = vmatprep.mubr.f32.mxu0 0.0
    %978 = vmatmul.mubr.f32.gmra.mrb[0].mxu0 %v832
    %v979 = vpop.f32.mrb[0].mxu0
    %v980 = vadd.f32 0.0, %v979
    %v981 = vpop.f32.mrb[0].mxu0
    %v982 = vadd.f32 0.0, %v981
    %983 = vdwg.mxu0
    %v984 = vadd.f32 %v825, %v909
    %v985 = vadd.f32 %v826, %v911
    %v986 = vadd.f32 %v827, %v980
    %v987 = vadd.f32 %v828, %v982
    %988 = vrot.lane.b32.xlu0 %v76, 127
    %v989 = vpop.permute.xlu0 %988
    %990 = vrot.lane.b32.xlu0 %v80, 127
    %v991 = vpop.permute.xlu0 %990
    %992 = vrot.lane.b32.xlu0 %v77, 127
    %v993 = vpop.permute.xlu0 %992
    %994 = vrot.lane.b32.xlu0 %v81, 127
    %v995 = vpop.permute.xlu0 %994
    %vm996 = vcmp.lt.s32.totalorder %v28, 127
    %v997 = vsel %vm996, %v993, %v995
    %v998 = vsel %vm996, %v991, %v993
    %v999 = vsel %vm996, %v989, %v991
    %v1000 = vsel %vm996, %v995, %v989
    %v1001 = vsel %vm56, 1, 0
    %v1002 = vsel %vm57, 1, 0
    %v1003 = vsel %vm58, 1, 0
    %v1004 = vsel %vm59, 1, 0
    %vm1005 = vcmp.eq.s32.totalorder %v1001, 1
    %vm1006 = vcmp.eq.s32.totalorder %v1002, 1
    %vm1007 = vcmp.eq.s32.totalorder %v1003, 1
    %vm1008 = vcmp.eq.s32.totalorder %v1004, 1
    %v1009 = vsel %vm1005, %v999, 0.0
    %v1010 = vsel %vm1006, %v998, 0.0
    %v1011 = vsel %vm1007, %v997, 0.0
    %v1012 = vsel %vm1008, %v1000, 0.0
    %s1013 = scalar_lea.vmem %s1, 40
    %v1014 = vld [vmem:[%s1013] sm:$0xff]
    %v1016 = vsel %vm137, %v1014, 0
    %v1019 = vsel %vm141, %v1009, 0
    %v1022 = vsel %vm141, %v1010, 0
    %v1025 = vsel %vm141, %v1011, 0
    %v1028 = vsel %vm141, %v1012, 0
    %1030 = vmatprep.subr.mxu0 %v1022
    %1031 = vmatpush1.msra.mxu0 %v1019
    %1032 = vmatprep.subr.mxu0 0.0
    %1033 = vmatpush1.msra.mxu0 0.0
    %1034 = vmatprep.subr.mxu0 0.0
    %1035 = vmatpush1.msra.mxu0 0.0
    %1036 = vmatprep.subr.mxu0 0.0
    %1037 = vmatpush1.msra.mxu0 0.0
    %1038 = vmatprep.subr.mxu0 0.0
    %1039 = vmatpush1.msra.mxu0 0.0
    %1040 = vmatprep.subr.mxu0 0.0
    %1041 = vmatpush1.msra.mxu0 0.0
    %1042 = vmatprep.subr.mxu0 0.0
    %1043 = vmatpush1.msra.mxu0 0.0
    %1044 = vmatprep.subr.mxu0 0.0
    %1045 = vmatpush1.msra.mxu0 0.0
    %1046 = vmatprep.subr.mxu0 0.0
    %1047 = vmatpush1.msra.mxu0 0.0
    %1048 = vmatprep.subr.mxu0 0.0
    %1049 = vmatpush1.msra.mxu0 0.0
    %1050 = vmatprep.subr.mxu0 0.0
    %1051 = vmatpush1.msra.mxu0 0.0
    %1052 = vmatprep.subr.mxu0 0.0
    %1053 = vmatpush1.msra.mxu0 0.0
    %1054 = vmatprep.subr.mxu0 0.0
    %1055 = vmatpush1.msra.mxu0 0.0
    %1056 = vmatprep.subr.mxu0 0.0
    %1057 = vmatpush1.msra.mxu0 0.0
    %1058 = vmatprep.subr.mxu0 0.0
    %1059 = vmatpush1.msra.mxu0 0.0
    %1060 = vmatprep.subr.mxu0 0.0
    %1061 = vmatpush1.msra.mxu0 0.0
    %1062 = vmatprep.subr.mxu0 0.0
    %1063 = vmatpush1.msra.mxu0 0.0
    %1064 = vmatprep.subr.mxu0 0.0
    %1065 = vmatpush1.msra.mxu0 0.0
    %1066 = vmatprep.subr.mxu0 0.0
    %1067 = vmatpush1.msra.mxu0 0.0
    %1068 = vmatprep.subr.mxu0 0.0
    %1069 = vmatpush1.msra.mxu0 0.0
    %1070 = vmatprep.subr.mxu0 0.0
    %1071 = vmatpush1.msra.mxu0 0.0
    %1072 = vmatprep.subr.mxu0 0.0
    %1073 = vmatpush1.msra.mxu0 0.0
    %1074 = vmatprep.subr.mxu0 0.0
    %1075 = vmatpush1.msra.mxu0 0.0
    %1076 = vmatprep.subr.mxu0 0.0
    %1077 = vmatpush1.msra.mxu0 0.0
    %1078 = vmatprep.subr.mxu0 0.0
    %1079 = vmatpush1.msra.mxu0 0.0
    %1080 = vmatprep.subr.mxu0 0.0
    %1081 = vmatpush1.msra.mxu0 0.0
    %1082 = vmatprep.subr.mxu0 0.0
    %1083 = vmatpush1.msra.mxu0 0.0
    %1084 = vmatprep.subr.mxu0 0.0
    %1085 = vmatpush1.msra.mxu0 0.0
    %1086 = vmatprep.subr.mxu0 0.0
    %1087 = vmatpush1.msra.mxu0 0.0
    %1088 = vmatprep.subr.mxu0 0.0
    %1089 = vmatpush1.msra.mxu0 0.0
    %1090 = vmatprep.subr.mxu0 0.0
    %1091 = vmatpush1.msra.mxu0 0.0
    %1092 = vmatprep.subr.mxu0 0.0
    %1093 = vmatpush1.msra.mxu0 0.0
    %1094 = vmatprep.mubr.f32.mxu0 0.0
    %1095 = vmatmul.mubr.f32.gmra.mrb[0].mxu0 %v1016
    %v1096 = vpop.f32.mrb[0].mxu0
    %v1097 = vadd.f32 0.0, %v1096
    %v1098 = vpop.f32.mrb[0].mxu0
    %v1099 = vadd.f32 0.0, %v1098
    %1100 = vdwg.mxu0
    %1101 = vmatprep.subr.mxu0 %v1028
    %1102 = vmatpush1.msra.mxu0 %v1025
    %1103 = vmatprep.subr.mxu0 0.0
    %1104 = vmatpush1.msra.mxu0 0.0
    %1105 = vmatprep.subr.mxu0 0.0
    %1106 = vmatpush1.msra.mxu0 0.0
    %1107 = vmatprep.subr.mxu0 0.0
    %1108 = vmatpush1.msra.mxu0 0.0
    %1109 = vmatprep.subr.mxu0 0.0
    %1110 = vmatpush1.msra.mxu0 0.0
    %1111 = vmatprep.subr.mxu0 0.0
    %1112 = vmatpush1.msra.mxu0 0.0
    %1113 = vmatprep.subr.mxu0 0.0
    %1114 = vmatpush1.msra.mxu0 0.0
    %1115 = vmatprep.subr.mxu0 0.0
    %1116 = vmatpush1.msra.mxu0 0.0
    %1117 = vmatprep.subr.mxu0 0.0
    %1118 = vmatpush1.msra.mxu0 0.0
    %1119 = vmatprep.subr.mxu0 0.0
    %1120 = vmatpush1.msra.mxu0 0.0
    %1121 = vmatprep.subr.mxu0 0.0
    %1122 = vmatpush1.msra.mxu0 0.0
    %1123 = vmatprep.subr.mxu0 0.0
    %1124 = vmatpush1.msra.mxu0 0.0
    %1125 = vmatprep.subr.mxu0 0.0
    %1126 = vmatpush1.msra.mxu0 0.0
    %1127 = vmatprep.subr.mxu0 0.0
    %1128 = vmatpush1.msra.mxu0 0.0
    %1129 = vmatprep.subr.mxu0 0.0
    %1130 = vmatpush1.msra.mxu0 0.0
    %1131 = vmatprep.subr.mxu0 0.0
    %1132 = vmatpush1.msra.mxu0 0.0
    %1133 = vmatprep.subr.mxu0 0.0
    %1134 = vmatpush1.msra.mxu0 0.0
    %1135 = vmatprep.subr.mxu0 0.0
    %1136 = vmatpush1.msra.mxu0 0.0
    %1137 = vmatprep.subr.mxu0 0.0
    %1138 = vmatpush1.msra.mxu0 0.0
    %1139 = vmatprep.subr.mxu0 0.0
    %1140 = vmatpush1.msra.mxu0 0.0
    %1141 = vmatprep.subr.mxu0 0.0
    %1142 = vmatpush1.msra.mxu0 0.0
    %1143 = vmatprep.subr.mxu0 0.0
    %1144 = vmatpush1.msra.mxu0 0.0
    %1145 = vmatprep.subr.mxu0 0.0
    %1146 = vmatpush1.msra.mxu0 0.0
    %1147 = vmatprep.subr.mxu0 0.0
    %1148 = vmatpush1.msra.mxu0 0.0
    %1149 = vmatprep.subr.mxu0 0.0
    %1150 = vmatpush1.msra.mxu0 0.0
    %1151 = vmatprep.subr.mxu0 0.0
    %1152 = vmatpush1.msra.mxu0 0.0
    %1153 = vmatprep.subr.mxu0 0.0
    %1154 = vmatpush1.msra.mxu0 0.0
    %1155 = vmatprep.subr.mxu0 0.0
    %1156 = vmatpush1.msra.mxu0 0.0
    %1157 = vmatprep.subr.mxu0 0.0
    %1158 = vmatpush1.msra.mxu0 0.0
    %1159 = vmatprep.subr.mxu0 0.0
    %1160 = vmatpush1.msra.mxu0 0.0
    %1161 = vmatprep.subr.mxu0 0.0
    %1162 = vmatpush1.msra.mxu0 0.0
    %1163 = vmatprep.subr.mxu0 0.0
    %1164 = vmatpush1.msra.mxu0 0.0
    %1165 = vmatprep.mubr.f32.mxu0 0.0
    %1166 = vmatmul.mubr.f32.gmra.mrb[0].mxu0 %v1016
    %v1167 = vpop.f32.mrb[0].mxu0
    %v1168 = vadd.f32 0.0, %v1167
    %v1169 = vpop.f32.mrb[0].mxu0
    %v1170 = vadd.f32 0.0, %v1169
    %1171 = vdwg.mxu0
    %v1172 = vadd.f32 %v984, %v1097
    %v1173 = vadd.f32 %v985, %v1099
    %v1174 = vadd.f32 %v986, %v1168
    %v1175 = vadd.f32 %v987, %v1170
    %1176 = vrot.lane.b32.xlu0 %v76, 113
    %v1177 = vpop.permute.xlu0 %1176
    %1178 = vrot.lane.b32.xlu0 %v80, 113
    %v1179 = vpop.permute.xlu0 %1178
    %1180 = vrot.lane.b32.xlu0 %v77, 113
    %v1181 = vpop.permute.xlu0 %1180
    %1182 = vrot.lane.b32.xlu0 %v81, 113
    %v1183 = vpop.permute.xlu0 %1182
    %vm1184 = vcmp.lt.s32.totalorder %v28, 113
    %v1185 = vsel %vm1184, %v1181, %v1183
    %v1186 = vsel %vm1184, %v1179, %v1181
    %v1187 = vsel %vm1184, %v1177, %v1179
    %v1188 = vsel %vm1184, %v1183, %v1177
    %v1189 = vsel %vm68, 1, 0
    %v1190 = vsel %vm69, 1, 0
    %v1191 = vsel %vm70, 1, 0
    %v1192 = vsel %vm71, 1, 0
    %vm1193 = vcmp.eq.s32.totalorder %v1189, 1
    %vm1194 = vcmp.eq.s32.totalorder %v1190, 1
    %vm1195 = vcmp.eq.s32.totalorder %v1191, 1
    %vm1196 = vcmp.eq.s32.totalorder %v1192, 1
    %v1197 = vsel %vm1193, %v1187, 0.0
    %v1198 = vsel %vm1194, %v1186, 0.0
    %v1199 = vsel %vm1195, %v1185, 0.0
    %v1200 = vsel %vm1196, %v1188, 0.0
    %s1201 = scalar_lea.vmem %s1, 48
    %v1202 = vld [vmem:[%s1201] sm:$0xff]
    %v1204 = vsel %vm137, %v1202, 0
    %v1207 = vsel %vm141, %v1197, 0
    %v1210 = vsel %vm141, %v1198, 0
    %v1213 = vsel %vm141, %v1199, 0
    %v1216 = vsel %vm141, %v1200, 0
    %1218 = vmatprep.subr.mxu0 %v1210
    %1219 = vmatpush1.msra.mxu0 %v1207
    %1220 = vmatprep.subr.mxu0 0.0
    %1221 = vmatpush1.msra.mxu0 0.0
    %1222 = vmatprep.subr.mxu0 0.0
    %1223 = vmatpush1.msra.mxu0 0.0
    %1224 = vmatprep.subr.mxu0 0.0
    %1225 = vmatpush1.msra.mxu0 0.0
    %1226 = vmatprep.subr.mxu0 0.0
    %1227 = vmatpush1.msra.mxu0 0.0
    %1228 = vmatprep.subr.mxu0 0.0
    %1229 = vmatpush1.msra.mxu0 0.0
    %1230 = vmatprep.subr.mxu0 0.0
    %1231 = vmatpush1.msra.mxu0 0.0
    %1232 = vmatprep.subr.mxu0 0.0
    %1233 = vmatpush1.msra.mxu0 0.0
    %1234 = vmatprep.subr.mxu0 0.0
    %1235 = vmatpush1.msra.mxu0 0.0
    %1236 = vmatprep.subr.mxu0 0.0
    %1237 = vmatpush1.msra.mxu0 0.0
    %1238 = vmatprep.subr.mxu0 0.0
    %1239 = vmatpush1.msra.mxu0 0.0
    %1240 = vmatprep.subr.mxu0 0.0
    %1241 = vmatpush1.msra.mxu0 0.0
    %1242 = vmatprep.subr.mxu0 0.0
    %1243 = vmatpush1.msra.mxu0 0.0
    %1244 = vmatprep.subr.mxu0 0.0
    %1245 = vmatpush1.msra.mxu0 0.0
    %1246 = vmatprep.subr.mxu0 0.0
    %1247 = vmatpush1.msra.mxu0 0.0
    %1248 = vmatprep.subr.mxu0 0.0
    %1249 = vmatpush1.msra.mxu0 0.0
    %1250 = vmatprep.subr.mxu0 0.0
    %1251 = vmatpush1.msra.mxu0 0.0
    %1252 = vmatprep.subr.mxu0 0.0
    %1253 = vmatpush1.msra.mxu0 0.0
    %1254 = vmatprep.subr.mxu0 0.0
    %1255 = vmatpush1.msra.mxu0 0.0
    %1256 = vmatprep.subr.mxu0 0.0
    %1257 = vmatpush1.msra.mxu0 0.0
    %1258 = vmatprep.subr.mxu0 0.0
    %1259 = vmatpush1.msra.mxu0 0.0
    %1260 = vmatprep.subr.mxu0 0.0
    %1261 = vmatpush1.msra.mxu0 0.0
    %1262 = vmatprep.subr.mxu0 0.0
    %1263 = vmatpush1.msra.mxu0 0.0
    %1264 = vmatprep.subr.mxu0 0.0
    %1265 = vmatpush1.msra.mxu0 0.0
    %1266 = vmatprep.subr.mxu0 0.0
    %1267 = vmatpush1.msra.mxu0 0.0
    %1268 = vmatprep.subr.mxu0 0.0
    %1269 = vmatpush1.msra.mxu0 0.0
    %1270 = vmatprep.subr.mxu0 0.0
    %1271 = vmatpush1.msra.mxu0 0.0
    %1272 = vmatprep.subr.mxu0 0.0
    %1273 = vmatpush1.msra.mxu0 0.0
    %1274 = vmatprep.subr.mxu0 0.0
    %1275 = vmatpush1.msra.mxu0 0.0
    %1276 = vmatprep.subr.mxu0 0.0
    %1277 = vmatpush1.msra.mxu0 0.0
    %1278 = vmatprep.subr.mxu0 0.0
    %1279 = vmatpush1.msra.mxu0 0.0
    %1280 = vmatprep.subr.mxu0 0.0
    %1281 = vmatpush1.msra.mxu0 0.0
    %1282 = vmatprep.mubr.f32.mxu0 0.0
    %1283 = vmatmul.mubr.f32.gmra.mrb[0].mxu0 %v1204
    %v1284 = vpop.f32.mrb[0].mxu0
    %v1285 = vadd.f32 0.0, %v1284
    %v1286 = vpop.f32.mrb[0].mxu0
    %v1287 = vadd.f32 0.0, %v1286
    %1288 = vdwg.mxu0
    %1289 = vmatprep.subr.mxu0 %v1216
    %1290 = vmatpush1.msra.mxu0 %v1213
    %1291 = vmatprep.subr.mxu0 0.0
    %1292 = vmatpush1.msra.mxu0 0.0
    %1293 = vmatprep.subr.mxu0 0.0
    %1294 = vmatpush1.msra.mxu0 0.0
    %1295 = vmatprep.subr.mxu0 0.0
    %1296 = vmatpush1.msra.mxu0 0.0
    %1297 = vmatprep.subr.mxu0 0.0
    %1298 = vmatpush1.msra.mxu0 0.0
    %1299 = vmatprep.subr.mxu0 0.0
    %1300 = vmatpush1.msra.mxu0 0.0
    %1301 = vmatprep.subr.mxu0 0.0
    %1302 = vmatpush1.msra.mxu0 0.0
    %1303 = vmatprep.subr.mxu0 0.0
    %1304 = vmatpush1.msra.mxu0 0.0
    %1305 = vmatprep.subr.mxu0 0.0
    %1306 = vmatpush1.msra.mxu0 0.0
    %1307 = vmatprep.subr.mxu0 0.0
    %1308 = vmatpush1.msra.mxu0 0.0
    %1309 = vmatprep.subr.mxu0 0.0
    %1310 = vmatpush1.msra.mxu0 0.0
    %1311 = vmatprep.subr.mxu0 0.0
    %1312 = vmatpush1.msra.mxu0 0.0
    %1313 = vmatprep.subr.mxu0 0.0
    %1314 = vmatpush1.msra.mxu0 0.0
    %1315 = vmatprep.subr.mxu0 0.0
    %1316 = vmatpush1.msra.mxu0 0.0
    %1317 = vmatprep.subr.mxu0 0.0
    %1318 = vmatpush1.msra.mxu0 0.0
    %1319 = vmatprep.subr.mxu0 0.0
    %1320 = vmatpush1.msra.mxu0 0.0
    %1321 = vmatprep.subr.mxu0 0.0
    %1322 = vmatpush1.msra.mxu0 0.0
    %1323 = vmatprep.subr.mxu0 0.0
    %1324 = vmatpush1.msra.mxu0 0.0
    %1325 = vmatprep.subr.mxu0 0.0
    %1326 = vmatpush1.msra.mxu0 0.0
    %1327 = vmatprep.subr.mxu0 0.0
    %1328 = vmatpush1.msra.mxu0 0.0
    %1329 = vmatprep.subr.mxu0 0.0
    %1330 = vmatpush1.msra.mxu0 0.0
    %1331 = vmatprep.subr.mxu0 0.0
    %1332 = vmatpush1.msra.mxu0 0.0
    %1333 = vmatprep.subr.mxu0 0.0
    %1334 = vmatpush1.msra.mxu0 0.0
    %1335 = vmatprep.subr.mxu0 0.0
    %1336 = vmatpush1.msra.mxu0 0.0
    %1337 = vmatprep.subr.mxu0 0.0
    %1338 = vmatpush1.msra.mxu0 0.0
    %1339 = vmatprep.subr.mxu0 0.0
    %1340 = vmatpush1.msra.mxu0 0.0
    %1341 = vmatprep.subr.mxu0 0.0
    %1342 = vmatpush1.msra.mxu0 0.0
    %1343 = vmatprep.subr.mxu0 0.0
    %1344 = vmatpush1.msra.mxu0 0.0
    %1345 = vmatprep.subr.mxu0 0.0
    %1346 = vmatpush1.msra.mxu0 0.0
    %1347 = vmatprep.subr.mxu0 0.0
    %1348 = vmatpush1.msra.mxu0 0.0
    %1349 = vmatprep.subr.mxu0 0.0
    %1350 = vmatpush1.msra.mxu0 0.0
    %1351 = vmatprep.subr.mxu0 0.0
    %1352 = vmatpush1.msra.mxu0 0.0
    %1353 = vmatprep.mubr.f32.mxu0 0.0
    %1354 = vmatmul.mubr.f32.gmra.mrb[0].mxu0 %v1204
    %v1355 = vpop.f32.mrb[0].mxu0
    %v1356 = vadd.f32 0.0, %v1355
    %v1357 = vpop.f32.mrb[0].mxu0
    %v1358 = vadd.f32 0.0, %v1357
    %1359 = vdwg.mxu0
    %v1360 = vadd.f32 %v1172, %v1285
    %v1361 = vadd.f32 %v1173, %v1287
    %v1362 = vadd.f32 %v1174, %v1356
    %v1363 = vadd.f32 %v1175, %v1358
    %1364 = vrot.lane.b32.xlu0 %v76, 112
    %v1365 = vpop.permute.xlu0 %1364
    %1366 = vrot.lane.b32.xlu0 %v80, 112
    %v1367 = vpop.permute.xlu0 %1366
    %1368 = vrot.lane.b32.xlu0 %v77, 112
    %v1369 = vpop.permute.xlu0 %1368
    %1370 = vrot.lane.b32.xlu0 %v81, 112
    %v1371 = vpop.permute.xlu0 %1370
    %vm1372 = vcmp.lt.s32.totalorder %v28, 112
    %v1373 = vsel %vm1372, %v1369, %v1371
    %v1374 = vsel %vm1372, %v1367, %v1369
    %v1375 = vsel %vm1372, %v1365, %v1367
    %v1376 = vsel %vm1372, %v1371, %v1365
    %v1377 = vsel %vm64, 1, 0
    %v1378 = vsel %vm65, 1, 0
    %v1379 = vsel %vm66, 1, 0
    %v1380 = vsel %vm67, 1, 0
    %vm1381 = vcmp.eq.s32.totalorder %v1377, 1
    %vm1382 = vcmp.eq.s32.totalorder %v1378, 1
    %vm1383 = vcmp.eq.s32.totalorder %v1379, 1
    %vm1384 = vcmp.eq.s32.totalorder %v1380, 1
    %v1385 = vsel %vm1381, %v1375, 0.0
    %v1386 = vsel %vm1382, %v1374, 0.0
    %v1387 = vsel %vm1383, %v1373, 0.0
    %v1388 = vsel %vm1384, %v1376, 0.0
    %s1389 = scalar_lea.vmem %s1, 56
    %v1390 = vld [vmem:[%s1389] sm:$0xff]
    %v1392 = vsel %vm137, %v1390, 0
    %v1395 = vsel %vm141, %v1385, 0
    %v1398 = vsel %vm141, %v1386, 0
    %v1401 = vsel %vm141, %v1387, 0
    %v1404 = vsel %vm141, %v1388, 0
    %1406 = vmatprep.subr.mxu0 %v1398
    %1407 = vmatpush1.msra.mxu0 %v1395
    %1408 = vmatprep.subr.mxu0 0.0
    %1409 = vmatpush1.msra.mxu0 0.0
    %1410 = vmatprep.subr.mxu0 0.0
    %1411 = vmatpush1.msra.mxu0 0.0
    %1412 = vmatprep.subr.mxu0 0.0
    %1413 = vmatpush1.msra.mxu0 0.0
    %1414 = vmatprep.subr.mxu0 0.0
    %1415 = vmatpush1.msra.mxu0 0.0
    %1416 = vmatprep.subr.mxu0 0.0
    %1417 = vmatpush1.msra.mxu0 0.0
    %1418 = vmatprep.subr.mxu0 0.0
    %1419 = vmatpush1.msra.mxu0 0.0
    %1420 = vmatprep.subr.mxu0 0.0
    %1421 = vmatpush1.msra.mxu0 0.0
    %1422 = vmatprep.subr.mxu0 0.0
    %1423 = vmatpush1.msra.mxu0 0.0
    %1424 = vmatprep.subr.mxu0 0.0
    %1425 = vmatpush1.msra.mxu0 0.0
    %1426 = vmatprep.subr.mxu0 0.0
    %1427 = vmatpush1.msra.mxu0 0.0
    %1428 = vmatprep.subr.mxu0 0.0
    %1429 = vmatpush1.msra.mxu0 0.0
    %1430 = vmatprep.subr.mxu0 0.0
    %1431 = vmatpush1.msra.mxu0 0.0
    %1432 = vmatprep.subr.mxu0 0.0
    %1433 = vmatpush1.msra.mxu0 0.0
    %1434 = vmatprep.subr.mxu0 0.0
    %1435 = vmatpush1.msra.mxu0 0.0
    %1436 = vmatprep.subr.mxu0 0.0
    %1437 = vmatpush1.msra.mxu0 0.0
    %1438 = vmatprep.subr.mxu0 0.0
    %1439 = vmatpush1.msra.mxu0 0.0
    %1440 = vmatprep.subr.mxu0 0.0
    %1441 = vmatpush1.msra.mxu0 0.0
    %1442 = vmatprep.subr.mxu0 0.0
    %1443 = vmatpush1.msra.mxu0 0.0
    %1444 = vmatprep.subr.mxu0 0.0
    %1445 = vmatpush1.msra.mxu0 0.0
    %1446 = vmatprep.subr.mxu0 0.0
    %1447 = vmatpush1.msra.mxu0 0.0
    %1448 = vmatprep.subr.mxu0 0.0
    %1449 = vmatpush1.msra.mxu0 0.0
    %1450 = vmatprep.subr.mxu0 0.0
    %1451 = vmatpush1.msra.mxu0 0.0
    %1452 = vmatprep.subr.mxu0 0.0
    %1453 = vmatpush1.msra.mxu0 0.0
    %1454 = vmatprep.subr.mxu0 0.0
    %1455 = vmatpush1.msra.mxu0 0.0
    %1456 = vmatprep.subr.mxu0 0.0
    %1457 = vmatpush1.msra.mxu0 0.0
    %1458 = vmatprep.subr.mxu0 0.0
    %1459 = vmatpush1.msra.mxu0 0.0
    %1460 = vmatprep.subr.mxu0 0.0
    %1461 = vmatpush1.msra.mxu0 0.0
    %1462 = vmatprep.subr.mxu0 0.0
    %1463 = vmatpush1.msra.mxu0 0.0
    %1464 = vmatprep.subr.mxu0 0.0
    %1465 = vmatpush1.msra.mxu0 0.0
    %1466 = vmatprep.subr.mxu0 0.0
    %1467 = vmatpush1.msra.mxu0 0.0
    %1468 = vmatprep.subr.mxu0 0.0
    %1469 = vmatpush1.msra.mxu0 0.0
    %1470 = vmatprep.mubr.f32.mxu0 0.0
    %1471 = vmatmul.mubr.f32.gmra.mrb[0].mxu0 %v1392
    %v1472 = vpop.f32.mrb[0].mxu0
    %v1473 = vadd.f32 0.0, %v1472
    %v1474 = vpop.f32.mrb[0].mxu0
    %v1475 = vadd.f32 0.0, %v1474
    %1476 = vdwg.mxu0
    %1477 = vmatprep.subr.mxu0 %v1404
    %1478 = vmatpush1.msra.mxu0 %v1401
    %1479 = vmatprep.subr.mxu0 0.0
    %1480 = vmatpush1.msra.mxu0 0.0
    %1481 = vmatprep.subr.mxu0 0.0
    %1482 = vmatpush1.msra.mxu0 0.0
    %1483 = vmatprep.subr.mxu0 0.0
    %1484 = vmatpush1.msra.mxu0 0.0
    %1485 = vmatprep.subr.mxu0 0.0
    %1486 = vmatpush1.msra.mxu0 0.0
    %1487 = vmatprep.subr.mxu0 0.0
    %1488 = vmatpush1.msra.mxu0 0.0
    %1489 = vmatprep.subr.mxu0 0.0
    %1490 = vmatpush1.msra.mxu0 0.0
    %1491 = vmatprep.subr.mxu0 0.0
    %1492 = vmatpush1.msra.mxu0 0.0
    %1493 = vmatprep.subr.mxu0 0.0
    %1494 = vmatpush1.msra.mxu0 0.0
    %1495 = vmatprep.subr.mxu0 0.0
    %1496 = vmatpush1.msra.mxu0 0.0
    %1497 = vmatprep.subr.mxu0 0.0
    %1498 = vmatpush1.msra.mxu0 0.0
    %1499 = vmatprep.subr.mxu0 0.0
    %1500 = vmatpush1.msra.mxu0 0.0
    %1501 = vmatprep.subr.mxu0 0.0
    %1502 = vmatpush1.msra.mxu0 0.0
    %1503 = vmatprep.subr.mxu0 0.0
    %1504 = vmatpush1.msra.mxu0 0.0
    %1505 = vmatprep.subr.mxu0 0.0
    %1506 = vmatpush1.msra.mxu0 0.0
    %1507 = vmatprep.subr.mxu0 0.0
    %1508 = vmatpush1.msra.mxu0 0.0
    %1509 = vmatprep.subr.mxu0 0.0
    %1510 = vmatpush1.msra.mxu0 0.0
    %1511 = vmatprep.subr.mxu0 0.0
    %1512 = vmatpush1.msra.mxu0 0.0
    %1513 = vmatprep.subr.mxu0 0.0
    %1514 = vmatpush1.msra.mxu0 0.0
    %1515 = vmatprep.subr.mxu0 0.0
    %1516 = vmatpush1.msra.mxu0 0.0
    %1517 = vmatprep.subr.mxu0 0.0
    %1518 = vmatpush1.msra.mxu0 0.0
    %1519 = vmatprep.subr.mxu0 0.0
    %1520 = vmatpush1.msra.mxu0 0.0
    %1521 = vmatprep.subr.mxu0 0.0
    %1522 = vmatpush1.msra.mxu0 0.0
    %1523 = vmatprep.subr.mxu0 0.0
    %1524 = vmatpush1.msra.mxu0 0.0
    %1525 = vmatprep.subr.mxu0 0.0
    %1526 = vmatpush1.msra.mxu0 0.0
    %1527 = vmatprep.subr.mxu0 0.0
    %1528 = vmatpush1.msra.mxu0 0.0
    %1529 = vmatprep.subr.mxu0 0.0
    %1530 = vmatpush1.msra.mxu0 0.0
    %1531 = vmatprep.subr.mxu0 0.0
    %1532 = vmatpush1.msra.mxu0 0.0
    %1533 = vmatprep.subr.mxu0 0.0
    %1534 = vmatpush1.msra.mxu0 0.0
    %1535 = vmatprep.subr.mxu0 0.0
    %1536 = vmatpush1.msra.mxu0 0.0
    %1537 = vmatprep.subr.mxu0 0.0
    %1538 = vmatpush1.msra.mxu0 0.0
    %1539 = vmatprep.subr.mxu0 0.0
    %1540 = vmatpush1.msra.mxu0 0.0
    %1541 = vmatprep.mubr.f32.mxu0 0.0
    %1542 = vmatmul.mubr.f32.gmra.mrb[0].mxu0 %v1392
    %v1543 = vpop.f32.mrb[0].mxu0
    %v1544 = vadd.f32 0.0, %v1543
    %v1545 = vpop.f32.mrb[0].mxu0
    %v1546 = vadd.f32 0.0, %v1545
    %1547 = vdwg.mxu0
    %v1548 = vadd.f32 %v1360, %v1473
    %v1549 = vadd.f32 %v1361, %v1475
    %v1550 = vadd.f32 %v1362, %v1544
    %v1551 = vadd.f32 %v1363, %v1546
    %1552 = vrot.lane.b32.xlu0 %v76, 111
    %v1553 = vpop.permute.xlu0 %1552
    %1554 = vrot.lane.b32.xlu0 %v80, 111
    %v1555 = vpop.permute.xlu0 %1554
    %1556 = vrot.lane.b32.xlu0 %v77, 111
    %v1557 = vpop.permute.xlu0 %1556
    %1558 = vrot.lane.b32.xlu0 %v81, 111
    %v1559 = vpop.permute.xlu0 %1558
    %vm1560 = vcmp.lt.s32.totalorder %v28, 111
    %v1561 = vsel %vm1560, %v1557, %v1559
    %v1562 = vsel %vm1560, %v1555, %v1557
    %v1563 = vsel %vm1560, %v1553, %v1555
    %v1564 = vsel %vm1560, %v1559, %v1553
    %v1565 = vsel %vm72, 1, 0
    %v1566 = vsel %vm73, 1, 0
    %v1567 = vsel %vm74, 1, 0
    %v1568 = vsel %vm75, 1, 0
    %vm1569 = vcmp.eq.s32.totalorder %v1565, 1
    %vm1570 = vcmp.eq.s32.totalorder %v1566, 1
    %vm1571 = vcmp.eq.s32.totalorder %v1567, 1
    %vm1572 = vcmp.eq.s32.totalorder %v1568, 1
    %v1573 = vsel %vm1569, %v1563, 0.0
    %v1574 = vsel %vm1570, %v1562, 0.0
    %v1575 = vsel %vm1571, %v1561, 0.0
    %v1576 = vsel %vm1572, %v1564, 0.0
    %s1577 = scalar_lea.vmem %s1, 64
    %v1578 = vld [vmem:[%s1577] sm:$0xff]
    %v1580 = vsel %vm137, %v1578, 0
    %v1583 = vsel %vm141, %v1573, 0
    %v1586 = vsel %vm141, %v1574, 0
    %v1589 = vsel %vm141, %v1575, 0
    %v1592 = vsel %vm141, %v1576, 0
    %1594 = vmatprep.subr.mxu0 %v1586
    %1595 = vmatpush1.msra.mxu0 %v1583
    %1596 = vmatprep.subr.mxu0 0.0
    %1597 = vmatpush1.msra.mxu0 0.0
    %1598 = vmatprep.subr.mxu0 0.0
    %1599 = vmatpush1.msra.mxu0 0.0
    %1600 = vmatprep.subr.mxu0 0.0
    %1601 = vmatpush1.msra.mxu0 0.0
    %1602 = vmatprep.subr.mxu0 0.0
    %1603 = vmatpush1.msra.mxu0 0.0
    %1604 = vmatprep.subr.mxu0 0.0
    %1605 = vmatpush1.msra.mxu0 0.0
    %1606 = vmatprep.subr.mxu0 0.0
    %1607 = vmatpush1.msra.mxu0 0.0
    %1608 = vmatprep.subr.mxu0 0.0
    %1609 = vmatpush1.msra.mxu0 0.0
    %1610 = vmatprep.subr.mxu0 0.0
    %1611 = vmatpush1.msra.mxu0 0.0
    %1612 = vmatprep.subr.mxu0 0.0
    %1613 = vmatpush1.msra.mxu0 0.0
    %1614 = vmatprep.subr.mxu0 0.0
    %1615 = vmatpush1.msra.mxu0 0.0
    %1616 = vmatprep.subr.mxu0 0.0
    %1617 = vmatpush1.msra.mxu0 0.0
    %1618 = vmatprep.subr.mxu0 0.0
    %1619 = vmatpush1.msra.mxu0 0.0
    %1620 = vmatprep.subr.mxu0 0.0
    %1621 = vmatpush1.msra.mxu0 0.0
    %1622 = vmatprep.subr.mxu0 0.0
    %1623 = vmatpush1.msra.mxu0 0.0
    %1624 = vmatprep.subr.mxu0 0.0
    %1625 = vmatpush1.msra.mxu0 0.0
    %1626 = vmatprep.subr.mxu0 0.0
    %1627 = vmatpush1.msra.mxu0 0.0
    %1628 = vmatprep.subr.mxu0 0.0
    %1629 = vmatpush1.msra.mxu0 0.0
    %1630 = vmatprep.subr.mxu0 0.0
    %1631 = vmatpush1.msra.mxu0 0.0
    %1632 = vmatprep.subr.mxu0 0.0
    %1633 = vmatpush1.msra.mxu0 0.0
    %1634 = vmatprep.subr.mxu0 0.0
    %1635 = vmatpush1.msra.mxu0 0.0
    %1636 = vmatprep.subr.mxu0 0.0
    %1637 = vmatpush1.msra.mxu0 0.0
    %1638 = vmatprep.subr.mxu0 0.0
    %1639 = vmatpush1.msra.mxu0 0.0
    %1640 = vmatprep.subr.mxu0 0.0
    %1641 = vmatpush1.msra.mxu0 0.0
    %1642 = vmatprep.subr.mxu0 0.0
    %1643 = vmatpush1.msra.mxu0 0.0
    %1644 = vmatprep.subr.mxu0 0.0
    %1645 = vmatpush1.msra.mxu0 0.0
    %1646 = vmatprep.subr.mxu0 0.0
    %1647 = vmatpush1.msra.mxu0 0.0
    %1648 = vmatprep.subr.mxu0 0.0
    %1649 = vmatpush1.msra.mxu0 0.0
    %1650 = vmatprep.subr.mxu0 0.0
    %1651 = vmatpush1.msra.mxu0 0.0
    %1652 = vmatprep.subr.mxu0 0.0
    %1653 = vmatpush1.msra.mxu0 0.0
    %1654 = vmatprep.subr.mxu0 0.0
    %1655 = vmatpush1.msra.mxu0 0.0
    %1656 = vmatprep.subr.mxu0 0.0
    %1657 = vmatpush1.msra.mxu0 0.0
    %1658 = vmatprep.mubr.f32.mxu0 0.0
    %1659 = vmatmul.mubr.f32.gmra.mrb[0].mxu0 %v1580
    %v1660 = vpop.f32.mrb[0].mxu0
    %v1661 = vadd.f32 0.0, %v1660
    %v1662 = vpop.f32.mrb[0].mxu0
    %v1663 = vadd.f32 0.0, %v1662
    %1664 = vdwg.mxu0
    %1665 = vmatprep.subr.mxu0 %v1592
    %1666 = vmatpush1.msra.mxu0 %v1589
    %1667 = vmatprep.subr.mxu0 0.0
    %1668 = vmatpush1.msra.mxu0 0.0
    %1669 = vmatprep.subr.mxu0 0.0
    %1670 = vmatpush1.msra.mxu0 0.0
    %1671 = vmatprep.subr.mxu0 0.0
    %1672 = vmatpush1.msra.mxu0 0.0
    %1673 = vmatprep.subr.mxu0 0.0
    %1674 = vmatpush1.msra.mxu0 0.0
    %1675 = vmatprep.subr.mxu0 0.0
    %1676 = vmatpush1.msra.mxu0 0.0
    %1677 = vmatprep.subr.mxu0 0.0
    %1678 = vmatpush1.msra.mxu0 0.0
    %1679 = vmatprep.subr.mxu0 0.0
    %1680 = vmatpush1.msra.mxu0 0.0
    %1681 = vmatprep.subr.mxu0 0.0
    %1682 = vmatpush1.msra.mxu0 0.0
    %1683 = vmatprep.subr.mxu0 0.0
    %1684 = vmatpush1.msra.mxu0 0.0
    %1685 = vmatprep.subr.mxu0 0.0
    %1686 = vmatpush1.msra.mxu0 0.0
    %1687 = vmatprep.subr.mxu0 0.0
    %1688 = vmatpush1.msra.mxu0 0.0
    %1689 = vmatprep.subr.mxu0 0.0
    %1690 = vmatpush1.msra.mxu0 0.0
    %1691 = vmatprep.subr.mxu0 0.0
    %1692 = vmatpush1.msra.mxu0 0.0
    %1693 = vmatprep.subr.mxu0 0.0
    %1694 = vmatpush1.msra.mxu0 0.0
    %1695 = vmatprep.subr.mxu0 0.0
    %1696 = vmatpush1.msra.mxu0 0.0
    %1697 = vmatprep.subr.mxu0 0.0
    %1698 = vmatpush1.msra.mxu0 0.0
    %1699 = vmatprep.subr.mxu0 0.0
    %1700 = vmatpush1.msra.mxu0 0.0
    %1701 = vmatprep.subr.mxu0 0.0
    %1702 = vmatpush1.msra.mxu0 0.0
    %1703 = vmatprep.subr.mxu0 0.0
    %1704 = vmatpush1.msra.mxu0 0.0
    %1705 = vmatprep.subr.mxu0 0.0
    %1706 = vmatpush1.msra.mxu0 0.0
    %1707 = vmatprep.subr.mxu0 0.0
    %1708 = vmatpush1.msra.mxu0 0.0
    %1709 = vmatprep.subr.mxu0 0.0
    %1710 = vmatpush1.msra.mxu0 0.0
    %1711 = vmatprep.subr.mxu0 0.0
    %1712 = vmatpush1.msra.mxu0 0.0
    %1713 = vmatprep.subr.mxu0 0.0
    %1714 = vmatpush1.msra.mxu0 0.0
    %1715 = vmatprep.subr.mxu0 0.0
    %1716 = vmatpush1.msra.mxu0 0.0
    %1717 = vmatprep.subr.mxu0 0.0
    %1718 = vmatpush1.msra.mxu0 0.0
    %1719 = vmatprep.subr.mxu0 0.0
    %1720 = vmatpush1.msra.mxu0 0.0
    %1721 = vmatprep.subr.mxu0 0.0
    %1722 = vmatpush1.msra.mxu0 0.0
    %1723 = vmatprep.subr.mxu0 0.0
    %1724 = vmatpush1.msra.mxu0 0.0
    %1725 = vmatprep.subr.mxu0 0.0
    %1726 = vmatpush1.msra.mxu0 0.0
    %1727 = vmatprep.subr.mxu0 0.0
    %1728 = vmatpush1.msra.mxu0 0.0
    %1729 = vmatprep.mubr.f32.mxu0 0.0
    %1730 = vmatmul.mubr.f32.gmra.mrb[0].mxu0 %v1580
    %v1731 = vpop.f32.mrb[0].mxu0
    %v1732 = vadd.f32 0.0, %v1731
    %v1733 = vpop.f32.mrb[0].mxu0
    %v1734 = vadd.f32 0.0, %v1733
    %1735 = vdwg.mxu0
    %v1736 = vadd.f32 %v1548, %v1661
    %v1737 = vadd.f32 %v1549, %v1663
    %v1738 = vadd.f32 %v1550, %v1732
    %v1739 = vadd.f32 %v1551, %v1734
    %v1740 = vadd.f32 %v1736, %v1737
    %v1741 = vadd.f32 %v1740, %v1738
    %v1742 = vadd.f32 %v1741, %v1739
    %1743 = vadd.xlane.f32.xlu0 %v1742
    %v1744 = vpop.xlane.xlu0 %1743
    %v1745 = vmul.f32 %v1736, %v1736
    %v1746 = vmul.f32 %v1737, %v1737
    %v1747 = vmul.f32 %v1738, %v1738
    %v1748 = vmul.f32 %v1739, %v1739
    %v1749 = vadd.f32 %v1745, %v1746
    %v1750 = vadd.f32 %v1749, %v1747
    %v1751 = vadd.f32 %v1750, %v1748
    %1752 = vadd.xlane.f32.xlu0 %v1751
    %v1753 = vpop.xlane.xlu0 %1752
    %v1754 = vmul.f32 %v1744, 0.001953125
    %v1755 = vmul.f32 %v1753, 0.001953125
    %v1756 = vmul.f32 %v1754, %v1754
    %v1757 = vsub.f32 %v1755, %v1756
    %v1758 = vld [vmem:[%s2] sm:$0xff]
    %v1759 = vadd.f32 %v1757, 1e-05
    %v1760 = vrsqrt.pop %v1759
    %v1761 = vmul.f32 %v1758, %v1760
    %v1762 = vld [vmem:[%s3] sm:$0xff]
    %v1763 = vmul.f32 %v1754, %v1761
    %v1764 = vsub.f32 %v1762, %v1763
    %1766 = vset.pattern.permute.xlu0 0
    %1767 = vperm.xlu0 %1766, %v1761
    %v1768 = vpop.permute.xlu0 %1767
    %v1770 = vmul.f32 %v1736, %v1768
    %v1771 = vmul.f32 %v1737, %v1768
    %v1772 = vmul.f32 %v1738, %v1768
    %v1773 = vmul.f32 %v1739, %v1768
    %1775 = vset.pattern.permute.xlu0 0
    %1776 = vperm.xlu0 %1775, %v1764
    %v1777 = vpop.permute.xlu0 %1776
    %v1779 = vadd.f32 %v1770, %v1777
    %v1780 = vadd.f32 %v1771, %v1777
    %v1781 = vadd.f32 %v1772, %v1777
    %v1782 = vadd.f32 %v1773, %v1777
    %v1783 = vmax.f32 %v1779, 0.0
    %v1784 = vmax.f32 %v1780, 0.0
    %v1785 = vmax.f32 %v1781, 0.0
    %v1786 = vmax.f32 %v1782, 0.0
    %1787 = vrot.lane.b32.xlu0 %v1783, 17
    %v1788 = vpop.permute.xlu0 %1787
    %1789 = vrot.lane.b32.xlu0 %v1784, 17
    %v1790 = vpop.permute.xlu0 %1789
    %1791 = vrot.lane.b32.xlu0 %v1785, 17
    %v1792 = vpop.permute.xlu0 %1791
    %1793 = vrot.lane.b32.xlu0 %v1786, 17
    %v1794 = vpop.permute.xlu0 %1793
    %v1795 = vsel %vm92, %v1792, %v1794
    %v1796 = vsel %vm92, %v1790, %v1792
    %v1797 = vsel %vm92, %v1788, %v1790
    %v1798 = vsel %vm92, %v1794, %v1788
    %v1799 = vsel %vm101, %v1798, 0.0
    %v1800 = vsel %vm102, %v1797, 0.0
    %v1801 = vsel %vm103, %v1796, 0.0
    %v1802 = vsel %vm104, %v1795, 0.0
    %v1803 = vld [vmem:[%s4] sm:$0xff]
    %1804 = vrot.lane.b32.xlu0 %v1783, 16
    %v1805 = vpop.permute.xlu0 %1804
    %1806 = vrot.lane.b32.xlu0 %v1784, 16
    %v1807 = vpop.permute.xlu0 %1806
    %1808 = vrot.lane.b32.xlu0 %v1785, 16
    %v1809 = vpop.permute.xlu0 %1808
    %1810 = vrot.lane.b32.xlu0 %v1786, 16
    %v1811 = vpop.permute.xlu0 %1810
    %v1812 = vsel %vm118, %v1809, %v1811
    %v1813 = vsel %vm118, %v1807, %v1809
    %v1814 = vsel %vm118, %v1805, %v1807
    %v1815 = vsel %vm118, %v1811, %v1805
    %v1816 = vsel %vm127, %v1815, 0.0
    %v1817 = vsel %vm128, %v1814, 0.0
    %v1818 = vsel %vm129, %v1813, 0.0
    %v1819 = vsel %vm130, %v1812, 0.0
    %s1820 = scalar_lea.vmem %s4, 8
    %v1821 = vld [vmem:[%s1820] sm:$0xff]
    %vm1822 = vcmask 64512
    %v1824 = vsel %vm1822, %v1821, 0
    %1826 = vmatprep.subr.mxu0 %v1817
    %1827 = vmatpush1.msra.mxu0 %v1816
    %1828 = vmatprep.subr.mxu0 0.0
    %1829 = vmatpush1.msra.mxu0 0.0
    %1830 = vmatprep.subr.mxu0 0.0
    %1831 = vmatpush1.msra.mxu0 0.0
    %1832 = vmatprep.subr.mxu0 0.0
    %1833 = vmatpush1.msra.mxu0 0.0
    %1834 = vmatprep.subr.mxu0 0.0
    %1835 = vmatpush1.msra.mxu0 0.0
    %1836 = vmatprep.subr.mxu0 0.0
    %1837 = vmatpush1.msra.mxu0 0.0
    %1838 = vmatprep.subr.mxu0 0.0
    %1839 = vmatpush1.msra.mxu0 0.0
    %1840 = vmatprep.subr.mxu0 0.0
    %1841 = vmatpush1.msra.mxu0 0.0
    %1842 = vmatprep.subr.mxu0 0.0
    %1843 = vmatpush1.msra.mxu0 0.0
    %1844 = vmatprep.subr.mxu0 0.0
    %1845 = vmatpush1.msra.mxu0 0.0
    %1846 = vmatprep.subr.mxu0 0.0
    %1847 = vmatpush1.msra.mxu0 0.0
    %1848 = vmatprep.subr.mxu0 0.0
    %1849 = vmatpush1.msra.mxu0 0.0
    %1850 = vmatprep.subr.mxu0 0.0
    %1851 = vmatpush1.msra.mxu0 0.0
    %1852 = vmatprep.subr.mxu0 0.0
    %1853 = vmatpush1.msra.mxu0 0.0
    %1854 = vmatprep.subr.mxu0 0.0
    %1855 = vmatpush1.msra.mxu0 0.0
    %1856 = vmatprep.subr.mxu0 0.0
    %1857 = vmatpush1.msra.mxu0 0.0
    %1858 = vmatprep.subr.mxu0 0.0
    %1859 = vmatpush1.msra.mxu0 0.0
    %1860 = vmatprep.subr.mxu0 0.0
    %1861 = vmatpush1.msra.mxu0 0.0
    %1862 = vmatprep.subr.mxu0 0.0
    %1863 = vmatpush1.msra.mxu0 0.0
    %1864 = vmatprep.subr.mxu0 0.0
    %1865 = vmatpush1.msra.mxu0 0.0
    %1866 = vmatprep.subr.mxu0 0.0
    %1867 = vmatpush1.msra.mxu0 0.0
    %1868 = vmatprep.subr.mxu0 0.0
    %1869 = vmatpush1.msra.mxu0 0.0
    %1870 = vmatprep.subr.mxu0 0.0
    %1871 = vmatpush1.msra.mxu0 0.0
    %1872 = vmatprep.subr.mxu0 0.0
    %1873 = vmatpush1.msra.mxu0 0.0
    %1874 = vmatprep.subr.mxu0 0.0
    %1875 = vmatpush1.msra.mxu0 0.0
    %1876 = vmatprep.subr.mxu0 0.0
    %1877 = vmatpush1.msra.mxu0 0.0
    %1878 = vmatprep.subr.mxu0 0.0
    %1879 = vmatpush1.msra.mxu0 0.0
    %1880 = vmatprep.subr.mxu0 0.0
    %1881 = vmatpush1.msra.mxu0 0.0
    %1882 = vmatprep.subr.mxu0 0.0
    %1883 = vmatpush1.msra.mxu0 0.0
    %1884 = vmatprep.subr.mxu0 0.0
    %1885 = vmatpush1.msra.mxu0 0.0
    %1886 = vmatprep.subr.mxu0 0.0
    %1887 = vmatpush1.msra.mxu0 0.0
    %1888 = vmatprep.subr.mxu0 0.0
    %1889 = vmatpush1.msra.mxu0 0.0
    %1890 = vmatprep.mubr.f32.mxu0 0.0
    %1891 = vmatmul.mubr.f32.gmra.mrb[0].mxu0 %v1824
    %v1892 = vpop.f32.mrb[0].mxu0
    %v1893 = vadd.f32 0.0, %v1892
    %v1894 = vpop.f32.mrb[0].mxu0
    %v1895 = vadd.f32 0.0, %v1894
    %1896 = vdwg.mxu0
    %1897 = vmatprep.subr.mxu0 %v1819
    %1898 = vmatpush1.msra.mxu0 %v1818
    %1899 = vmatprep.subr.mxu0 0.0
    %1900 = vmatpush1.msra.mxu0 0.0
    %1901 = vmatprep.subr.mxu0 0.0
    %1902 = vmatpush1.msra.mxu0 0.0
    %1903 = vmatprep.subr.mxu0 0.0
    %1904 = vmatpush1.msra.mxu0 0.0
    %1905 = vmatprep.subr.mxu0 0.0
    %1906 = vmatpush1.msra.mxu0 0.0
    %1907 = vmatprep.subr.mxu0 0.0
    %1908 = vmatpush1.msra.mxu0 0.0
    %1909 = vmatprep.subr.mxu0 0.0
    %1910 = vmatpush1.msra.mxu0 0.0
    %1911 = vmatprep.subr.mxu0 0.0
    %1912 = vmatpush1.msra.mxu0 0.0
    %1913 = vmatprep.subr.mxu0 0.0
    %1914 = vmatpush1.msra.mxu0 0.0
    %1915 = vmatprep.subr.mxu0 0.0
    %1916 = vmatpush1.msra.mxu0 0.0
    %1917 = vmatprep.subr.mxu0 0.0
    %1918 = vmatpush1.msra.mxu0 0.0
    %1919 = vmatprep.subr.mxu0 0.0
    %1920 = vmatpush1.msra.mxu0 0.0
    %1921 = vmatprep.subr.mxu0 0.0
    %1922 = vmatpush1.msra.mxu0 0.0
    %1923 = vmatprep.subr.mxu0 0.0
    %1924 = vmatpush1.msra.mxu0 0.0
    %1925 = vmatprep.subr.mxu0 0.0
    %1926 = vmatpush1.msra.mxu0 0.0
    %1927 = vmatprep.subr.mxu0 0.0
    %1928 = vmatpush1.msra.mxu0 0.0
    %1929 = vmatprep.subr.mxu0 0.0
    %1930 = vmatpush1.msra.mxu0 0.0
    %1931 = vmatprep.subr.mxu0 0.0
    %1932 = vmatpush1.msra.mxu0 0.0
    %1933 = vmatprep.subr.mxu0 0.0
    %1934 = vmatpush1.msra.mxu0 0.0
    %1935 = vmatprep.subr.mxu0 0.0
    %1936 = vmatpush1.msra.mxu0 0.0
    %1937 = vmatprep.subr.mxu0 0.0
    %1938 = vmatpush1.msra.mxu0 0.0
    %1939 = vmatprep.subr.mxu0 0.0
    %1940 = vmatpush1.msra.mxu0 0.0
    %1941 = vmatprep.subr.mxu0 0.0
    %1942 = vmatpush1.msra.mxu0 0.0
    %1943 = vmatprep.subr.mxu0 0.0
    %1944 = vmatpush1.msra.mxu0 0.0
    %1945 = vmatprep.subr.mxu0 0.0
    %1946 = vmatpush1.msra.mxu0 0.0
    %1947 = vmatprep.subr.mxu0 0.0
    %1948 = vmatpush1.msra.mxu0 0.0
    %1949 = vmatprep.subr.mxu0 0.0
    %1950 = vmatpush1.msra.mxu0 0.0
    %1951 = vmatprep.subr.mxu0 0.0
    %1952 = vmatpush1.msra.mxu0 0.0
    %1953 = vmatprep.subr.mxu0 0.0
    %1954 = vmatpush1.msra.mxu0 0.0
    %1955 = vmatprep.subr.mxu0 0.0
    %1956 = vmatpush1.msra.mxu0 0.0
    %1957 = vmatprep.subr.mxu0 0.0
    %1958 = vmatpush1.msra.mxu0 0.0
    %1959 = vmatprep.subr.mxu0 0.0
    %1960 = vmatpush1.msra.mxu0 0.0
    %1961 = vmatprep.mubr.f32.mxu0 0.0
    %1962 = vmatmul.mubr.f32.gmra.mrb[0].mxu0 %v1824
    %v1963 = vpop.f32.mrb[0].mxu0
    %v1964 = vadd.f32 0.0, %v1963
    %v1965 = vpop.f32.mrb[0].mxu0
    %v1966 = vadd.f32 0.0, %v1965
    %1967 = vdwg.mxu0
    %v1969 = vsel %vm1822, %v1803, 0
    %1971 = vmatprep.subr.mxu0 %v1800
    %1972 = vmatpush1.msra.mxu0 %v1799
    %1973 = vmatprep.subr.mxu0 0.0
    %1974 = vmatpush1.msra.mxu0 0.0
    %1975 = vmatprep.subr.mxu0 0.0
    %1976 = vmatpush1.msra.mxu0 0.0
    %1977 = vmatprep.subr.mxu0 0.0
    %1978 = vmatpush1.msra.mxu0 0.0
    %1979 = vmatprep.subr.mxu0 0.0
    %1980 = vmatpush1.msra.mxu0 0.0
    %1981 = vmatprep.subr.mxu0 0.0
    %1982 = vmatpush1.msra.mxu0 0.0
    %1983 = vmatprep.subr.mxu0 0.0
    %1984 = vmatpush1.msra.mxu0 0.0
    %1985 = vmatprep.subr.mxu0 0.0
    %1986 = vmatpush1.msra.mxu0 0.0
    %1987 = vmatprep.subr.mxu0 0.0
    %1988 = vmatpush1.msra.mxu0 0.0
    %1989 = vmatprep.subr.mxu0 0.0
    %1990 = vmatpush1.msra.mxu0 0.0
    %1991 = vmatprep.subr.mxu0 0.0
    %1992 = vmatpush1.msra.mxu0 0.0
    %1993 = vmatprep.subr.mxu0 0.0
    %1994 = vmatpush1.msra.mxu0 0.0
    %1995 = vmatprep.subr.mxu0 0.0
    %1996 = vmatpush1.msra.mxu0 0.0
    %1997 = vmatprep.subr.mxu0 0.0
    %1998 = vmatpush1.msra.mxu0 0.0
    %1999 = vmatprep.subr.mxu0 0.0
    %2000 = vmatpush1.msra.mxu0 0.0
    %2001 = vmatprep.subr.mxu0 0.0
    %2002 = vmatpush1.msra.mxu0 0.0
    %2003 = vmatprep.subr.mxu0 0.0
    %2004 = vmatpush1.msra.mxu0 0.0
    %2005 = vmatprep.subr.mxu0 0.0
    %2006 = vmatpush1.msra.mxu0 0.0
    %2007 = vmatprep.subr.mxu0 0.0
    %2008 = vmatpush1.msra.mxu0 0.0
    %2009 = vmatprep.subr.mxu0 0.0
    %2010 = vmatpush1.msra.mxu0 0.0
    %2011 = vmatprep.subr.mxu0 0.0
    %2012 = vmatpush1.msra.mxu0 0.0
    %2013 = vmatprep.subr.mxu0 0.0
    %2014 = vmatpush1.msra.mxu0 0.0
    %2015 = vmatprep.subr.mxu0 0.0
    %2016 = vmatpush1.msra.mxu0 0.0
    %2017 = vmatprep.subr.mxu0 0.0
    %2018 = vmatpush1.msra.mxu0 0.0
    %2019 = vmatprep.subr.mxu0 0.0
    %2020 = vmatpush1.msra.mxu0 0.0
    %2021 = vmatprep.subr.mxu0 0.0
    %2022 = vmatpush1.msra.mxu0 0.0
    %2023 = vmatprep.subr.mxu0 0.0
    %2024 = vmatpush1.msra.mxu0 0.0
    %2025 = vmatprep.subr.mxu0 0.0
    %2026 = vmatpush1.msra.mxu0 0.0
    %2027 = vmatprep.subr.mxu0 0.0
    %2028 = vmatpush1.msra.mxu0 0.0
    %2029 = vmatprep.subr.mxu0 0.0
    %2030 = vmatpush1.msra.mxu0 0.0
    %2031 = vmatprep.subr.mxu0 0.0
    %2032 = vmatpush1.msra.mxu0 0.0
    %2033 = vmatprep.subr.mxu0 0.0
    %2034 = vmatpush1.msra.mxu0 0.0
    %2035 = vmatprep.mubr.f32.mxu0 0.0
    %2036 = vmatmul.mubr.f32.gmra.mrb[0].mxu0 %v1969
    %v2037 = vpop.f32.mrb[0].mxu0
    %v2038 = vadd.f32 %v1893, %v2037
    %v2039 = vpop.f32.mrb[0].mxu0
    %v2040 = vadd.f32 %v1895, %v2039
    %2041 = vdwg.mxu0
    %2042 = vmatprep.subr.mxu0 %v1802
    %2043 = vmatpush1.msra.mxu0 %v1801
    %2044 = vmatprep.subr.mxu0 0.0
    %2045 = vmatpush1.msra.mxu0 0.0
    %2046 = vmatprep.subr.mxu0 0.0
    %2047 = vmatpush1.msra.mxu0 0.0
    %2048 = vmatprep.subr.mxu0 0.0
    %2049 = vmatpush1.msra.mxu0 0.0
    %2050 = vmatprep.subr.mxu0 0.0
    %2051 = vmatpush1.msra.mxu0 0.0
    %2052 = vmatprep.subr.mxu0 0.0
    %2053 = vmatpush1.msra.mxu0 0.0
    %2054 = vmatprep.subr.mxu0 0.0
    %2055 = vmatpush1.msra.mxu0 0.0
    %2056 = vmatprep.subr.mxu0 0.0
    %2057 = vmatpush1.msra.mxu0 0.0
    %2058 = vmatprep.subr.mxu0 0.0
    %2059 = vmatpush1.msra.mxu0 0.0
    %2060 = vmatprep.subr.mxu0 0.0
    %2061 = vmatpush1.msra.mxu0 0.0
    %2062 = vmatprep.subr.mxu0 0.0
    %2063 = vmatpush1.msra.mxu0 0.0
    %2064 = vmatprep.subr.mxu0 0.0
    %2065 = vmatpush1.msra.mxu0 0.0
    %2066 = vmatprep.subr.mxu0 0.0
    %2067 = vmatpush1.msra.mxu0 0.0
    %2068 = vmatprep.subr.mxu0 0.0
    %2069 = vmatpush1.msra.mxu0 0.0
    %2070 = vmatprep.subr.mxu0 0.0
    %2071 = vmatpush1.msra.mxu0 0.0
    %2072 = vmatprep.subr.mxu0 0.0
    %2073 = vmatpush1.msra.mxu0 0.0
    %2074 = vmatprep.subr.mxu0 0.0
    %2075 = vmatpush1.msra.mxu0 0.0
    %2076 = vmatprep.subr.mxu0 0.0
    %2077 = vmatpush1.msra.mxu0 0.0
    %2078 = vmatprep.subr.mxu0 0.0
    %2079 = vmatpush1.msra.mxu0 0.0
    %2080 = vmatprep.subr.mxu0 0.0
    %2081 = vmatpush1.msra.mxu0 0.0
    %2082 = vmatprep.subr.mxu0 0.0
    %2083 = vmatpush1.msra.mxu0 0.0
    %2084 = vmatprep.subr.mxu0 0.0
    %2085 = vmatpush1.msra.mxu0 0.0
    %2086 = vmatprep.subr.mxu0 0.0
    %2087 = vmatpush1.msra.mxu0 0.0
    %2088 = vmatprep.subr.mxu0 0.0
    %2089 = vmatpush1.msra.mxu0 0.0
    %2090 = vmatprep.subr.mxu0 0.0
    %2091 = vmatpush1.msra.mxu0 0.0
    %2092 = vmatprep.subr.mxu0 0.0
    %2093 = vmatpush1.msra.mxu0 0.0
    %2094 = vmatprep.subr.mxu0 0.0
    %2095 = vmatpush1.msra.mxu0 0.0
    %2096 = vmatprep.subr.mxu0 0.0
    %2097 = vmatpush1.msra.mxu0 0.0
    %2098 = vmatprep.subr.mxu0 0.0
    %2099 = vmatpush1.msra.mxu0 0.0
    %2100 = vmatprep.subr.mxu0 0.0
    %2101 = vmatpush1.msra.mxu0 0.0
    %2102 = vmatprep.subr.mxu0 0.0
    %2103 = vmatpush1.msra.mxu0 0.0
    %2104 = vmatprep.subr.mxu0 0.0
    %2105 = vmatpush1.msra.mxu0 0.0
    %2106 = vmatprep.mubr.f32.mxu0 0.0
    %2107 = vmatmul.mubr.f32.gmra.mrb[0].mxu0 %v1969
    %v2108 = vpop.f32.mrb[0].mxu0
    %v2109 = vadd.f32 %v1964, %v2108
    %v2110 = vpop.f32.mrb[0].mxu0
    %v2111 = vadd.f32 %v1966, %v2110
    %2112 = vdwg.mxu0
    %2113 = vrot.lane.b32.xlu0 %v1783, 15
    %v2114 = vpop.permute.xlu0 %2113
    %2115 = vrot.lane.b32.xlu0 %v1784, 15
    %v2116 = vpop.permute.xlu0 %2115
    %2117 = vrot.lane.b32.xlu0 %v1785, 15
    %v2118 = vpop.permute.xlu0 %2117
    %2119 = vrot.lane.b32.xlu0 %v1786, 15
    %v2120 = vpop.permute.xlu0 %2119
    %v2121 = vsel %vm461, %v2118, %v2120
    %v2122 = vsel %vm461, %v2116, %v2118
    %v2123 = vsel %vm461, %v2114, %v2116
    %v2124 = vsel %vm461, %v2120, %v2114
    %v2125 = vsel %vm470, %v2124, 0.0
    %v2126 = vsel %vm471, %v2123, 0.0
    %v2127 = vsel %vm472, %v2122, 0.0
    %v2128 = vsel %vm473, %v2121, 0.0
    %s2129 = scalar_lea.vmem %s4, 16
    %v2130 = vld [vmem:[%s2129] sm:$0xff]
    %v2132 = vsel %vm1822, %v2130, 0
    %2134 = vmatprep.subr.mxu0 %v2126
    %2135 = vmatpush1.msra.mxu0 %v2125
    %2136 = vmatprep.subr.mxu0 0.0
    %2137 = vmatpush1.msra.mxu0 0.0
    %2138 = vmatprep.subr.mxu0 0.0
    %2139 = vmatpush1.msra.mxu0 0.0
    %2140 = vmatprep.subr.mxu0 0.0
    %2141 = vmatpush1.msra.mxu0 0.0
    %2142 = vmatprep.subr.mxu0 0.0
    %2143 = vmatpush1.msra.mxu0 0.0
    %2144 = vmatprep.subr.mxu0 0.0
    %2145 = vmatpush1.msra.mxu0 0.0
    %2146 = vmatprep.subr.mxu0 0.0
    %2147 = vmatpush1.msra.mxu0 0.0
    %2148 = vmatprep.subr.mxu0 0.0
    %2149 = vmatpush1.msra.mxu0 0.0
    %2150 = vmatprep.subr.mxu0 0.0
    %2151 = vmatpush1.msra.mxu0 0.0
    %2152 = vmatprep.subr.mxu0 0.0
    %2153 = vmatpush1.msra.mxu0 0.0
    %2154 = vmatprep.subr.mxu0 0.0
    %2155 = vmatpush1.msra.mxu0 0.0
    %2156 = vmatprep.subr.mxu0 0.0
    %2157 = vmatpush1.msra.mxu0 0.0
    %2158 = vmatprep.subr.mxu0 0.0
    %2159 = vmatpush1.msra.mxu0 0.0
    %2160 = vmatprep.subr.mxu0 0.0
    %2161 = vmatpush1.msra.mxu0 0.0
    %2162 = vmatprep.subr.mxu0 0.0
    %2163 = vmatpush1.msra.mxu0 0.0
    %2164 = vmatprep.subr.mxu0 0.0
    %2165 = vmatpush1.msra.mxu0 0.0
    %2166 = vmatprep.subr.mxu0 0.0
    %2167 = vmatpush1.msra.mxu0 0.0
    %2168 = vmatprep.subr.mxu0 0.0
    %2169 = vmatpush1.msra.mxu0 0.0
    %2170 = vmatprep.subr.mxu0 0.0
    %2171 = vmatpush1.msra.mxu0 0.0
    %2172 = vmatprep.subr.mxu0 0.0
    %2173 = vmatpush1.msra.mxu0 0.0
    %2174 = vmatprep.subr.mxu0 0.0
    %2175 = vmatpush1.msra.mxu0 0.0
    %2176 = vmatprep.subr.mxu0 0.0
    %2177 = vmatpush1.msra.mxu0 0.0
    %2178 = vmatprep.subr.mxu0 0.0
    %2179 = vmatpush1.msra.mxu0 0.0
    %2180 = vmatprep.subr.mxu0 0.0
    %2181 = vmatpush1.msra.mxu0 0.0
    %2182 = vmatprep.subr.mxu0 0.0
    %2183 = vmatpush1.msra.mxu0 0.0
    %2184 = vmatprep.subr.mxu0 0.0
    %2185 = vmatpush1.msra.mxu0 0.0
    %2186 = vmatprep.subr.mxu0 0.0
    %2187 = vmatpush1.msra.mxu0 0.0
    %2188 = vmatprep.subr.mxu0 0.0
    %2189 = vmatpush1.msra.mxu0 0.0
    %2190 = vmatprep.subr.mxu0 0.0
    %2191 = vmatpush1.msra.mxu0 0.0
    %2192 = vmatprep.subr.mxu0 0.0
    %2193 = vmatpush1.msra.mxu0 0.0
    %2194 = vmatprep.subr.mxu0 0.0
    %2195 = vmatpush1.msra.mxu0 0.0
    %2196 = vmatprep.subr.mxu0 0.0
    %2197 = vmatpush1.msra.mxu0 0.0
    %2198 = vmatprep.mubr.f32.mxu0 0.0
    %2199 = vmatmul.mubr.f32.gmra.mrb[0].mxu0 %v2132
    %v2200 = vpop.f32.mrb[0].mxu0
    %v2201 = vadd.f32 0.0, %v2200
    %v2202 = vpop.f32.mrb[0].mxu0
    %v2203 = vadd.f32 0.0, %v2202
    %2204 = vdwg.mxu0
    %2205 = vmatprep.subr.mxu0 %v2128
    %2206 = vmatpush1.msra.mxu0 %v2127
    %2207 = vmatprep.subr.mxu0 0.0
    %2208 = vmatpush1.msra.mxu0 0.0
    %2209 = vmatprep.subr.mxu0 0.0
    %2210 = vmatpush1.msra.mxu0 0.0
    %2211 = vmatprep.subr.mxu0 0.0
    %2212 = vmatpush1.msra.mxu0 0.0
    %2213 = vmatprep.subr.mxu0 0.0
    %2214 = vmatpush1.msra.mxu0 0.0
    %2215 = vmatprep.subr.mxu0 0.0
    %2216 = vmatpush1.msra.mxu0 0.0
    %2217 = vmatprep.subr.mxu0 0.0
    %2218 = vmatpush1.msra.mxu0 0.0
    %2219 = vmatprep.subr.mxu0 0.0
    %2220 = vmatpush1.msra.mxu0 0.0
    %2221 = vmatprep.subr.mxu0 0.0
    %2222 = vmatpush1.msra.mxu0 0.0
    %2223 = vmatprep.subr.mxu0 0.0
    %2224 = vmatpush1.msra.mxu0 0.0
    %2225 = vmatprep.subr.mxu0 0.0
    %2226 = vmatpush1.msra.mxu0 0.0
    %2227 = vmatprep.subr.mxu0 0.0
    %2228 = vmatpush1.msra.mxu0 0.0
    %2229 = vmatprep.subr.mxu0 0.0
    %2230 = vmatpush1.msra.mxu0 0.0
    %2231 = vmatprep.subr.mxu0 0.0
    %2232 = vmatpush1.msra.mxu0 0.0
    %2233 = vmatprep.subr.mxu0 0.0
    %2234 = vmatpush1.msra.mxu0 0.0
    %2235 = vmatprep.subr.mxu0 0.0
    %2236 = vmatpush1.msra.mxu0 0.0
    %2237 = vmatprep.subr.mxu0 0.0
    %2238 = vmatpush1.msra.mxu0 0.0
    %2239 = vmatprep.subr.mxu0 0.0
    %2240 = vmatpush1.msra.mxu0 0.0
    %2241 = vmatprep.subr.mxu0 0.0
    %2242 = vmatpush1.msra.mxu0 0.0
    %2243 = vmatprep.subr.mxu0 0.0
    %2244 = vmatpush1.msra.mxu0 0.0
    %2245 = vmatprep.subr.mxu0 0.0
    %2246 = vmatpush1.msra.mxu0 0.0
    %2247 = vmatprep.subr.mxu0 0.0
    %2248 = vmatpush1.msra.mxu0 0.0
    %2249 = vmatprep.subr.mxu0 0.0
    %2250 = vmatpush1.msra.mxu0 0.0
    %2251 = vmatprep.subr.mxu0 0.0
    %2252 = vmatpush1.msra.mxu0 0.0
    %2253 = vmatprep.subr.mxu0 0.0
    %2254 = vmatpush1.msra.mxu0 0.0
    %2255 = vmatprep.subr.mxu0 0.0
    %2256 = vmatpush1.msra.mxu0 0.0
    %2257 = vmatprep.subr.mxu0 0.0
    %2258 = vmatpush1.msra.mxu0 0.0
    %2259 = vmatprep.subr.mxu0 0.0
    %2260 = vmatpush1.msra.mxu0 0.0
    %2261 = vmatprep.subr.mxu0 0.0
    %2262 = vmatpush1.msra.mxu0 0.0
    %2263 = vmatprep.subr.mxu0 0.0
    %2264 = vmatpush1.msra.mxu0 0.0
    %2265 = vmatprep.subr.mxu0 0.0
    %2266 = vmatpush1.msra.mxu0 0.0
    %2267 = vmatprep.subr.mxu0 0.0
    %2268 = vmatpush1.msra.mxu0 0.0
    %2269 = vmatprep.mubr.f32.mxu0 0.0
    %2270 = vmatmul.mubr.f32.gmra.mrb[0].mxu0 %v2132
    %v2271 = vpop.f32.mrb[0].mxu0
    %v2272 = vadd.f32 0.0, %v2271
    %v2273 = vpop.f32.mrb[0].mxu0
    %v2274 = vadd.f32 0.0, %v2273
    %2275 = vdwg.mxu0
    %v2276 = vadd.f32 %v2038, %v2201
    %v2277 = vadd.f32 %v2040, %v2203
    %v2278 = vadd.f32 %v2109, %v2272
    %v2279 = vadd.f32 %v2111, %v2274
    %2280 = vrot.lane.b32.xlu0 %v1783, 1
    %v2281 = vpop.permute.xlu0 %2280
    %2282 = vrot.lane.b32.xlu0 %v1784, 1
    %v2283 = vpop.permute.xlu0 %2282
    %2284 = vrot.lane.b32.xlu0 %v1785, 1
    %v2285 = vpop.permute.xlu0 %2284
    %2286 = vrot.lane.b32.xlu0 %v1786, 1
    %v2287 = vpop.permute.xlu0 %2286
    %v2288 = vsel %vm649, %v2285, %v2287
    %v2289 = vsel %vm649, %v2283, %v2285
    %v2290 = vsel %vm649, %v2281, %v2283
    %v2291 = vsel %vm649, %v2287, %v2281
    %v2292 = vsel %vm658, %v2291, 0.0
    %v2293 = vsel %vm659, %v2290, 0.0
    %v2294 = vsel %vm660, %v2289, 0.0
    %v2295 = vsel %vm661, %v2288, 0.0
    %s2296 = scalar_lea.vmem %s4, 24
    %v2297 = vld [vmem:[%s2296] sm:$0xff]
    %v2299 = vsel %vm1822, %v2297, 0
    %2301 = vmatprep.subr.mxu0 %v2293
    %2302 = vmatpush1.msra.mxu0 %v2292
    %2303 = vmatprep.subr.mxu0 0.0
    %2304 = vmatpush1.msra.mxu0 0.0
    %2305 = vmatprep.subr.mxu0 0.0
    %2306 = vmatpush1.msra.mxu0 0.0
    %2307 = vmatprep.subr.mxu0 0.0
    %2308 = vmatpush1.msra.mxu0 0.0
    %2309 = vmatprep.subr.mxu0 0.0
    %2310 = vmatpush1.msra.mxu0 0.0
    %2311 = vmatprep.subr.mxu0 0.0
    %2312 = vmatpush1.msra.mxu0 0.0
    %2313 = vmatprep.subr.mxu0 0.0
    %2314 = vmatpush1.msra.mxu0 0.0
    %2315 = vmatprep.subr.mxu0 0.0
    %2316 = vmatpush1.msra.mxu0 0.0
    %2317 = vmatprep.subr.mxu0 0.0
    %2318 = vmatpush1.msra.mxu0 0.0
    %2319 = vmatprep.subr.mxu0 0.0
    %2320 = vmatpush1.msra.mxu0 0.0
    %2321 = vmatprep.subr.mxu0 0.0
    %2322 = vmatpush1.msra.mxu0 0.0
    %2323 = vmatprep.subr.mxu0 0.0
    %2324 = vmatpush1.msra.mxu0 0.0
    %2325 = vmatprep.subr.mxu0 0.0
    %2326 = vmatpush1.msra.mxu0 0.0
    %2327 = vmatprep.subr.mxu0 0.0
    %2328 = vmatpush1.msra.mxu0 0.0
    %2329 = vmatprep.subr.mxu0 0.0
    %2330 = vmatpush1.msra.mxu0 0.0
    %2331 = vmatprep.subr.mxu0 0.0
    %2332 = vmatpush1.msra.mxu0 0.0
    %2333 = vmatprep.subr.mxu0 0.0
    %2334 = vmatpush1.msra.mxu0 0.0
    %2335 = vmatprep.subr.mxu0 0.0
    %2336 = vmatpush1.msra.mxu0 0.0
    %2337 = vmatprep.subr.mxu0 0.0
    %2338 = vmatpush1.msra.mxu0 0.0
    %2339 = vmatprep.subr.mxu0 0.0
    %2340 = vmatpush1.msra.mxu0 0.0
    %2341 = vmatprep.subr.mxu0 0.0
    %2342 = vmatpush1.msra.mxu0 0.0
    %2343 = vmatprep.subr.mxu0 0.0
    %2344 = vmatpush1.msra.mxu0 0.0
    %2345 = vmatprep.subr.mxu0 0.0
    %2346 = vmatpush1.msra.mxu0 0.0
    %2347 = vmatprep.subr.mxu0 0.0
    %2348 = vmatpush1.msra.mxu0 0.0
    %2349 = vmatprep.subr.mxu0 0.0
    %2350 = vmatpush1.msra.mxu0 0.0
    %2351 = vmatprep.subr.mxu0 0.0
    %2352 = vmatpush1.msra.mxu0 0.0
    %2353 = vmatprep.subr.mxu0 0.0
    %2354 = vmatpush1.msra.mxu0 0.0
    %2355 = vmatprep.subr.mxu0 0.0
    %2356 = vmatpush1.msra.mxu0 0.0
    %2357 = vmatprep.subr.mxu0 0.0
    %2358 = vmatpush1.msra.mxu0 0.0
    %2359 = vmatprep.subr.mxu0 0.0
    %2360 = vmatpush1.msra.mxu0 0.0
    %2361 = vmatprep.subr.mxu0 0.0
    %2362 = vmatpush1.msra.mxu0 0.0
    %2363 = vmatprep.subr.mxu0 0.0
    %2364 = vmatpush1.msra.mxu0 0.0
    %2365 = vmatprep.mubr.f32.mxu0 0.0
    %2366 = vmatmul.mubr.f32.gmra.mrb[0].mxu0 %v2299
    %v2367 = vpop.f32.mrb[0].mxu0
    %v2368 = vadd.f32 0.0, %v2367
    %v2369 = vpop.f32.mrb[0].mxu0
    %v2370 = vadd.f32 0.0, %v2369
    %2371 = vdwg.mxu0
    %2372 = vmatprep.subr.mxu0 %v2295
    %2373 = vmatpush1.msra.mxu0 %v2294
    %2374 = vmatprep.subr.mxu0 0.0
    %2375 = vmatpush1.msra.mxu0 0.0
    %2376 = vmatprep.subr.mxu0 0.0
    %2377 = vmatpush1.msra.mxu0 0.0
    %2378 = vmatprep.subr.mxu0 0.0
    %2379 = vmatpush1.msra.mxu0 0.0
    %2380 = vmatprep.subr.mxu0 0.0
    %2381 = vmatpush1.msra.mxu0 0.0
    %2382 = vmatprep.subr.mxu0 0.0
    %2383 = vmatpush1.msra.mxu0 0.0
    %2384 = vmatprep.subr.mxu0 0.0
    %2385 = vmatpush1.msra.mxu0 0.0
    %2386 = vmatprep.subr.mxu0 0.0
    %2387 = vmatpush1.msra.mxu0 0.0
    %2388 = vmatprep.subr.mxu0 0.0
    %2389 = vmatpush1.msra.mxu0 0.0
    %2390 = vmatprep.subr.mxu0 0.0
    %2391 = vmatpush1.msra.mxu0 0.0
    %2392 = vmatprep.subr.mxu0 0.0
    %2393 = vmatpush1.msra.mxu0 0.0
    %2394 = vmatprep.subr.mxu0 0.0
    %2395 = vmatpush1.msra.mxu0 0.0
    %2396 = vmatprep.subr.mxu0 0.0
    %2397 = vmatpush1.msra.mxu0 0.0
    %2398 = vmatprep.subr.mxu0 0.0
    %2399 = vmatpush1.msra.mxu0 0.0
    %2400 = vmatprep.subr.mxu0 0.0
    %2401 = vmatpush1.msra.mxu0 0.0
    %2402 = vmatprep.subr.mxu0 0.0
    %2403 = vmatpush1.msra.mxu0 0.0
    %2404 = vmatprep.subr.mxu0 0.0
    %2405 = vmatpush1.msra.mxu0 0.0
    %2406 = vmatprep.subr.mxu0 0.0
    %2407 = vmatpush1.msra.mxu0 0.0
    %2408 = vmatprep.subr.mxu0 0.0
    %2409 = vmatpush1.msra.mxu0 0.0
    %2410 = vmatprep.subr.mxu0 0.0
    %2411 = vmatpush1.msra.mxu0 0.0
    %2412 = vmatprep.subr.mxu0 0.0
    %2413 = vmatpush1.msra.mxu0 0.0
    %2414 = vmatprep.subr.mxu0 0.0
    %2415 = vmatpush1.msra.mxu0 0.0
    %2416 = vmatprep.subr.mxu0 0.0
    %2417 = vmatpush1.msra.mxu0 0.0
    %2418 = vmatprep.subr.mxu0 0.0
    %2419 = vmatpush1.msra.mxu0 0.0
    %2420 = vmatprep.subr.mxu0 0.0
    %2421 = vmatpush1.msra.mxu0 0.0
    %2422 = vmatprep.subr.mxu0 0.0
    %2423 = vmatpush1.msra.mxu0 0.0
    %2424 = vmatprep.subr.mxu0 0.0
    %2425 = vmatpush1.msra.mxu0 0.0
    %2426 = vmatprep.subr.mxu0 0.0
    %2427 = vmatpush1.msra.mxu0 0.0
    %2428 = vmatprep.subr.mxu0 0.0
    %2429 = vmatpush1.msra.mxu0 0.0
    %2430 = vmatprep.subr.mxu0 0.0
    %2431 = vmatpush1.msra.mxu0 0.0
    %2432 = vmatprep.subr.mxu0 0.0
    %2433 = vmatpush1.msra.mxu0 0.0
    %2434 = vmatprep.subr.mxu0 0.0
    %2435 = vmatpush1.msra.mxu0 0.0
    %2436 = vmatprep.mubr.f32.mxu0 0.0
    %2437 = vmatmul.mubr.f32.gmra.mrb[0].mxu0 %v2299
    %v2438 = vpop.f32.mrb[0].mxu0
    %v2439 = vadd.f32 0.0, %v2438
    %v2440 = vpop.f32.mrb[0].mxu0
    %v2441 = vadd.f32 0.0, %v2440
    %2442 = vdwg.mxu0
    %v2443 = vadd.f32 %v2276, %v2368
    %v2444 = vadd.f32 %v2277, %v2370
    %v2445 = vadd.f32 %v2278, %v2439
    %v2446 = vadd.f32 %v2279, %v2441
    %s2447 = scalar_lea.vmem %s4, 32
    %v2448 = vld [vmem:[%s2447] sm:$0xff]
    %v2450 = vsel %vm1822, %v2448, 0
    %2452 = vmatprep.subr.mxu0 %v1784
    %2453 = vmatpush1.msra.mxu0 %v1783
    %2454 = vmatprep.subr.mxu0 0.0
    %2455 = vmatpush1.msra.mxu0 0.0
    %2456 = vmatprep.subr.mxu0 0.0
    %2457 = vmatpush1.msra.mxu0 0.0
    %2458 = vmatprep.subr.mxu0 0.0
    %2459 = vmatpush1.msra.mxu0 0.0
    %2460 = vmatprep.subr.mxu0 0.0
    %2461 = vmatpush1.msra.mxu0 0.0
    %2462 = vmatprep.subr.mxu0 0.0
    %2463 = vmatpush1.msra.mxu0 0.0
    %2464 = vmatprep.subr.mxu0 0.0
    %2465 = vmatpush1.msra.mxu0 0.0
    %2466 = vmatprep.subr.mxu0 0.0
    %2467 = vmatpush1.msra.mxu0 0.0
    %2468 = vmatprep.subr.mxu0 0.0
    %2469 = vmatpush1.msra.mxu0 0.0
    %2470 = vmatprep.subr.mxu0 0.0
    %2471 = vmatpush1.msra.mxu0 0.0
    %2472 = vmatprep.subr.mxu0 0.0
    %2473 = vmatpush1.msra.mxu0 0.0
    %2474 = vmatprep.subr.mxu0 0.0
    %2475 = vmatpush1.msra.mxu0 0.0
    %2476 = vmatprep.subr.mxu0 0.0
    %2477 = vmatpush1.msra.mxu0 0.0
    %2478 = vmatprep.subr.mxu0 0.0
    %2479 = vmatpush1.msra.mxu0 0.0
    %2480 = vmatprep.subr.mxu0 0.0
    %2481 = vmatpush1.msra.mxu0 0.0
    %2482 = vmatprep.subr.mxu0 0.0
    %2483 = vmatpush1.msra.mxu0 0.0
    %2484 = vmatprep.subr.mxu0 0.0
    %2485 = vmatpush1.msra.mxu0 0.0
    %2486 = vmatprep.subr.mxu0 0.0
    %2487 = vmatpush1.msra.mxu0 0.0
    %2488 = vmatprep.subr.mxu0 0.0
    %2489 = vmatpush1.msra.mxu0 0.0
    %2490 = vmatprep.subr.mxu0 0.0
    %2491 = vmatpush1.msra.mxu0 0.0
    %2492 = vmatprep.subr.mxu0 0.0
    %2493 = vmatpush1.msra.mxu0 0.0
    %2494 = vmatprep.subr.mxu0 0.0
    %2495 = vmatpush1.msra.mxu0 0.0
    %2496 = vmatprep.subr.mxu0 0.0
    %2497 = vmatpush1.msra.mxu0 0.0
    %2498 = vmatprep.subr.mxu0 0.0
    %2499 = vmatpush1.msra.mxu0 0.0
    %2500 = vmatprep.subr.mxu0 0.0
    %2501 = vmatpush1.msra.mxu0 0.0
    %2502 = vmatprep.subr.mxu0 0.0
    %2503 = vmatpush1.msra.mxu0 0.0
    %2504 = vmatprep.subr.mxu0 0.0
    %2505 = vmatpush1.msra.mxu0 0.0
    %2506 = vmatprep.subr.mxu0 0.0
    %2507 = vmatpush1.msra.mxu0 0.0
    %2508 = vmatprep.subr.mxu0 0.0
    %2509 = vmatpush1.msra.mxu0 0.0
    %2510 = vmatprep.subr.mxu0 0.0
    %2511 = vmatpush1.msra.mxu0 0.0
    %2512 = vmatprep.subr.mxu0 0.0
    %2513 = vmatpush1.msra.mxu0 0.0
    %2514 = vmatprep.subr.mxu0 0.0
    %2515 = vmatpush1.msra.mxu0 0.0
    %2516 = vmatprep.mubr.f32.mxu0 0.0
    %2517 = vmatmul.mubr.f32.gmra.mrb[0].mxu0 %v2450
    %v2518 = vpop.f32.mrb[0].mxu0
    %v2519 = vadd.f32 0.0, %v2518
    %v2520 = vpop.f32.mrb[0].mxu0
    %v2521 = vadd.f32 0.0, %v2520
    %2522 = vdwg.mxu0
    %2523 = vmatprep.subr.mxu0 %v1786
    %2524 = vmatpush1.msra.mxu0 %v1785
    %2525 = vmatprep.subr.mxu0 0.0
    %2526 = vmatpush1.msra.mxu0 0.0
    %2527 = vmatprep.subr.mxu0 0.0
    %2528 = vmatpush1.msra.mxu0 0.0
    %2529 = vmatprep.subr.mxu0 0.0
    %2530 = vmatpush1.msra.mxu0 0.0
    %2531 = vmatprep.subr.mxu0 0.0
    %2532 = vmatpush1.msra.mxu0 0.0
    %2533 = vmatprep.subr.mxu0 0.0
    %2534 = vmatpush1.msra.mxu0 0.0
    %2535 = vmatprep.subr.mxu0 0.0
    %2536 = vmatpush1.msra.mxu0 0.0
    %2537 = vmatprep.subr.mxu0 0.0
    %2538 = vmatpush1.msra.mxu0 0.0
    %2539 = vmatprep.subr.mxu0 0.0
    %2540 = vmatpush1.msra.mxu0 0.0
    %2541 = vmatprep.subr.mxu0 0.0
    %2542 = vmatpush1.msra.mxu0 0.0
    %2543 = vmatprep.subr.mxu0 0.0
    %2544 = vmatpush1.msra.mxu0 0.0
    %2545 = vmatprep.subr.mxu0 0.0
    %2546 = vmatpush1.msra.mxu0 0.0
    %2547 = vmatprep.subr.mxu0 0.0
    %2548 = vmatpush1.msra.mxu0 0.0
    %2549 = vmatprep.subr.mxu0 0.0
    %2550 = vmatpush1.msra.mxu0 0.0
    %2551 = vmatprep.subr.mxu0 0.0
    %2552 = vmatpush1.msra.mxu0 0.0
    %2553 = vmatprep.subr.mxu0 0.0
    %2554 = vmatpush1.msra.mxu0 0.0
    %2555 = vmatprep.subr.mxu0 0.0
    %2556 = vmatpush1.msra.mxu0 0.0
    %2557 = vmatprep.subr.mxu0 0.0
    %2558 = vmatpush1.msra.mxu0 0.0
    %2559 = vmatprep.subr.mxu0 0.0
    %2560 = vmatpush1.msra.mxu0 0.0
    %2561 = vmatprep.subr.mxu0 0.0
    %2562 = vmatpush1.msra.mxu0 0.0
    %2563 = vmatprep.subr.mxu0 0.0
    %2564 = vmatpush1.msra.mxu0 0.0
    %2565 = vmatprep.subr.mxu0 0.0
    %2566 = vmatpush1.msra.mxu0 0.0
    %2567 = vmatprep.subr.mxu0 0.0
    %2568 = vmatpush1.msra.mxu0 0.0
    %2569 = vmatprep.subr.mxu0 0.0
    %2570 = vmatpush1.msra.mxu0 0.0
    %2571 = vmatprep.subr.mxu0 0.0
    %2572 = vmatpush1.msra.mxu0 0.0
    %2573 = vmatprep.subr.mxu0 0.0
    %2574 = vmatpush1.msra.mxu0 0.0
    %2575 = vmatprep.subr.mxu0 0.0
    %2576 = vmatpush1.msra.mxu0 0.0
    %2577 = vmatprep.subr.mxu0 0.0
    %2578 = vmatpush1.msra.mxu0 0.0
    %2579 = vmatprep.subr.mxu0 0.0
    %2580 = vmatpush1.msra.mxu0 0.0
    %2581 = vmatprep.subr.mxu0 0.0
    %2582 = vmatpush1.msra.mxu0 0.0
    %2583 = vmatprep.subr.mxu0 0.0
    %2584 = vmatpush1.msra.mxu0 0.0
    %2585 = vmatprep.subr.mxu0 0.0
    %2586 = vmatpush1.msra.mxu0 0.0
    %2587 = vmatprep.mubr.f32.mxu0 0.0
    %2588 = vmatmul.mubr.f32.gmra.mrb[0].mxu0 %v2450
    %v2589 = vpop.f32.mrb[0].mxu0
    %v2590 = vadd.f32 0.0, %v2589
    %v2591 = vpop.f32.mrb[0].mxu0
    %v2592 = vadd.f32 0.0, %v2591
    %2593 = vdwg.mxu0
    %v2594 = vadd.f32 %v2443, %v2519
    %v2595 = vadd.f32 %v2444, %v2521
    %v2596 = vadd.f32 %v2445, %v2590
    %v2597 = vadd.f32 %v2446, %v2592
    %2598 = vrot.lane.b32.xlu0 %v1783, 127
    %v2599 = vpop.permute.xlu0 %2598
    %2600 = vrot.lane.b32.xlu0 %v1784, 127
    %v2601 = vpop.permute.xlu0 %2600
    %2602 = vrot.lane.b32.xlu0 %v1785, 127
    %v2603 = vpop.permute.xlu0 %2602
    %2604 = vrot.lane.b32.xlu0 %v1786, 127
    %v2605 = vpop.permute.xlu0 %2604
    %v2606 = vsel %vm996, %v2603, %v2605
    %v2607 = vsel %vm996, %v2601, %v2603
    %v2608 = vsel %vm996, %v2599, %v2601
    %v2609 = vsel %vm996, %v2605, %v2599
    %v2610 = vsel %vm1005, %v2608, 0.0
    %v2611 = vsel %vm1006, %v2607, 0.0
    %v2612 = vsel %vm1007, %v2606, 0.0
    %v2613 = vsel %vm1008, %v2609, 0.0
    %s2614 = scalar_lea.vmem %s4, 40
    %v2615 = vld [vmem:[%s2614] sm:$0xff]
    %v2617 = vsel %vm1822, %v2615, 0
    %2619 = vmatprep.subr.mxu0 %v2611
    %2620 = vmatpush1.msra.mxu0 %v2610
    %2621 = vmatprep.subr.mxu0 0.0
    %2622 = vmatpush1.msra.mxu0 0.0
    %2623 = vmatprep.subr.mxu0 0.0
    %2624 = vmatpush1.msra.mxu0 0.0
    %2625 = vmatprep.subr.mxu0 0.0
    %2626 = vmatpush1.msra.mxu0 0.0
    %2627 = vmatprep.subr.mxu0 0.0
    %2628 = vmatpush1.msra.mxu0 0.0
    %2629 = vmatprep.subr.mxu0 0.0
    %2630 = vmatpush1.msra.mxu0 0.0
    %2631 = vmatprep.subr.mxu0 0.0
    %2632 = vmatpush1.msra.mxu0 0.0
    %2633 = vmatprep.subr.mxu0 0.0
    %2634 = vmatpush1.msra.mxu0 0.0
    %2635 = vmatprep.subr.mxu0 0.0
    %2636 = vmatpush1.msra.mxu0 0.0
    %2637 = vmatprep.subr.mxu0 0.0
    %2638 = vmatpush1.msra.mxu0 0.0
    %2639 = vmatprep.subr.mxu0 0.0
    %2640 = vmatpush1.msra.mxu0 0.0
    %2641 = vmatprep.subr.mxu0 0.0
    %2642 = vmatpush1.msra.mxu0 0.0
    %2643 = vmatprep.subr.mxu0 0.0
    %2644 = vmatpush1.msra.mxu0 0.0
    %2645 = vmatprep.subr.mxu0 0.0
    %2646 = vmatpush1.msra.mxu0 0.0
    %2647 = vmatprep.subr.mxu0 0.0
    %2648 = vmatpush1.msra.mxu0 0.0
    %2649 = vmatprep.subr.mxu0 0.0
    %2650 = vmatpush1.msra.mxu0 0.0
    %2651 = vmatprep.subr.mxu0 0.0
    %2652 = vmatpush1.msra.mxu0 0.0
    %2653 = vmatprep.subr.mxu0 0.0
    %2654 = vmatpush1.msra.mxu0 0.0
    %2655 = vmatprep.subr.mxu0 0.0
    %2656 = vmatpush1.msra.mxu0 0.0
    %2657 = vmatprep.subr.mxu0 0.0
    %2658 = vmatpush1.msra.mxu0 0.0
    %2659 = vmatprep.subr.mxu0 0.0
    %2660 = vmatpush1.msra.mxu0 0.0
    %2661 = vmatprep.subr.mxu0 0.0
    %2662 = vmatpush1.msra.mxu0 0.0
    %2663 = vmatprep.subr.mxu0 0.0
    %2664 = vmatpush1.msra.mxu0 0.0
    %2665 = vmatprep.subr.mxu0 0.0
    %2666 = vmatpush1.msra.mxu0 0.0
    %2667 = vmatprep.subr.mxu0 0.0
    %2668 = vmatpush1.msra.mxu0 0.0
    %2669 = vmatprep.subr.mxu0 0.0
    %2670 = vmatpush1.msra.mxu0 0.0
    %2671 = vmatprep.subr.mxu0 0.0
    %2672 = vmatpush1.msra.mxu0 0.0
    %2673 = vmatprep.subr.mxu0 0.0
    %2674 = vmatpush1.msra.mxu0 0.0
    %2675 = vmatprep.subr.mxu0 0.0
    %2676 = vmatpush1.msra.mxu0 0.0
    %2677 = vmatprep.subr.mxu0 0.0
    %2678 = vmatpush1.msra.mxu0 0.0
    %2679 = vmatprep.subr.mxu0 0.0
    %2680 = vmatpush1.msra.mxu0 0.0
    %2681 = vmatprep.subr.mxu0 0.0
    %2682 = vmatpush1.msra.mxu0 0.0
    %2683 = vmatprep.mubr.f32.mxu0 0.0
    %2684 = vmatmul.mubr.f32.gmra.mrb[0].mxu0 %v2617
    %v2685 = vpop.f32.mrb[0].mxu0
    %v2686 = vadd.f32 0.0, %v2685
    %v2687 = vpop.f32.mrb[0].mxu0
    %v2688 = vadd.f32 0.0, %v2687
    %2689 = vdwg.mxu0
    %2690 = vmatprep.subr.mxu0 %v2613
    %2691 = vmatpush1.msra.mxu0 %v2612
    %2692 = vmatprep.subr.mxu0 0.0
    %2693 = vmatpush1.msra.mxu0 0.0
    %2694 = vmatprep.subr.mxu0 0.0
    %2695 = vmatpush1.msra.mxu0 0.0
    %2696 = vmatprep.subr.mxu0 0.0
    %2697 = vmatpush1.msra.mxu0 0.0
    %2698 = vmatprep.subr.mxu0 0.0
    %2699 = vmatpush1.msra.mxu0 0.0
    %2700 = vmatprep.subr.mxu0 0.0
    %2701 = vmatpush1.msra.mxu0 0.0
    %2702 = vmatprep.subr.mxu0 0.0
    %2703 = vmatpush1.msra.mxu0 0.0
    %2704 = vmatprep.subr.mxu0 0.0
    %2705 = vmatpush1.msra.mxu0 0.0
    %2706 = vmatprep.subr.mxu0 0.0
    %2707 = vmatpush1.msra.mxu0 0.0
    %2708 = vmatprep.subr.mxu0 0.0
    %2709 = vmatpush1.msra.mxu0 0.0
    %2710 = vmatprep.subr.mxu0 0.0
    %2711 = vmatpush1.msra.mxu0 0.0
    %2712 = vmatprep.subr.mxu0 0.0
    %2713 = vmatpush1.msra.mxu0 0.0
    %2714 = vmatprep.subr.mxu0 0.0
    %2715 = vmatpush1.msra.mxu0 0.0
    %2716 = vmatprep.subr.mxu0 0.0
    %2717 = vmatpush1.msra.mxu0 0.0
    %2718 = vmatprep.subr.mxu0 0.0
    %2719 = vmatpush1.msra.mxu0 0.0
    %2720 = vmatprep.subr.mxu0 0.0
    %2721 = vmatpush1.msra.mxu0 0.0
    %2722 = vmatprep.subr.mxu0 0.0
    %2723 = vmatpush1.msra.mxu0 0.0
    %2724 = vmatprep.subr.mxu0 0.0
    %2725 = vmatpush1.msra.mxu0 0.0
    %2726 = vmatprep.subr.mxu0 0.0
    %2727 = vmatpush1.msra.mxu0 0.0
    %2728 = vmatprep.subr.mxu0 0.0
    %2729 = vmatpush1.msra.mxu0 0.0
    %2730 = vmatprep.subr.mxu0 0.0
    %2731 = vmatpush1.msra.mxu0 0.0
    %2732 = vmatprep.subr.mxu0 0.0
    %2733 = vmatpush1.msra.mxu0 0.0
    %2734 = vmatprep.subr.mxu0 0.0
    %2735 = vmatpush1.msra.mxu0 0.0
    %2736 = vmatprep.subr.mxu0 0.0
    %2737 = vmatpush1.msra.mxu0 0.0
    %2738 = vmatprep.subr.mxu0 0.0
    %2739 = vmatpush1.msra.mxu0 0.0
    %2740 = vmatprep.subr.mxu0 0.0
    %2741 = vmatpush1.msra.mxu0 0.0
    %2742 = vmatprep.subr.mxu0 0.0
    %2743 = vmatpush1.msra.mxu0 0.0
    %2744 = vmatprep.subr.mxu0 0.0
    %2745 = vmatpush1.msra.mxu0 0.0
    %2746 = vmatprep.subr.mxu0 0.0
    %2747 = vmatpush1.msra.mxu0 0.0
    %2748 = vmatprep.subr.mxu0 0.0
    %2749 = vmatpush1.msra.mxu0 0.0
    %2750 = vmatprep.subr.mxu0 0.0
    %2751 = vmatpush1.msra.mxu0 0.0
    %2752 = vmatprep.subr.mxu0 0.0
    %2753 = vmatpush1.msra.mxu0 0.0
    %2754 = vmatprep.mubr.f32.mxu0 0.0
    %2755 = vmatmul.mubr.f32.gmra.mrb[0].mxu0 %v2617
    %v2756 = vpop.f32.mrb[0].mxu0
    %v2757 = vadd.f32 0.0, %v2756
    %v2758 = vpop.f32.mrb[0].mxu0
    %v2759 = vadd.f32 0.0, %v2758
    %2760 = vdwg.mxu0
    %v2761 = vadd.f32 %v2594, %v2686
    %v2762 = vadd.f32 %v2595, %v2688
    %v2763 = vadd.f32 %v2596, %v2757
    %v2764 = vadd.f32 %v2597, %v2759
    %2765 = vrot.lane.b32.xlu0 %v1783, 113
    %v2766 = vpop.permute.xlu0 %2765
    %2767 = vrot.lane.b32.xlu0 %v1784, 113
    %v2768 = vpop.permute.xlu0 %2767
    %2769 = vrot.lane.b32.xlu0 %v1785, 113
    %v2770 = vpop.permute.xlu0 %2769
    %2771 = vrot.lane.b32.xlu0 %v1786, 113
    %v2772 = vpop.permute.xlu0 %2771
    %v2773 = vsel %vm1184, %v2770, %v2772
    %v2774 = vsel %vm1184, %v2768, %v2770
    %v2775 = vsel %vm1184, %v2766, %v2768
    %v2776 = vsel %vm1184, %v2772, %v2766
    %v2777 = vsel %vm1193, %v2775, 0.0
    %v2778 = vsel %vm1194, %v2774, 0.0
    %v2779 = vsel %vm1195, %v2773, 0.0
    %v2780 = vsel %vm1196, %v2776, 0.0
    %s2781 = scalar_lea.vmem %s4, 48
    %v2782 = vld [vmem:[%s2781] sm:$0xff]
    %v2784 = vsel %vm1822, %v2782, 0
    %2786 = vmatprep.subr.mxu0 %v2778
    %2787 = vmatpush1.msra.mxu0 %v2777
    %2788 = vmatprep.subr.mxu0 0.0
    %2789 = vmatpush1.msra.mxu0 0.0
    %2790 = vmatprep.subr.mxu0 0.0
    %2791 = vmatpush1.msra.mxu0 0.0
    %2792 = vmatprep.subr.mxu0 0.0
    %2793 = vmatpush1.msra.mxu0 0.0
    %2794 = vmatprep.subr.mxu0 0.0
    %2795 = vmatpush1.msra.mxu0 0.0
    %2796 = vmatprep.subr.mxu0 0.0
    %2797 = vmatpush1.msra.mxu0 0.0
    %2798 = vmatprep.subr.mxu0 0.0
    %2799 = vmatpush1.msra.mxu0 0.0
    %2800 = vmatprep.subr.mxu0 0.0
    %2801 = vmatpush1.msra.mxu0 0.0
    %2802 = vmatprep.subr.mxu0 0.0
    %2803 = vmatpush1.msra.mxu0 0.0
    %2804 = vmatprep.subr.mxu0 0.0
    %2805 = vmatpush1.msra.mxu0 0.0
    %2806 = vmatprep.subr.mxu0 0.0
    %2807 = vmatpush1.msra.mxu0 0.0
    %2808 = vmatprep.subr.mxu0 0.0
    %2809 = vmatpush1.msra.mxu0 0.0
    %2810 = vmatprep.subr.mxu0 0.0
    %2811 = vmatpush1.msra.mxu0 0.0
    %2812 = vmatprep.subr.mxu0 0.0
    %2813 = vmatpush1.msra.mxu0 0.0
    %2814 = vmatprep.subr.mxu0 0.0
    %2815 = vmatpush1.msra.mxu0 0.0
    %2816 = vmatprep.subr.mxu0 0.0
    %2817 = vmatpush1.msra.mxu0 0.0
    %2818 = vmatprep.subr.mxu0 0.0
    %2819 = vmatpush1.msra.mxu0 0.0
    %2820 = vmatprep.subr.mxu0 0.0
    %2821 = vmatpush1.msra.mxu0 0.0
    %2822 = vmatprep.subr.mxu0 0.0
    %2823 = vmatpush1.msra.mxu0 0.0
    %2824 = vmatprep.subr.mxu0 0.0
    %2825 = vmatpush1.msra.mxu0 0.0
    %2826 = vmatprep.subr.mxu0 0.0
    %2827 = vmatpush1.msra.mxu0 0.0
    %2828 = vmatprep.subr.mxu0 0.0
    %2829 = vmatpush1.msra.mxu0 0.0
    %2830 = vmatprep.subr.mxu0 0.0
    %2831 = vmatpush1.msra.mxu0 0.0
    %2832 = vmatprep.subr.mxu0 0.0
    %2833 = vmatpush1.msra.mxu0 0.0
    %2834 = vmatprep.subr.mxu0 0.0
    %2835 = vmatpush1.msra.mxu0 0.0
    %2836 = vmatprep.subr.mxu0 0.0
    %2837 = vmatpush1.msra.mxu0 0.0
    %2838 = vmatprep.subr.mxu0 0.0
    %2839 = vmatpush1.msra.mxu0 0.0
    %2840 = vmatprep.subr.mxu0 0.0
    %2841 = vmatpush1.msra.mxu0 0.0
    %2842 = vmatprep.subr.mxu0 0.0
    %2843 = vmatpush1.msra.mxu0 0.0
    %2844 = vmatprep.subr.mxu0 0.0
    %2845 = vmatpush1.msra.mxu0 0.0
    %2846 = vmatprep.subr.mxu0 0.0
    %2847 = vmatpush1.msra.mxu0 0.0
    %2848 = vmatprep.subr.mxu0 0.0
    %2849 = vmatpush1.msra.mxu0 0.0
    %2850 = vmatprep.mubr.f32.mxu0 0.0
    %2851 = vmatmul.mubr.f32.gmra.mrb[0].mxu0 %v2784
    %v2852 = vpop.f32.mrb[0].mxu0
    %v2853 = vadd.f32 0.0, %v2852
    %v2854 = vpop.f32.mrb[0].mxu0
    %v2855 = vadd.f32 0.0, %v2854
    %2856 = vdwg.mxu0
    %2857 = vmatprep.subr.mxu0 %v2780
    %2858 = vmatpush1.msra.mxu0 %v2779
    %2859 = vmatprep.subr.mxu0 0.0
    %2860 = vmatpush1.msra.mxu0 0.0
    %2861 = vmatprep.subr.mxu0 0.0
    %2862 = vmatpush1.msra.mxu0 0.0
    %2863 = vmatprep.subr.mxu0 0.0
    %2864 = vmatpush1.msra.mxu0 0.0
    %2865 = vmatprep.subr.mxu0 0.0
    %2866 = vmatpush1.msra.mxu0 0.0
    %2867 = vmatprep.subr.mxu0 0.0
    %2868 = vmatpush1.msra.mxu0 0.0
    %2869 = vmatprep.subr.mxu0 0.0
    %2870 = vmatpush1.msra.mxu0 0.0
    %2871 = vmatprep.subr.mxu0 0.0
    %2872 = vmatpush1.msra.mxu0 0.0
    %2873 = vmatprep.subr.mxu0 0.0
    %2874 = vmatpush1.msra.mxu0 0.0
    %2875 = vmatprep.subr.mxu0 0.0
    %2876 = vmatpush1.msra.mxu0 0.0
    %2877 = vmatprep.subr.mxu0 0.0
    %2878 = vmatpush1.msra.mxu0 0.0
    %2879 = vmatprep.subr.mxu0 0.0
    %2880 = vmatpush1.msra.mxu0 0.0
    %2881 = vmatprep.subr.mxu0 0.0
    %2882 = vmatpush1.msra.mxu0 0.0
    %2883 = vmatprep.subr.mxu0 0.0
    %2884 = vmatpush1.msra.mxu0 0.0
    %2885 = vmatprep.subr.mxu0 0.0
    %2886 = vmatpush1.msra.mxu0 0.0
    %2887 = vmatprep.subr.mxu0 0.0
    %2888 = vmatpush1.msra.mxu0 0.0
    %2889 = vmatprep.subr.mxu0 0.0
    %2890 = vmatpush1.msra.mxu0 0.0
    %2891 = vmatprep.subr.mxu0 0.0
    %2892 = vmatpush1.msra.mxu0 0.0
    %2893 = vmatprep.subr.mxu0 0.0
    %2894 = vmatpush1.msra.mxu0 0.0
    %2895 = vmatprep.subr.mxu0 0.0
    %2896 = vmatpush1.msra.mxu0 0.0
    %2897 = vmatprep.subr.mxu0 0.0
    %2898 = vmatpush1.msra.mxu0 0.0
    %2899 = vmatprep.subr.mxu0 0.0
    %2900 = vmatpush1.msra.mxu0 0.0
    %2901 = vmatprep.subr.mxu0 0.0
    %2902 = vmatpush1.msra.mxu0 0.0
    %2903 = vmatprep.subr.mxu0 0.0
    %2904 = vmatpush1.msra.mxu0 0.0
    %2905 = vmatprep.subr.mxu0 0.0
    %2906 = vmatpush1.msra.mxu0 0.0
    %2907 = vmatprep.subr.mxu0 0.0
    %2908 = vmatpush1.msra.mxu0 0.0
    %2909 = vmatprep.subr.mxu0 0.0
    %2910 = vmatpush1.msra.mxu0 0.0
    %2911 = vmatprep.subr.mxu0 0.0
    %2912 = vmatpush1.msra.mxu0 0.0
    %2913 = vmatprep.subr.mxu0 0.0
    %2914 = vmatpush1.msra.mxu0 0.0
    %2915 = vmatprep.subr.mxu0 0.0
    %2916 = vmatpush1.msra.mxu0 0.0
    %2917 = vmatprep.subr.mxu0 0.0
    %2918 = vmatpush1.msra.mxu0 0.0
    %2919 = vmatprep.subr.mxu0 0.0
    %2920 = vmatpush1.msra.mxu0 0.0
    %2921 = vmatprep.mubr.f32.mxu0 0.0
    %2922 = vmatmul.mubr.f32.gmra.mrb[0].mxu0 %v2784
    %v2923 = vpop.f32.mrb[0].mxu0
    %v2924 = vadd.f32 0.0, %v2923
    %v2925 = vpop.f32.mrb[0].mxu0
    %v2926 = vadd.f32 0.0, %v2925
    %2927 = vdwg.mxu0
    %v2928 = vadd.f32 %v2761, %v2853
    %v2929 = vadd.f32 %v2762, %v2855
    %v2930 = vadd.f32 %v2763, %v2924
    %v2931 = vadd.f32 %v2764, %v2926
    %2932 = vrot.lane.b32.xlu0 %v1783, 112
    %v2933 = vpop.permute.xlu0 %2932
    %2934 = vrot.lane.b32.xlu0 %v1784, 112
    %v2935 = vpop.permute.xlu0 %2934
    %2936 = vrot.lane.b32.xlu0 %v1785, 112
    %v2937 = vpop.permute.xlu0 %2936
    %2938 = vrot.lane.b32.xlu0 %v1786, 112
    %v2939 = vpop.permute.xlu0 %2938
    %v2940 = vsel %vm1372, %v2937, %v2939
    %v2941 = vsel %vm1372, %v2935, %v2937
    %v2942 = vsel %vm1372, %v2933, %v2935
    %v2943 = vsel %vm1372, %v2939, %v2933
    %v2944 = vsel %vm1381, %v2942, 0.0
    %v2945 = vsel %vm1382, %v2941, 0.0
    %v2946 = vsel %vm1383, %v2940, 0.0
    %v2947 = vsel %vm1384, %v2943, 0.0
    %s2948 = scalar_lea.vmem %s4, 56
    %v2949 = vld [vmem:[%s2948] sm:$0xff]
    %v2951 = vsel %vm1822, %v2949, 0
    %2953 = vmatprep.subr.mxu0 %v2945
    %2954 = vmatpush1.msra.mxu0 %v2944
    %2955 = vmatprep.subr.mxu0 0.0
    %2956 = vmatpush1.msra.mxu0 0.0
    %2957 = vmatprep.subr.mxu0 0.0
    %2958 = vmatpush1.msra.mxu0 0.0
    %2959 = vmatprep.subr.mxu0 0.0
    %2960 = vmatpush1.msra.mxu0 0.0
    %2961 = vmatprep.subr.mxu0 0.0
    %2962 = vmatpush1.msra.mxu0 0.0
    %2963 = vmatprep.subr.mxu0 0.0
    %2964 = vmatpush1.msra.mxu0 0.0
    %2965 = vmatprep.subr.mxu0 0.0
    %2966 = vmatpush1.msra.mxu0 0.0
    %2967 = vmatprep.subr.mxu0 0.0
    %2968 = vmatpush1.msra.mxu0 0.0
    %2969 = vmatprep.subr.mxu0 0.0
    %2970 = vmatpush1.msra.mxu0 0.0
    %2971 = vmatprep.subr.mxu0 0.0
    %2972 = vmatpush1.msra.mxu0 0.0
    %2973 = vmatprep.subr.mxu0 0.0
    %2974 = vmatpush1.msra.mxu0 0.0
    %2975 = vmatprep.subr.mxu0 0.0
    %2976 = vmatpush1.msra.mxu0 0.0
    %2977 = vmatprep.subr.mxu0 0.0
    %2978 = vmatpush1.msra.mxu0 0.0
    %2979 = vmatprep.subr.mxu0 0.0
    %2980 = vmatpush1.msra.mxu0 0.0
    %2981 = vmatprep.subr.mxu0 0.0
    %2982 = vmatpush1.msra.mxu0 0.0
    %2983 = vmatprep.subr.mxu0 0.0
    %2984 = vmatpush1.msra.mxu0 0.0
    %2985 = vmatprep.subr.mxu0 0.0
    %2986 = vmatpush1.msra.mxu0 0.0
    %2987 = vmatprep.subr.mxu0 0.0
    %2988 = vmatpush1.msra.mxu0 0.0
    %2989 = vmatprep.subr.mxu0 0.0
    %2990 = vmatpush1.msra.mxu0 0.0
    %2991 = vmatprep.subr.mxu0 0.0
    %2992 = vmatpush1.msra.mxu0 0.0
    %2993 = vmatprep.subr.mxu0 0.0
    %2994 = vmatpush1.msra.mxu0 0.0
    %2995 = vmatprep.subr.mxu0 0.0
    %2996 = vmatpush1.msra.mxu0 0.0
    %2997 = vmatprep.subr.mxu0 0.0
    %2998 = vmatpush1.msra.mxu0 0.0
    %2999 = vmatprep.subr.mxu0 0.0
    %3000 = vmatpush1.msra.mxu0 0.0
    %3001 = vmatprep.subr.mxu0 0.0
    %3002 = vmatpush1.msra.mxu0 0.0
    %3003 = vmatprep.subr.mxu0 0.0
    %3004 = vmatpush1.msra.mxu0 0.0
    %3005 = vmatprep.subr.mxu0 0.0
    %3006 = vmatpush1.msra.mxu0 0.0
    %3007 = vmatprep.subr.mxu0 0.0
    %3008 = vmatpush1.msra.mxu0 0.0
    %3009 = vmatprep.subr.mxu0 0.0
    %3010 = vmatpush1.msra.mxu0 0.0
    %3011 = vmatprep.subr.mxu0 0.0
    %3012 = vmatpush1.msra.mxu0 0.0
    %3013 = vmatprep.subr.mxu0 0.0
    %3014 = vmatpush1.msra.mxu0 0.0
    %3015 = vmatprep.subr.mxu0 0.0
    %3016 = vmatpush1.msra.mxu0 0.0
    %3017 = vmatprep.mubr.f32.mxu0 0.0
    %3018 = vmatmul.mubr.f32.gmra.mrb[0].mxu0 %v2951
    %v3019 = vpop.f32.mrb[0].mxu0
    %v3020 = vadd.f32 0.0, %v3019
    %v3021 = vpop.f32.mrb[0].mxu0
    %v3022 = vadd.f32 0.0, %v3021
    %3023 = vdwg.mxu0
    %3024 = vmatprep.subr.mxu0 %v2947
    %3025 = vmatpush1.msra.mxu0 %v2946
    %3026 = vmatprep.subr.mxu0 0.0
    %3027 = vmatpush1.msra.mxu0 0.0
    %3028 = vmatprep.subr.mxu0 0.0
    %3029 = vmatpush1.msra.mxu0 0.0
    %3030 = vmatprep.subr.mxu0 0.0
    %3031 = vmatpush1.msra.mxu0 0.0
    %3032 = vmatprep.subr.mxu0 0.0
    %3033 = vmatpush1.msra.mxu0 0.0
    %3034 = vmatprep.subr.mxu0 0.0
    %3035 = vmatpush1.msra.mxu0 0.0
    %3036 = vmatprep.subr.mxu0 0.0
    %3037 = vmatpush1.msra.mxu0 0.0
    %3038 = vmatprep.subr.mxu0 0.0
    %3039 = vmatpush1.msra.mxu0 0.0
    %3040 = vmatprep.subr.mxu0 0.0
    %3041 = vmatpush1.msra.mxu0 0.0
    %3042 = vmatprep.subr.mxu0 0.0
    %3043 = vmatpush1.msra.mxu0 0.0
    %3044 = vmatprep.subr.mxu0 0.0
    %3045 = vmatpush1.msra.mxu0 0.0
    %3046 = vmatprep.subr.mxu0 0.0
    %3047 = vmatpush1.msra.mxu0 0.0
    %3048 = vmatprep.subr.mxu0 0.0
    %3049 = vmatpush1.msra.mxu0 0.0
    %3050 = vmatprep.subr.mxu0 0.0
    %3051 = vmatpush1.msra.mxu0 0.0
    %3052 = vmatprep.subr.mxu0 0.0
    %3053 = vmatpush1.msra.mxu0 0.0
    %3054 = vmatprep.subr.mxu0 0.0
    %3055 = vmatpush1.msra.mxu0 0.0
    %3056 = vmatprep.subr.mxu0 0.0
    %3057 = vmatpush1.msra.mxu0 0.0
    %3058 = vmatprep.subr.mxu0 0.0
    %3059 = vmatpush1.msra.mxu0 0.0
    %3060 = vmatprep.subr.mxu0 0.0
    %3061 = vmatpush1.msra.mxu0 0.0
    %3062 = vmatprep.subr.mxu0 0.0
    %3063 = vmatpush1.msra.mxu0 0.0
    %3064 = vmatprep.subr.mxu0 0.0
    %3065 = vmatpush1.msra.mxu0 0.0
    %3066 = vmatprep.subr.mxu0 0.0
    %3067 = vmatpush1.msra.mxu0 0.0
    %3068 = vmatprep.subr.mxu0 0.0
    %3069 = vmatpush1.msra.mxu0 0.0
    %3070 = vmatprep.subr.mxu0 0.0
    %3071 = vmatpush1.msra.mxu0 0.0
    %3072 = vmatprep.subr.mxu0 0.0
    %3073 = vmatpush1.msra.mxu0 0.0
    %3074 = vmatprep.subr.mxu0 0.0
    %3075 = vmatpush1.msra.mxu0 0.0
    %3076 = vmatprep.subr.mxu0 0.0
    %3077 = vmatpush1.msra.mxu0 0.0
    %3078 = vmatprep.subr.mxu0 0.0
    %3079 = vmatpush1.msra.mxu0 0.0
    %3080 = vmatprep.subr.mxu0 0.0
    %3081 = vmatpush1.msra.mxu0 0.0
    %3082 = vmatprep.subr.mxu0 0.0
    %3083 = vmatpush1.msra.mxu0 0.0
    %3084 = vmatprep.subr.mxu0 0.0
    %3085 = vmatpush1.msra.mxu0 0.0
    %3086 = vmatprep.subr.mxu0 0.0
    %3087 = vmatpush1.msra.mxu0 0.0
    %3088 = vmatprep.mubr.f32.mxu0 0.0
    %3089 = vmatmul.mubr.f32.gmra.mrb[0].mxu0 %v2951
    %v3090 = vpop.f32.mrb[0].mxu0
    %v3091 = vadd.f32 0.0, %v3090
    %v3092 = vpop.f32.mrb[0].mxu0
    %v3093 = vadd.f32 0.0, %v3092
    %3094 = vdwg.mxu0
    %v3095 = vadd.f32 %v2928, %v3020
    %v3096 = vadd.f32 %v2929, %v3022
    %v3097 = vadd.f32 %v2930, %v3091
    %v3098 = vadd.f32 %v2931, %v3093
    %3099 = vrot.lane.b32.xlu0 %v1783, 111
    %v3100 = vpop.permute.xlu0 %3099
    %3101 = vrot.lane.b32.xlu0 %v1784, 111
    %v3102 = vpop.permute.xlu0 %3101
    %3103 = vrot.lane.b32.xlu0 %v1785, 111
    %v3104 = vpop.permute.xlu0 %3103
    %3105 = vrot.lane.b32.xlu0 %v1786, 111
    %v3106 = vpop.permute.xlu0 %3105
    %v3107 = vsel %vm1560, %v3104, %v3106
    %v3108 = vsel %vm1560, %v3102, %v3104
    %v3109 = vsel %vm1560, %v3100, %v3102
    %v3110 = vsel %vm1560, %v3106, %v3100
    %v3111 = vsel %vm1569, %v3109, 0.0
    %v3112 = vsel %vm1570, %v3108, 0.0
    %v3113 = vsel %vm1571, %v3107, 0.0
    %v3114 = vsel %vm1572, %v3110, 0.0
    %s3115 = scalar_lea.vmem %s4, 64
    %v3116 = vld [vmem:[%s3115] sm:$0xff]
    %v3118 = vsel %vm1822, %v3116, 0
    %3120 = vmatprep.subr.mxu0 %v3112
    %3121 = vmatpush1.msra.mxu0 %v3111
    %3122 = vmatprep.subr.mxu0 0.0
    %3123 = vmatpush1.msra.mxu0 0.0
    %3124 = vmatprep.subr.mxu0 0.0
    %3125 = vmatpush1.msra.mxu0 0.0
    %3126 = vmatprep.subr.mxu0 0.0
    %3127 = vmatpush1.msra.mxu0 0.0
    %3128 = vmatprep.subr.mxu0 0.0
    %3129 = vmatpush1.msra.mxu0 0.0
    %3130 = vmatprep.subr.mxu0 0.0
    %3131 = vmatpush1.msra.mxu0 0.0
    %3132 = vmatprep.subr.mxu0 0.0
    %3133 = vmatpush1.msra.mxu0 0.0
    %3134 = vmatprep.subr.mxu0 0.0
    %3135 = vmatpush1.msra.mxu0 0.0
    %3136 = vmatprep.subr.mxu0 0.0
    %3137 = vmatpush1.msra.mxu0 0.0
    %3138 = vmatprep.subr.mxu0 0.0
    %3139 = vmatpush1.msra.mxu0 0.0
    %3140 = vmatprep.subr.mxu0 0.0
    %3141 = vmatpush1.msra.mxu0 0.0
    %3142 = vmatprep.subr.mxu0 0.0
    %3143 = vmatpush1.msra.mxu0 0.0
    %3144 = vmatprep.subr.mxu0 0.0
    %3145 = vmatpush1.msra.mxu0 0.0
    %3146 = vmatprep.subr.mxu0 0.0
    %3147 = vmatpush1.msra.mxu0 0.0
    %3148 = vmatprep.subr.mxu0 0.0
    %3149 = vmatpush1.msra.mxu0 0.0
    %3150 = vmatprep.subr.mxu0 0.0
    %3151 = vmatpush1.msra.mxu0 0.0
    %3152 = vmatprep.subr.mxu0 0.0
    %3153 = vmatpush1.msra.mxu0 0.0
    %3154 = vmatprep.subr.mxu0 0.0
    %3155 = vmatpush1.msra.mxu0 0.0
    %3156 = vmatprep.subr.mxu0 0.0
    %3157 = vmatpush1.msra.mxu0 0.0
    %3158 = vmatprep.subr.mxu0 0.0
    %3159 = vmatpush1.msra.mxu0 0.0
    %3160 = vmatprep.subr.mxu0 0.0
    %3161 = vmatpush1.msra.mxu0 0.0
    %3162 = vmatprep.subr.mxu0 0.0
    %3163 = vmatpush1.msra.mxu0 0.0
    %3164 = vmatprep.subr.mxu0 0.0
    %3165 = vmatpush1.msra.mxu0 0.0
    %3166 = vmatprep.subr.mxu0 0.0
    %3167 = vmatpush1.msra.mxu0 0.0
    %3168 = vmatprep.subr.mxu0 0.0
    %3169 = vmatpush1.msra.mxu0 0.0
    %3170 = vmatprep.subr.mxu0 0.0
    %3171 = vmatpush1.msra.mxu0 0.0
    %3172 = vmatprep.subr.mxu0 0.0
    %3173 = vmatpush1.msra.mxu0 0.0
    %3174 = vmatprep.subr.mxu0 0.0
    %3175 = vmatpush1.msra.mxu0 0.0
    %3176 = vmatprep.subr.mxu0 0.0
    %3177 = vmatpush1.msra.mxu0 0.0
    %3178 = vmatprep.subr.mxu0 0.0
    %3179 = vmatpush1.msra.mxu0 0.0
    %3180 = vmatprep.subr.mxu0 0.0
    %3181 = vmatpush1.msra.mxu0 0.0
    %3182 = vmatprep.subr.mxu0 0.0
    %3183 = vmatpush1.msra.mxu0 0.0
    %3184 = vmatprep.mubr.f32.mxu0 0.0
    %3185 = vmatmul.mubr.f32.gmra.mrb[0].mxu0 %v3118
    %v3186 = vpop.f32.mrb[0].mxu0
    %v3187 = vadd.f32 0.0, %v3186
    %v3188 = vpop.f32.mrb[0].mxu0
    %v3189 = vadd.f32 0.0, %v3188
    %3190 = vdwg.mxu0
    %3191 = vmatprep.subr.mxu0 %v3114
    %3192 = vmatpush1.msra.mxu0 %v3113
    %3193 = vmatprep.subr.mxu0 0.0
    %3194 = vmatpush1.msra.mxu0 0.0
    %3195 = vmatprep.subr.mxu0 0.0
    %3196 = vmatpush1.msra.mxu0 0.0
    %3197 = vmatprep.subr.mxu0 0.0
    %3198 = vmatpush1.msra.mxu0 0.0
    %3199 = vmatprep.subr.mxu0 0.0
    %3200 = vmatpush1.msra.mxu0 0.0
    %3201 = vmatprep.subr.mxu0 0.0
    %3202 = vmatpush1.msra.mxu0 0.0
    %3203 = vmatprep.subr.mxu0 0.0
    %3204 = vmatpush1.msra.mxu0 0.0
    %3205 = vmatprep.subr.mxu0 0.0
    %3206 = vmatpush1.msra.mxu0 0.0
    %3207 = vmatprep.subr.mxu0 0.0
    %3208 = vmatpush1.msra.mxu0 0.0
    %3209 = vmatprep.subr.mxu0 0.0
    %3210 = vmatpush1.msra.mxu0 0.0
    %3211 = vmatprep.subr.mxu0 0.0
    %3212 = vmatpush1.msra.mxu0 0.0
    %3213 = vmatprep.subr.mxu0 0.0
    %3214 = vmatpush1.msra.mxu0 0.0
    %3215 = vmatprep.subr.mxu0 0.0
    %3216 = vmatpush1.msra.mxu0 0.0
    %3217 = vmatprep.subr.mxu0 0.0
    %3218 = vmatpush1.msra.mxu0 0.0
    %3219 = vmatprep.subr.mxu0 0.0
    %3220 = vmatpush1.msra.mxu0 0.0
    %3221 = vmatprep.subr.mxu0 0.0
    %3222 = vmatpush1.msra.mxu0 0.0
    %3223 = vmatprep.subr.mxu0 0.0
    %3224 = vmatpush1.msra.mxu0 0.0
    %3225 = vmatprep.subr.mxu0 0.0
    %3226 = vmatpush1.msra.mxu0 0.0
    %3227 = vmatprep.subr.mxu0 0.0
    %3228 = vmatpush1.msra.mxu0 0.0
    %3229 = vmatprep.subr.mxu0 0.0
    %3230 = vmatpush1.msra.mxu0 0.0
    %3231 = vmatprep.subr.mxu0 0.0
    %3232 = vmatpush1.msra.mxu0 0.0
    %3233 = vmatprep.subr.mxu0 0.0
    %3234 = vmatpush1.msra.mxu0 0.0
    %3235 = vmatprep.subr.mxu0 0.0
    %3236 = vmatpush1.msra.mxu0 0.0
    %3237 = vmatprep.subr.mxu0 0.0
    %3238 = vmatpush1.msra.mxu0 0.0
    %3239 = vmatprep.subr.mxu0 0.0
    %3240 = vmatpush1.msra.mxu0 0.0
    %3241 = vmatprep.subr.mxu0 0.0
    %3242 = vmatpush1.msra.mxu0 0.0
    %3243 = vmatprep.subr.mxu0 0.0
    %3244 = vmatpush1.msra.mxu0 0.0
    %3245 = vmatprep.subr.mxu0 0.0
    %3246 = vmatpush1.msra.mxu0 0.0
    %3247 = vmatprep.subr.mxu0 0.0
    %3248 = vmatpush1.msra.mxu0 0.0
    %3249 = vmatprep.subr.mxu0 0.0
    %3250 = vmatpush1.msra.mxu0 0.0
    %3251 = vmatprep.subr.mxu0 0.0
    %3252 = vmatpush1.msra.mxu0 0.0
    %3253 = vmatprep.subr.mxu0 0.0
    %3254 = vmatpush1.msra.mxu0 0.0
    %3255 = vmatprep.mubr.f32.mxu0 0.0
    %3256 = vmatmul.mubr.f32.gmra.mrb[0].mxu0 %v3118
    %v3257 = vpop.f32.mrb[0].mxu0
    %v3258 = vadd.f32 0.0, %v3257
    %v3259 = vpop.f32.mrb[0].mxu0
    %v3260 = vadd.f32 0.0, %v3259
    %3261 = vdwg.mxu0
    %v3262 = vadd.f32 %v3095, %v3187
    %v3263 = vadd.f32 %v3096, %v3189
    %v3264 = vadd.f32 %v3097, %v3258
    %v3265 = vadd.f32 %v3098, %v3260
    %v3266 = vadd.f32 %v3262, %v3263
    %v3267 = vadd.f32 %v3266, %v3264
    %v3268 = vadd.f32 %v3267, %v3265
    %3269 = vadd.xlane.f32.xlu0 %v3268
    %v3270 = vpop.xlane.xlu0 %3269
    %v3271 = vmul.f32 %v3262, %v3262
    %v3272 = vmul.f32 %v3263, %v3263
    %v3273 = vmul.f32 %v3264, %v3264
    %v3274 = vmul.f32 %v3265, %v3265
    %v3275 = vadd.f32 %v3271, %v3272
    %v3276 = vadd.f32 %v3275, %v3273
    %v3277 = vadd.f32 %v3276, %v3274
    %3278 = vadd.xlane.f32.xlu0 %v3277
    %v3279 = vpop.xlane.xlu0 %3278
    %v3280 = vmul.f32 %v3270, 0.001953125
    %v3281 = vmul.f32 %v3279, 0.001953125
    %v3282 = vmul.f32 %v3280, %v3280
    %v3283 = vsub.f32 %v3281, %v3282
    %v3284 = vld [vmem:[%s5] sm:$0xff]
    %v3285 = vadd.f32 %v3283, 1e-05
    %v3286 = vrsqrt.pop %v3285
    %v3287 = vmul.f32 %v3284, %v3286
    %v3288 = vld [vmem:[%s6] sm:$0xff]
    %v3289 = vmul.f32 %v3280, %v3287
    %v3290 = vsub.f32 %v3288, %v3289
    %3292 = vset.pattern.permute.xlu0 0
    %3293 = vperm.xlu0 %3292, %v3287
    %v3294 = vpop.permute.xlu0 %3293
    %v3296 = vmul.f32 %v3262, %v3294
    %v3297 = vmul.f32 %v3263, %v3294
    %v3298 = vmul.f32 %v3264, %v3294
    %v3299 = vmul.f32 %v3265, %v3294
    %3301 = vset.pattern.permute.xlu0 0
    %3302 = vperm.xlu0 %3301, %v3290
    %v3303 = vpop.permute.xlu0 %3302
    %v3305 = vadd.f32 %v3296, %v3303
    %v3306 = vadd.f32 %v3297, %v3303
    %v3307 = vadd.f32 %v3298, %v3303
    %v3308 = vadd.f32 %v3299, %v3303
    %v3309 = vmax.f32 %v3305, 0.0
    %v3310 = vmax.f32 %v3306, 0.0
    %v3311 = vmax.f32 %v3307, 0.0
    %v3312 = vmax.f32 %v3308, 0.0
    %3313 = vst [vmem:[#allocation2] sm:$0xff] %v3309
    %3314 = vst [vmem:[#allocation2 + $0x8] sm:$0xff] %v3310
    %3315 = vst [vmem:[#allocation2 + $0x10] sm:$0xff] %v3311
    %3316 = vst [vmem:[#allocation2 + $0x18] sm:$0xff] %v3312
    // Predicated region
    $region30: #{tpu_custom_call.1} parent=1 // pred_check
      _
    $region31: #{tpu_custom_call.1} parent=1 // pred_check_branch
      %3318 = sbr.rel (0) target = $region33
    $region32: #{tpu_custom_call.1} parent=1 // pred_region
      %s3320 = ssub.s32 512, 512
      %3321 = vsyncadd [#allocation3], %s3320
      %s3323 = sshll.u32 [#allocation2], 4
      %s3324 = int_to_ptr.vmem [resolvable:$true] %s3323
      %3326 = dma.vmem_to_hbm [thread:$0]  %s3324, 512, %s7, [#allocation3]
    $region33: #{tpu_custom_call.1} parent=1 // pred_fallthru
      _
    // Predicated region
    $region34: #{tpu_custom_call.1} parent=1 // pred_check
      _
    $region35: #{tpu_custom_call.1} parent=1 // pred_check_branch
      %3328 = sbr.rel (0) target = $region37
    $region36: #{tpu_custom_call.1} parent=1 // pred_region
      %3329 = dma.done [#allocation3], 512
    $region37: #{tpu_custom_call.1} parent=1 // pred_fallthru
      _
    %3330 = vsyncpa [#allocation3], 1

</llo_original>
